<compile_context>
chip_gen: v7x
topology: tpu7x:2x2x1
jax: 0.10.0
libtpu: 0.0.40
codegen_flags: <defaults>
</compile_context>

<pallas_src>
import jax
import jax.numpy as jnp
from jax import lax
from jax.experimental import pallas as pl
from jax.experimental.pallas import tpu as pltpu

# ----- small, self-consistent hyper-parameters (mirror EEGConformer.__init__) -----
B = 2                               # batch
C = 4                               # n_channels
NCLASS = 3                          # n_classes
T = 120                             # input_time_length
SFREQ = 80                          # target_sfreq
K = int(100 / 1000 * SFREQ)         # filter_time_samples = 8
PAD = K // 2                        # 4
TPAD = T + 2 * PAD                  # 128 (exactly one lane tile)
T1 = T + 2 * PAD - K + 1            # 121 (temporal conv output length)
POOL_K = int(300 / 1000 * SFREQ)    # 24
POOL_S = int(60 / 1000 * SFREQ)     # 4
P = (T1 - POOL_K) // POOL_S + 1     # 25 (tokens per batch element)
S2 = B * P                          # 50 (batch-concatenated sequence length)
FT = 16                             # n_filters_time
FS = 16                             # n_filters_spat
D = FS                              # transformer d_model (Identity projection)
HEADS = 4
HD = D // HEADS
FF = D * 2                          # dim_feedforward
DEPTH = 2                           # transformer_depth
CH = 32                             # classifier_hidden_dim
LN_EPS = 1e-5
BN_EPS = 1e-5

# ----- packed weight-slab layout: one (NW_ROWS, 128) f32 array holds every parameter ---
WCOL = 128
R_POOL = 0                          # pooling matrix           rows [0, P)      cols [0, T1)
R_VMASK = 32                        # per-head lane masks      rows [32, 36)    cols [0, D)
R_MEAN = 36                         # per-batch mean matrix    rows [36, 38)    cols [0, S2)
R_CLS_B = 38                        # classifier b1 / b2       rows 38 / 39
R_BMASK = 40                        # batch block-diag mask    rows [40, 90)    cols [0, S2)
R_CNN = 96                          # folded CNN W | bias      rows [96, 112)   cols [0, C*K+1)
R_CLS_W1 = 112                      # classifier W1            rows [112, 128)  cols [0, CH)
R_CLS_W2 = 128                      # classifier W2            rows [128, 160)  cols [0, NCLASS)
R_LAYERS = 160                      # per-encoder-layer blocks start here
ROWS_PER_LAYER = 8 + D + D + D + FF  # 8 vector rows + wqkv + wo + w1 + w2 = 88
NW_ROWS = R_LAYERS + DEPTH * ROWS_PER_LAYER            # 336

assert P <= R_VMASK
assert R_VMASK + HEADS <= R_MEAN and R_MEAN + B <= R_CLS_B and R_CLS_B + 2 <= R_BMASK
assert R_BMASK + S2 <= R_CNN and R_CNN + FS <= R_CLS_W1
assert R_CLS_W1 + D <= R_CLS_W2 and R_CLS_W2 + CH <= R_LAYERS
assert T1 <= WCOL and 3 * D <= WCOL and C * K + 1 <= WCOL and S2 <= WCOL


# ----------------------------- fused Pallas kernel --------------------------------

def _fused_forward_kernel(x_ref, w_ref, out_ref, xs_ref):
    """Whole EEGConformer forward for the full (B=2) batch in one grid step."""
    f32 = jnp.float32
    dn_tt = (((1,), (1,)), ((), ()))          # contract last dims of both operands (A @ B^T)

    # ---------------- CNN stage (folded temporal/BN/depthwise/pointwise/BN) -----------
    cnnw = w_ref[R_CNN:R_CNN + FS, 0:C * K]                # (FS, C*K) folded conv weight
    cnnb = w_ref[R_CNN:R_CNN + FS, C * K:C * K + 1]        # (FS, 1)   folded bias
    pool = w_ref[R_POOL:R_POOL + P, 0:T1]                  # (P, T1)   avg-pool matrix

    # In-kernel zero padding: each batch element's signal is written at lane offset PAD
    # of a single 128-lane tile, so every conv window below stays inside that tile.
    xs_ref[...] = jnp.zeros((B, C, TPAD), f32)
    xs_ref[:, :, PAD:PAD + T] = x_ref[...]

    seqs = []
    for b in range(B):                                     # B independent streams (ILP)
        xpad = xs_ref[b]                                   # (C, TPAD), one lane tile
        # im2col: window j lives at lanes [j, j+T1) of the same tile -> one big MXU dot.
        cols = jnp.concatenate([xpad[:, j:j + T1] for j in range(K)], axis=0)  # (C*K, T1)
        y = jnp.dot(cnnw, cols, preferred_element_type=f32) + cnnb             # (FS, T1)
        y = jnp.where(y > 0.0, y, jnp.exp(jnp.minimum(y, 0.0)) - 1.0)          # ELU
        # AvgPool folded into a matmul; emits the (P, D) token layout directly.
        seqs.append(lax.dot_general(pool, y, dn_tt, preferred_element_type=f32))
    # Batch-concatenated token matrix: rows [0,P) = batch 0, [P,2P) = batch 1.
    seq = jnp.concatenate(seqs, axis=0)                    # (S2, D)

    # ---------------- transformer encoder (pre-norm, relu FFN, dropout = identity) ----
    def layer_norm(v, w, b):
        # E[x^2] - E[x]^2 with rsqrt: the two lane-reduces are independent.
        mu = jnp.mean(v, axis=-1, keepdims=True)
        ms = jnp.mean(v * v, axis=-1, keepdims=True)
        return (v - mu) * lax.rsqrt(ms - mu * mu + LN_EPS) * w + b

    head_masks = w_ref[R_VMASK:R_VMASK + HEADS, 0:D]       # (HEADS, D) lane masks
    bmask = w_ref[R_BMASK:R_BMASK + S2, 0:S2]              # (S2, S2) block-diag batch mask

    for L in range(DEPTH):
        base = R_LAYERS + L * ROWS_PER_LAYER
        vec = w_ref[base:base + 8, :]                      # all per-layer vectors, one tile
        ln1w, ln1b = vec[0:1, 0:D], vec[1:2, 0:D]
        bqkv, bo = vec[2:3, 0:3 * D], vec[3:4, 0:D]
        ln2w, ln2b = vec[4:5, 0:D], vec[5:6, 0:D]
        b1, b2 = vec[6:7, 0:FF], vec[7:8, 0:D]
        wqkv = w_ref[base + 8:base + 24, 0:3 * D]          # (D, 3D), q part pre-scaled
        wo = w_ref[base + 24:base + 40, 0:D]               # (D, D)
        w1 = w_ref[base + 40:base + 56, 0:FF]              # (D, FF)
        w2 = w_ref[base + 56:base + 88, 0:D]               # (FF, D)

        # ---- self-attention block: seq = seq + Attn(LN1(seq)) ----
        h = layer_norm(seq, ln1w, ln1b)
        qkv = jnp.dot(h, wqkv, preferred_element_type=f32) + bqkv          # (S2, 3D)
        q = qkv[:, 0:D]
        k = qkv[:, D:2 * D]
        v = qkv[:, 2 * D:3 * D]
        attn = jnp.zeros((S2, D), f32)
        for hh in range(HEADS):
            m = head_masks[hh:hh + 1, :]                   # (1, D) lane mask for head hh
            # Masking K (not just V) is required: it zeroes cross-head score terms.
            kh = k * m
            vh = v * m
            s = lax.dot_general(q, kh, dn_tt, preferred_element_type=f32)  # (S2, S2)
            s = s - jnp.max(s, axis=-1, keepdims=True)
            e = jnp.exp(s) * bmask                         # kill cross-batch attention
            pr = e * pl.reciprocal(jnp.sum(e, axis=-1, keepdims=True), approx=True)
            attn = attn + jnp.dot(pr, vh, preferred_element_type=f32)      # head lanes only
        seq = seq + jnp.dot(attn, wo, preferred_element_type=f32) + bo

        # ---- feed-forward block: seq = seq + FFN(LN2(seq)) ----
        h2 = layer_norm(seq, ln2w, ln2b)
        f = jnp.maximum(jnp.dot(h2, w1, preferred_element_type=f32) + b1, 0.0)
        seq = seq + jnp.dot(f, w2, preferred_element_type=f32) + b2

    # ---------------- classification head (per-batch mean pool as a matmul, then MLP) --
    meanmat = w_ref[R_MEAN:R_MEAN + B, 0:S2]               # (B, S2): row b = 1/P on batch b
    feat = jnp.dot(meanmat, seq, preferred_element_type=f32)               # (B, D)
    cls_w1 = w_ref[R_CLS_W1:R_CLS_W1 + D, 0:CH]
    cls_b1 = w_ref[R_CLS_B:R_CLS_B + 1, 0:CH]
    cls_w2 = w_ref[R_CLS_W2:R_CLS_W2 + CH, 0:NCLASS]
    cls_b2 = w_ref[R_CLS_B + 1:R_CLS_B + 2, 0:NCLASS]
    hc = jnp.maximum(jnp.dot(feat, cls_w1, preferred_element_type=f32) + cls_b1, 0.0)
    out_ref[...] = jnp.dot(hc, cls_w2, preferred_element_type=f32) + cls_b2  # (B, NCLASS)


def eeg_conformer_forward(x, wslab):
    """x: (B, C, T) f32, wslab: packed (NW_ROWS, WCOL) parameter slab -> (B, NCLASS)."""
    return pl.pallas_call(
        _fused_forward_kernel,
        out_shape=jax.ShapeDtypeStruct((B, NCLASS), jnp.float32),
        grid=(1,),
        in_specs=[
            pl.BlockSpec((B, C, T), lambda i: (0, 0, 0)),          # whole EEG batch
            pl.BlockSpec((NW_ROWS, WCOL), lambda i: (0, 0)),       # whole-model weight slab
        ],
        out_specs=pl.BlockSpec((B, NCLASS), lambda i: (0, 0)),
        scratch_shapes=[pltpu.VMEM((B, C, TPAD), jnp.float32)],    # zero-padding scratch
        compiler_params=pltpu.CompilerParams(dimension_semantics=("arbitrary",)),
    )(x, wslab)


# ----------------------------- params / packing ------------------------------------

def make_pool_matrix():
    """(P, T1) matrix implementing AvgPool1d(kernel=POOL_K, stride=POOL_S)."""
    t_idx = jnp.arange(T1)[None, :]
    start = jnp.arange(P)[:, None] * POOL_S
    m = ((t_idx >= start) & (t_idx < start + POOL_K)).astype(jnp.float32)
    return m / float(POOL_K)


def init_params(key):
    kit = iter(jax.random.split(key, 64))

    def nrm(shape, scale=0.2):
        return scale * jax.random.normal(next(kit), shape, dtype=jnp.float32)

    def bn_fold(n):
        gamma = 1.0 + nrm((n,), 0.1)
        beta = nrm((n,), 0.1)
        mean = nrm((n,), 0.1)
        var = 1.0 + jnp.abs(nrm((n,), 0.1))
        s = gamma / jnp.sqrt(var + BN_EPS)
        return s, beta - mean * s

    bnt_s, bnt_b = bn_fold(FT)
    bns_s, bns_b = bn_fold(FS)
    layers = []
    for _ in range(DEPTH):
        layers.append(dict(
            ln1w=1.0 + nrm((D,), 0.1), ln1b=nrm((D,), 0.1),
            wq=nrm((D, D)), wk=nrm((D, D)), wv=nrm((D, D)),
            bq=nrm((D,), 0.05), bk=nrm((D,), 0.05), bv=nrm((D,), 0.05),
            wo=nrm((D, D)), bo=nrm((D,), 0.05),
            ln2w=1.0 + nrm((D,), 0.1), ln2b=nrm((D,), 0.1),
            w1=nrm((D, FF)), b1=nrm((FF,), 0.05),
            w2=nrm((FF, D)), b2=nrm((D,), 0.05),
        ))
    return dict(
        wt=nrm((FT, K)), bnt_s=bnt_s, bnt_b=bnt_b,
        wd=nrm((FT, C)), wp=nrm((FS, FT)), bns_s=bns_s, bns_b=bns_b,
        layers=layers,
        cls_w1=nrm((D, CH)), cls_b1=nrm((CH,), 0.05),
        cls_w2=nrm((CH, NCLASS)), cls_b2=nrm((NCLASS,), 0.05),
    )


def pack_weights(prm, pool_mat):
    """Fold the linear CNN prefix and pack every parameter / mask into one slab."""
    slab = jnp.zeros((NW_ROWS, WCOL), jnp.float32)

    def put(s, row, a):
        a = jnp.asarray(a, jnp.float32)
        if a.ndim == 1:
            a = a[None, :]
        return lax.dynamic_update_slice(s, a, (row, 0))

    slab = put(slab, R_POOL, pool_mat)

    # per-head lane masks (HEADS, D)
    lane = jnp.arange(D)[None, :]
    head = jnp.arange(HEADS)[:, None]
    hm = ((lane >= head * HD) & (lane < (head + 1) * HD)).astype(jnp.float32)
    slab = put(slab, R_VMASK, hm)

    # per-batch mean-pooling matrix (B, S2)
    col = jnp.arange(S2)[None, :]
    bidx = jnp.arange(B)[:, None]
    mm = ((col >= bidx * P) & (col < (bidx + 1) * P)).astype(jnp.float32) / float(P)
    slab = put(slab, R_MEAN, mm)

    # block-diagonal batch mask for attention (S2, S2)
    rb = jnp.arange(S2)[:, None] // P
    cb = jnp.arange(S2)[None, :] // P
    slab = put(slab, R_BMASK, (rb == cb).astype(jnp.float32))

    # Fold temporal conv * BN_temporal * depthwise * pointwise * BN_spatial (all linear).
    wp_s = prm['wp'] * prm['bnt_s'][None, :]                                  # (FS, FT)
    wfold = jnp.einsum('gf,fj,fc->gjc', wp_s, prm['wt'], prm['wd'])           # (FS, K, C)
    wfold = (prm['bns_s'][:, None, None] * wfold).reshape(FS, K * C)
    bfold = prm['bns_s'] * (prm['wp'] @ (prm['bnt_b'] * prm['wd'].sum(axis=1))) + prm['bns_b']
    slab = put(slab, R_CNN, jnp.concatenate([wfold, bfold[:, None]], axis=1))  # (FS, C*K+1)

    slab = put(slab, R_CLS_W1, prm['cls_w1'])
    slab = put(slab, R_CLS_W2, prm['cls_w2'])
    slab = put(slab, R_CLS_B, prm['cls_b1'])
    slab = put(slab, R_CLS_B + 1, prm['cls_b2'])

    scale = 1.0 / (HD ** 0.5)
    for L, lp in enumerate(prm['layers']):
        base = R_LAYERS + L * ROWS_PER_LAYER
        wqkv = jnp.concatenate([lp['wq'] * scale, lp['wk'], lp['wv']], axis=1)  # (D, 3D)
        bqkv = jnp.concatenate([lp['bq'] * scale, lp['bk'], lp['bv']], axis=0)  # (3D,)
        slab = put(slab, base + 0, lp['ln1w'])
        slab = put(slab, base + 1, lp['ln1b'])
        slab = put(slab, base + 2, bqkv)
        slab = put(slab, base + 3, lp['bo'])
        slab = put(slab, base + 4, lp['ln2w'])
        slab = put(slab, base + 5, lp['ln2b'])
        slab = put(slab, base + 6, lp['b1'])
        slab = put(slab, base + 7, lp['b2'])
        slab = put(slab, base + 8, wqkv)
        slab = put(slab, base + 24, lp['wo'])
        slab = put(slab, base + 40, lp['w1'])
        slab = put(slab, base + 56, lp['w2'])
    return slab


# ----------------------------- plain-JAX reference (sanity check) -------------------

def reference_forward(x, prm, pool_mat):
    xpad = jnp.pad(x, ((0, 0), (0, 0), (PAD, PAD)))
    patches = jnp.stack([xpad[:, :, j:j + T1] for j in range(K)], axis=-1)     # (B,C,T1,K)
    tmp = jnp.einsum('bctk,fk->bfct', patches, prm['wt'])
    tmp = tmp * prm['bnt_s'][None, :, None, None] + prm['bnt_b'][None, :, None, None]
    dw = jnp.einsum('bfct,fc->bft', tmp, prm['wd'])
    pw = jnp.einsum('bft,gf->bgt', dw, prm['wp'])
    y = pw * prm['bns_s'][None, :, None] + prm['bns_b'][None, :, None]
    y = jnp.where(y > 0, y, jnp.expm1(jnp.minimum(y, 0.0)))
    seq = jnp.einsum('bgt,pt->bpg', y, pool_mat)                               # (B, P, D)

    def ln(v, w, b):
        mu = v.mean(-1, keepdims=True)
        var = ((v - mu) ** 2).mean(-1, keepdims=True)
        return (v - mu) / jnp.sqrt(var + LN_EPS) * w + b

    for lp in prm['layers']:
        h = ln(seq, lp['ln1w'], lp['ln1b'])
        q = h @ lp['wq'] + lp['bq']
        k = h @ lp['wk'] + lp['bk']
        v = h @ lp['wv'] + lp['bv']
        qh = q.reshape(B, P, HEADS, HD).transpose(0, 2, 1, 3)
        kh = k.reshape(B, P, HEADS, HD).transpose(0, 2, 1, 3)
        vh = v.reshape(B, P, HEADS, HD).transpose(0, 2, 1, 3)
        s = jnp.einsum('bhqd,bhkd->bhqk', qh, kh) / (HD ** 0.5)
        pa = jax.nn.softmax(s, axis=-1)
        o = jnp.einsum('bhqk,bhkd->bhqd', pa, vh).transpose(0, 2, 1, 3).reshape(B, P, D)
        seq = seq + o @ lp['wo'] + lp['bo']
        h2 = ln(seq, lp['ln2w'], lp['ln2b'])
        f = jnp.maximum(h2 @ lp['w1'] + lp['b1'], 0.0)
        seq = seq + f @ lp['w2'] + lp['b2']

    feat = seq.mean(axis=1)
    h = jnp.maximum(feat @ prm['cls_w1'] + prm['cls_b1'], 0.0)
    return h @ prm['cls_w2'] + prm['cls_b2']


# ----------------------------- main -------------------------------------------------

if __name__ == "__main__":
    key = jax.random.PRNGKey(0)
    kx, kp = jax.random.split(key)
    x = jax.random.normal(kx, (B, C, T), dtype=jnp.float32)
    params = init_params(kp)
    pool_mat = make_pool_matrix()
    wslab = pack_weights(params, pool_mat)

    fwd = jax.jit(eeg_conformer_forward)
    logits = jax.block_until_ready(fwd(x, wslab))

    ref = jax.block_until_ready(reference_forward(x, params, pool_mat))
    assert logits.shape == (B, NCLASS)
    assert bool(jnp.all(jnp.isfinite(logits)))
    # Accuracy is bounded by default (non-"highest") MXU matmul precision and the
    # approximate EUP reciprocal in the softmax normalization, so the check uses a
    # scaled tolerance rather than near-exact agreement.
    max_err = float(jnp.max(jnp.abs(logits - ref)))
    tol = 2e-2 * (1.0 + float(jnp.max(jnp.abs(ref))))
    assert max_err <= tol, f"max abs err {max_err} vs tol {tol}"

    print("KERNEL_OK")
</pallas_src>

<mosaic_0001>
module attributes {stable_mosaic.version = 11 : i64} {
  func.func @_fused_forward_kernel(%arg0: i32, %arg1: memref<2x4x120xf32, #tpu.memory_space<vmem>>, %arg2: memref<336x128xf32, #tpu.memory_space<vmem>>, %arg3: memref<2x3xf32, #tpu.memory_space<vmem>>, %arg4: memref<2x4x128xf32, #tpu.memory_space<vmem>>) attributes {dimension_semantics = [#tpu.dimension_semantics<arbitrary>], iteration_bounds = array<i64: 1>, scalar_prefetch = 0 : i64, scratch_operands = 1 : i64, tpu.core_type = #tpu.core_type<tc>, window_params = [{pipeline_mode = #tpu.pipeline_mode<synchronous>, transform_indices = @transform_0, window_bounds = array<i64: 2, 4, 120>}, {pipeline_mode = #tpu.pipeline_mode<synchronous>, transform_indices = @transform_1, window_bounds = array<i64: 336, 128>}, {pipeline_mode = #tpu.pipeline_mode<synchronous>, transform_indices = @transform_2, window_bounds = array<i64: 2, 3>}]} {
    %c96 = arith.constant 96 : index
    %c0 = arith.constant 0 : index
    %0 = vector.load %arg2[%c96, %c0] : memref<336x128xf32, #tpu.memory_space<vmem>>, vector<16x32xf32>
    %c96_0 = arith.constant 96 : index
    %c32 = arith.constant 32 : index
    %1 = vector.load %arg2[%c96_0, %c32] : memref<336x128xf32, #tpu.memory_space<vmem>>, vector<16x1xf32>
    %c0_1 = arith.constant 0 : index
    %c0_2 = arith.constant 0 : index
    %2 = vector.load %arg2[%c0_1, %c0_2] : memref<336x128xf32, #tpu.memory_space<vmem>>, vector<25x121xf32>
    %cst = arith.constant 0.000000e+00 : f32
    %3 = vector.broadcast %cst : f32 to vector<2x4x128xf32>
    %c0_3 = arith.constant 0 : index
    %c0_4 = arith.constant 0 : index
    %c0_5 = arith.constant 0 : index
    %4 = vector.load %arg4[%c0_3, %c0_4, %c0_5] : memref<2x4x128xf32, #tpu.memory_space<vmem>>, vector<2x4x128xf32>
    tpu.vector_store %arg4[%c0_3, %c0_4, %c0_5], %3 {strides = array<i32>} : memref<2x4x128xf32, #tpu.memory_space<vmem>>, vector<2x4x128xf32>,
    %c0_6 = arith.constant 0 : index
    %c0_7 = arith.constant 0 : index
    %c0_8 = arith.constant 0 : index
    %5 = vector.load %arg1[%c0_6, %c0_7, %c0_8] : memref<2x4x120xf32, #tpu.memory_space<vmem>>, vector<2x4x120xf32>
    %c0_9 = arith.constant 0 : index
    %c0_10 = arith.constant 0 : index
    %c4 = arith.constant 4 : index
    %6 = vector.load %arg4[%c0_9, %c0_10, %c4] : memref<2x4x128xf32, #tpu.memory_space<vmem>>, vector<2x4x120xf32>
    tpu.vector_store %arg4[%c0_9, %c0_10, %c4], %5 {strides = array<i32>} : memref<2x4x128xf32, #tpu.memory_space<vmem>>, vector<2x4x120xf32>,
    %c0_11 = arith.constant 0 : index
    %c0_12 = arith.constant 0 : index
    %c0_13 = arith.constant 0 : index
    %7 = vector.load %arg4[%c0_11, %c0_12, %c0_13] : memref<2x4x128xf32, #tpu.memory_space<vmem>>, vector<1x4x128xf32>
    %8 = vector.shape_cast %7 : vector<1x4x128xf32> to vector<4x128xf32>
    %9 = vector.extract_strided_slice %8 {offsets = [0, 0], sizes = [4, 121], strides = [1, 1]} : vector<4x128xf32> to vector<4x121xf32>
    %10 = vector.extract_strided_slice %8 {offsets = [0, 1], sizes = [4, 121], strides = [1, 1]} : vector<4x128xf32> to vector<4x121xf32>
    %11 = vector.extract_strided_slice %8 {offsets = [0, 2], sizes = [4, 121], strides = [1, 1]} : vector<4x128xf32> to vector<4x121xf32>
    %12 = vector.extract_strided_slice %8 {offsets = [0, 3], sizes = [4, 121], strides = [1, 1]} : vector<4x128xf32> to vector<4x121xf32>
    %13 = vector.extract_strided_slice %8 {offsets = [0, 4], sizes = [4, 121], strides = [1, 1]} : vector<4x128xf32> to vector<4x121xf32>
    %14 = vector.extract_strided_slice %8 {offsets = [0, 5], sizes = [4, 121], strides = [1, 1]} : vector<4x128xf32> to vector<4x121xf32>
    %15 = vector.extract_strided_slice %8 {offsets = [0, 6], sizes = [4, 121], strides = [1, 1]} : vector<4x128xf32> to vector<4x121xf32>
    %16 = vector.extract_strided_slice %8 {offsets = [0, 7], sizes = [4, 121], strides = [1, 1]} : vector<4x128xf32> to vector<4x121xf32>
    %17 = tpu.concatenate %9, %10, %11, %12, %13, %14, %15, %16 in 0 : vector<4x121xf32>, vector<4x121xf32>, vector<4x121xf32>, vector<4x121xf32>, vector<4x121xf32>, vector<4x121xf32>, vector<4x121xf32>, vector<4x121xf32> -> vector<32x121xf32>
    %cst_14 = arith.constant dense<0.000000e+00> : vector<16x121xf32>
    %18 = tpu.matmul %0, %17, %cst_14 {dimension_numbers = #tpu.dot_dimension_numbers<[1], [0], [0], [1], [0, 0, 1, 1], [], []>} : vector<16x32xf32>, vector<32x121xf32>, vector<16x121xf32> -> vector<16x121xf32>
    %19 = vector.broadcast %1 : vector<16x1xf32> to vector<16x121xf32>
    %20 = arith.addf %18, %19 : vector<16x121xf32>
    %cst_15 = arith.constant 0.000000e+00 : f32
    %21 = vector.broadcast %cst_15 : f32 to vector<16x121xf32>
    %22 = arith.cmpf ogt, %20, %21 : vector<16x121xf32>
    %cst_16 = arith.constant 0.000000e+00 : f32
    %23 = vector.broadcast %cst_16 : f32 to vector<16x121xf32>
    %24 = arith.minimumf %20, %23 : vector<16x121xf32>
    %25 = math.exp %24 : vector<16x121xf32>
    %cst_17 = arith.constant 1.000000e+00 : f32
    %26 = vector.broadcast %cst_17 : f32 to vector<16x121xf32>
    %27 = arith.subf %25, %26 : vector<16x121xf32>
    %28 = arith.select %22, %20, %27 : vector<16x121xi1>, vector<16x121xf32>
    %cst_18 = arith.constant dense<0.000000e+00> : vector<25x16xf32>
    %29 = tpu.matmul %2, %28, %cst_18 {dimension_numbers = #tpu.dot_dimension_numbers<[1], [1], [0], [0], [0, 0, 1, 0], [], []>} : vector<25x121xf32>, vector<16x121xf32>, vector<25x16xf32> -> vector<25x16xf32>
    %c1 = arith.constant 1 : index
    %c0_19 = arith.constant 0 : index
    %c0_20 = arith.constant 0 : index
    %30 = vector.load %arg4[%c1, %c0_19, %c0_20] : memref<2x4x128xf32, #tpu.memory_space<vmem>>, vector<1x4x128xf32>
    %31 = vector.shape_cast %30 : vector<1x4x128xf32> to vector<4x128xf32>
    %32 = vector.extract_strided_slice %31 {offsets = [0, 0], sizes = [4, 121], strides = [1, 1]} : vector<4x128xf32> to vector<4x121xf32>
    %33 = vector.extract_strided_slice %31 {offsets = [0, 1], sizes = [4, 121], strides = [1, 1]} : vector<4x128xf32> to vector<4x121xf32>
    %34 = vector.extract_strided_slice %31 {offsets = [0, 2], sizes = [4, 121], strides = [1, 1]} : vector<4x128xf32> to vector<4x121xf32>
    %35 = vector.extract_strided_slice %31 {offsets = [0, 3], sizes = [4, 121], strides = [1, 1]} : vector<4x128xf32> to vector<4x121xf32>
    %36 = vector.extract_strided_slice %31 {offsets = [0, 4], sizes = [4, 121], strides = [1, 1]} : vector<4x128xf32> to vector<4x121xf32>
    %37 = vector.extract_strided_slice %31 {offsets = [0, 5], sizes = [4, 121], strides = [1, 1]} : vector<4x128xf32> to vector<4x121xf32>
    %38 = vector.extract_strided_slice %31 {offsets = [0, 6], sizes = [4, 121], strides = [1, 1]} : vector<4x128xf32> to vector<4x121xf32>
    %39 = vector.extract_strided_slice %31 {offsets = [0, 7], sizes = [4, 121], strides = [1, 1]} : vector<4x128xf32> to vector<4x121xf32>
    %40 = tpu.concatenate %32, %33, %34, %35, %36, %37, %38, %39 in 0 : vector<4x121xf32>, vector<4x121xf32>, vector<4x121xf32>, vector<4x121xf32>, vector<4x121xf32>, vector<4x121xf32>, vector<4x121xf32>, vector<4x121xf32> -> vector<32x121xf32>
    %cst_21 = arith.constant dense<0.000000e+00> : vector<16x121xf32>
    %41 = tpu.matmul %0, %40, %cst_21 {dimension_numbers = #tpu.dot_dimension_numbers<[1], [0], [0], [1], [0, 0, 1, 1], [], []>} : vector<16x32xf32>, vector<32x121xf32>, vector<16x121xf32> -> vector<16x121xf32>
    %42 = vector.broadcast %1 : vector<16x1xf32> to vector<16x121xf32>
    %43 = arith.addf %41, %42 : vector<16x121xf32>
    %cst_22 = arith.constant 0.000000e+00 : f32
    %44 = vector.broadcast %cst_22 : f32 to vector<16x121xf32>
    %45 = arith.cmpf ogt, %43, %44 : vector<16x121xf32>
    %cst_23 = arith.constant 0.000000e+00 : f32
    %46 = vector.broadcast %cst_23 : f32 to vector<16x121xf32>
    %47 = arith.minimumf %43, %46 : vector<16x121xf32>
    %48 = math.exp %47 : vector<16x121xf32>
    %cst_24 = arith.constant 1.000000e+00 : f32
    %49 = vector.broadcast %cst_24 : f32 to vector<16x121xf32>
    %50 = arith.subf %48, %49 : vector<16x121xf32>
    %51 = arith.select %45, %43, %50 : vector<16x121xi1>, vector<16x121xf32>
    %cst_25 = arith.constant dense<0.000000e+00> : vector<25x16xf32>
    %52 = tpu.matmul %2, %51, %cst_25 {dimension_numbers = #tpu.dot_dimension_numbers<[1], [1], [0], [0], [0, 0, 1, 0], [], []>} : vector<25x121xf32>, vector<16x121xf32>, vector<25x16xf32> -> vector<25x16xf32>
    %53 = tpu.concatenate %29, %52 in 0 : vector<25x16xf32>, vector<25x16xf32> -> vector<50x16xf32>
    %c32_26 = arith.constant 32 : index
    %c0_27 = arith.constant 0 : index
    %54 = vector.load %arg2[%c32_26, %c0_27] : memref<336x128xf32, #tpu.memory_space<vmem>>, vector<4x16xf32>
    %c40 = arith.constant 40 : index
    %c0_28 = arith.constant 0 : index
    %55 = vector.load %arg2[%c40, %c0_28] : memref<336x128xf32, #tpu.memory_space<vmem>>, vector<50x50xf32>
    %c160 = arith.constant 160 : index
    %c0_29 = arith.constant 0 : index
    %56 = vector.load %arg2[%c160, %c0_29] : memref<336x128xf32, #tpu.memory_space<vmem>>, vector<8x128xf32>
    %57 = vector.extract_strided_slice %56 {offsets = [0, 0], sizes = [1, 16], strides = [1, 1]} : vector<8x128xf32> to vector<1x16xf32>
    %58 = vector.extract_strided_slice %56 {offsets = [1, 0], sizes = [1, 16], strides = [1, 1]} : vector<8x128xf32> to vector<1x16xf32>
    %59 = vector.extract_strided_slice %56 {offsets = [2, 0], sizes = [1, 48], strides = [1, 1]} : vector<8x128xf32> to vector<1x48xf32>
    %60 = vector.extract_strided_slice %56 {offsets = [3, 0], sizes = [1, 16], strides = [1, 1]} : vector<8x128xf32> to vector<1x16xf32>
    %61 = vector.extract_strided_slice %56 {offsets = [4, 0], sizes = [1, 16], strides = [1, 1]} : vector<8x128xf32> to vector<1x16xf32>
    %62 = vector.extract_strided_slice %56 {offsets = [5, 0], sizes = [1, 16], strides = [1, 1]} : vector<8x128xf32> to vector<1x16xf32>
    %63 = vector.extract_strided_slice %56 {offsets = [6, 0], sizes = [1, 32], strides = [1, 1]} : vector<8x128xf32> to vector<1x32xf32>
    %64 = vector.extract_strided_slice %56 {offsets = [7, 0], sizes = [1, 16], strides = [1, 1]} : vector<8x128xf32> to vector<1x16xf32>
    %c168 = arith.constant 168 : index
    %c0_30 = arith.constant 0 : index
    %65 = vector.load %arg2[%c168, %c0_30] : memref<336x128xf32, #tpu.memory_space<vmem>>, vector<16x48xf32>
    %c184 = arith.constant 184 : index
    %c0_31 = arith.constant 0 : index
    %66 = vector.load %arg2[%c184, %c0_31] : memref<336x128xf32, #tpu.memory_space<vmem>>, vector<16x16xf32>
    %c200 = arith.constant 200 : index
    %c0_32 = arith.constant 0 : index
    %67 = vector.load %arg2[%c200, %c0_32] : memref<336x128xf32, #tpu.memory_space<vmem>>, vector<16x32xf32>
    %c216 = arith.constant 216 : index
    %c0_33 = arith.constant 0 : index
    %68 = vector.load %arg2[%c216, %c0_33] : memref<336x128xf32, #tpu.memory_space<vmem>>, vector<32x16xf32>
    %cst_34 = arith.constant dense<0.000000e+00> : vector<50xf32>
    %69 = vector.multi_reduction <add>, %53, %cst_34 [1] : vector<50x16xf32> to vector<50xf32>
    %70 = vector.shape_cast %69 : vector<50xf32> to vector<50x1xf32>
    %cst_35 = arith.constant 1.600000e+01 : f32
    %71 = vector.broadcast %cst_35 : f32 to vector<50x1xf32>
    %72 = arith.divf %70, %71 : vector<50x1xf32>
    %73 = arith.mulf %53, %53 : vector<50x16xf32>
    %cst_36 = arith.constant dense<0.000000e+00> : vector<50xf32>
    %74 = vector.multi_reduction <add>, %73, %cst_36 [1] : vector<50x16xf32> to vector<50xf32>
    %75 = vector.shape_cast %74 : vector<50xf32> to vector<50x1xf32>
    %cst_37 = arith.constant 1.600000e+01 : f32
    %76 = vector.broadcast %cst_37 : f32 to vector<50x1xf32>
    %77 = arith.divf %75, %76 : vector<50x1xf32>
    %78 = vector.broadcast %72 : vector<50x1xf32> to vector<50x16xf32>
    %79 = arith.subf %53, %78 : vector<50x16xf32>
    %80 = arith.mulf %72, %72 : vector<50x1xf32>
    %81 = arith.subf %77, %80 : vector<50x1xf32>
    %cst_38 = arith.constant 9.99999974E-6 : f32
    %82 = vector.broadcast %cst_38 : f32 to vector<50x1xf32>
    %83 = arith.addf %81, %82 : vector<50x1xf32>
    %84 = math.rsqrt %83 : vector<50x1xf32>
    %85 = vector.broadcast %84 : vector<50x1xf32> to vector<50x16xf32>
    %86 = arith.mulf %79, %85 : vector<50x16xf32>
    %87 = vector.broadcast %57 : vector<1x16xf32> to vector<50x16xf32>
    %88 = arith.mulf %86, %87 : vector<50x16xf32>
    %89 = vector.broadcast %58 : vector<1x16xf32> to vector<50x16xf32>
    %90 = arith.addf %88, %89 : vector<50x16xf32>
    %cst_39 = arith.constant dense<0.000000e+00> : vector<50x48xf32>
    %91 = tpu.matmul %90, %65, %cst_39 {dimension_numbers = #tpu.dot_dimension_numbers<[1], [0], [0], [1], [0, 0, 1, 1], [], []>} : vector<50x16xf32>, vector<16x48xf32>, vector<50x48xf32> -> vector<50x48xf32>
    %92 = vector.broadcast %59 : vector<1x48xf32> to vector<50x48xf32>
    %93 = arith.addf %91, %92 : vector<50x48xf32>
    %94 = vector.extract_strided_slice %93 {offsets = [0, 0], sizes = [50, 16], strides = [1, 1]} : vector<50x48xf32> to vector<50x16xf32>
    %95 = vector.extract_strided_slice %93 {offsets = [0, 16], sizes = [50, 16], strides = [1, 1]} : vector<50x48xf32> to vector<50x16xf32>
    %96 = vector.extract_strided_slice %93 {offsets = [0, 32], sizes = [50, 16], strides = [1, 1]} : vector<50x48xf32> to vector<50x16xf32>
    %cst_40 = arith.constant 0.000000e+00 : f32
    %97 = vector.broadcast %cst_40 : f32 to vector<50x16xf32>
    %98 = vector.extract_strided_slice %54 {offsets = [0, 0], sizes = [1, 16], strides = [1, 1]} : vector<4x16xf32> to vector<1x16xf32>
    %99 = vector.broadcast %98 : vector<1x16xf32> to vector<50x16xf32>
    %100 = arith.mulf %95, %99 : vector<50x16xf32>
    %101 = vector.broadcast %98 : vector<1x16xf32> to vector<50x16xf32>
    %102 = arith.mulf %96, %101 : vector<50x16xf32>
    %cst_41 = arith.constant dense<0.000000e+00> : vector<50x50xf32>
    %103 = tpu.matmul %94, %100, %cst_41 {dimension_numbers = #tpu.dot_dimension_numbers<[1], [1], [0], [0], [0, 0, 1, 0], [], []>} : vector<50x16xf32>, vector<50x16xf32>, vector<50x50xf32> -> vector<50x50xf32>
    %cst_42 = arith.constant dense<0xFF800000> : vector<50xf32>
    %104 = vector.multi_reduction <maximumf>, %103, %cst_42 [1] : vector<50x50xf32> to vector<50xf32>
    %105 = vector.shape_cast %104 : vector<50xf32> to vector<50x1xf32>
    %106 = vector.broadcast %105 : vector<50x1xf32> to vector<50x50xf32>
    %107 = arith.subf %103, %106 : vector<50x50xf32>
    %108 = math.exp %107 : vector<50x50xf32>
    %109 = arith.mulf %108, %55 : vector<50x50xf32>
    %cst_43 = arith.constant dense<0.000000e+00> : vector<50xf32>
    %110 = vector.multi_reduction <add>, %109, %cst_43 [1] : vector<50x50xf32> to vector<50xf32>
    %111 = vector.shape_cast %110 : vector<50xf32> to vector<50x1xf32>
    %112 = tpu.reciprocal %111 {approx = true} : vector<50x1xf32> -> vector<50x1xf32>
    %113 = vector.broadcast %112 : vector<50x1xf32> to vector<50x50xf32>
    %114 = arith.mulf %109, %113 : vector<50x50xf32>
    %cst_44 = arith.constant dense<0.000000e+00> : vector<50x16xf32>
    %115 = tpu.matmul %114, %102, %cst_44 {dimension_numbers = #tpu.dot_dimension_numbers<[1], [0], [0], [1], [0, 0, 1, 1], [], []>} : vector<50x50xf32>, vector<50x16xf32>, vector<50x16xf32> -> vector<50x16xf32>
    %116 = arith.addf %97, %115 : vector<50x16xf32>
    %117 = vector.extract_strided_slice %54 {offsets = [1, 0], sizes = [1, 16], strides = [1, 1]} : vector<4x16xf32> to vector<1x16xf32>
    %118 = vector.broadcast %117 : vector<1x16xf32> to vector<50x16xf32>
    %119 = arith.mulf %95, %118 : vector<50x16xf32>
    %120 = vector.broadcast %117 : vector<1x16xf32> to vector<50x16xf32>
    %121 = arith.mulf %96, %120 : vector<50x16xf32>
    %cst_45 = arith.constant dense<0.000000e+00> : vector<50x50xf32>
    %122 = tpu.matmul %94, %119, %cst_45 {dimension_numbers = #tpu.dot_dimension_numbers<[1], [1], [0], [0], [0, 0, 1, 0], [], []>} : vector<50x16xf32>, vector<50x16xf32>, vector<50x50xf32> -> vector<50x50xf32>
    %cst_46 = arith.constant dense<0xFF800000> : vector<50xf32>
    %123 = vector.multi_reduction <maximumf>, %122, %cst_46 [1] : vector<50x50xf32> to vector<50xf32>
    %124 = vector.shape_cast %123 : vector<50xf32> to vector<50x1xf32>
    %125 = vector.broadcast %124 : vector<50x1xf32> to vector<50x50xf32>
    %126 = arith.subf %122, %125 : vector<50x50xf32>
    %127 = math.exp %126 : vector<50x50xf32>
    %128 = arith.mulf %127, %55 : vector<50x50xf32>
    %cst_47 = arith.constant dense<0.000000e+00> : vector<50xf32>
    %129 = vector.multi_reduction <add>, %128, %cst_47 [1] : vector<50x50xf32> to vector<50xf32>
    %130 = vector.shape_cast %129 : vector<50xf32> to vector<50x1xf32>
    %131 = tpu.reciprocal %130 {approx = true} : vector<50x1xf32> -> vector<50x1xf32>
    %132 = vector.broadcast %131 : vector<50x1xf32> to vector<50x50xf32>
    %133 = arith.mulf %128, %132 : vector<50x50xf32>
    %cst_48 = arith.constant dense<0.000000e+00> : vector<50x16xf32>
    %134 = tpu.matmul %133, %121, %cst_48 {dimension_numbers = #tpu.dot_dimension_numbers<[1], [0], [0], [1], [0, 0, 1, 1], [], []>} : vector<50x50xf32>, vector<50x16xf32>, vector<50x16xf32> -> vector<50x16xf32>
    %135 = arith.addf %116, %134 : vector<50x16xf32>
    %136 = vector.extract_strided_slice %54 {offsets = [2, 0], sizes = [1, 16], strides = [1, 1]} : vector<4x16xf32> to vector<1x16xf32>
    %137 = vector.broadcast %136 : vector<1x16xf32> to vector<50x16xf32>
    %138 = arith.mulf %95, %137 : vector<50x16xf32>
    %139 = vector.broadcast %136 : vector<1x16xf32> to vector<50x16xf32>
    %140 = arith.mulf %96, %139 : vector<50x16xf32>
    %cst_49 = arith.constant dense<0.000000e+00> : vector<50x50xf32>
    %141 = tpu.matmul %94, %138, %cst_49 {dimension_numbers = #tpu.dot_dimension_numbers<[1], [1], [0], [0], [0, 0, 1, 0], [], []>} : vector<50x16xf32>, vector<50x16xf32>, vector<50x50xf32> -> vector<50x50xf32>
    %cst_50 = arith.constant dense<0xFF800000> : vector<50xf32>
    %142 = vector.multi_reduction <maximumf>, %141, %cst_50 [1] : vector<50x50xf32> to vector<50xf32>
    %143 = vector.shape_cast %142 : vector<50xf32> to vector<50x1xf32>
    %144 = vector.broadcast %143 : vector<50x1xf32> to vector<50x50xf32>
    %145 = arith.subf %141, %144 : vector<50x50xf32>
    %146 = math.exp %145 : vector<50x50xf32>
    %147 = arith.mulf %146, %55 : vector<50x50xf32>
    %cst_51 = arith.constant dense<0.000000e+00> : vector<50xf32>
    %148 = vector.multi_reduction <add>, %147, %cst_51 [1] : vector<50x50xf32> to vector<50xf32>
    %149 = vector.shape_cast %148 : vector<50xf32> to vector<50x1xf32>
    %150 = tpu.reciprocal %149 {approx = true} : vector<50x1xf32> -> vector<50x1xf32>
    %151 = vector.broadcast %150 : vector<50x1xf32> to vector<50x50xf32>
    %152 = arith.mulf %147, %151 : vector<50x50xf32>
    %cst_52 = arith.constant dense<0.000000e+00> : vector<50x16xf32>
    %153 = tpu.matmul %152, %140, %cst_52 {dimension_numbers = #tpu.dot_dimension_numbers<[1], [0], [0], [1], [0, 0, 1, 1], [], []>} : vector<50x50xf32>, vector<50x16xf32>, vector<50x16xf32> -> vector<50x16xf32>
    %154 = arith.addf %135, %153 : vector<50x16xf32>
    %155 = vector.extract_strided_slice %54 {offsets = [3, 0], sizes = [1, 16], strides = [1, 1]} : vector<4x16xf32> to vector<1x16xf32>
    %156 = vector.broadcast %155 : vector<1x16xf32> to vector<50x16xf32>
    %157 = arith.mulf %95, %156 : vector<50x16xf32>
    %158 = vector.broadcast %155 : vector<1x16xf32> to vector<50x16xf32>
    %159 = arith.mulf %96, %158 : vector<50x16xf32>
    %cst_53 = arith.constant dense<0.000000e+00> : vector<50x50xf32>
    %160 = tpu.matmul %94, %157, %cst_53 {dimension_numbers = #tpu.dot_dimension_numbers<[1], [1], [0], [0], [0, 0, 1, 0], [], []>} : vector<50x16xf32>, vector<50x16xf32>, vector<50x50xf32> -> vector<50x50xf32>
    %cst_54 = arith.constant dense<0xFF800000> : vector<50xf32>
    %161 = vector.multi_reduction <maximumf>, %160, %cst_54 [1] : vector<50x50xf32> to vector<50xf32>
    %162 = vector.shape_cast %161 : vector<50xf32> to vector<50x1xf32>
    %163 = vector.broadcast %162 : vector<50x1xf32> to vector<50x50xf32>
    %164 = arith.subf %160, %163 : vector<50x50xf32>
    %165 = math.exp %164 : vector<50x50xf32>
    %166 = arith.mulf %165, %55 : vector<50x50xf32>
    %cst_55 = arith.constant dense<0.000000e+00> : vector<50xf32>
    %167 = vector.multi_reduction <add>, %166, %cst_55 [1] : vector<50x50xf32> to vector<50xf32>
    %168 = vector.shape_cast %167 : vector<50xf32> to vector<50x1xf32>
    %169 = tpu.reciprocal %168 {approx = true} : vector<50x1xf32> -> vector<50x1xf32>
    %170 = vector.broadcast %169 : vector<50x1xf32> to vector<50x50xf32>
    %171 = arith.mulf %166, %170 : vector<50x50xf32>
    %cst_56 = arith.constant dense<0.000000e+00> : vector<50x16xf32>
    %172 = tpu.matmul %171, %159, %cst_56 {dimension_numbers = #tpu.dot_dimension_numbers<[1], [0], [0], [1], [0, 0, 1, 1], [], []>} : vector<50x50xf32>, vector<50x16xf32>, vector<50x16xf32> -> vector<50x16xf32>
    %173 = arith.addf %154, %172 : vector<50x16xf32>
    %cst_57 = arith.constant dense<0.000000e+00> : vector<50x16xf32>
    %174 = tpu.matmul %173, %66, %cst_57 {dimension_numbers = #tpu.dot_dimension_numbers<[1], [0], [0], [1], [0, 0, 1, 1], [], []>} : vector<50x16xf32>, vector<16x16xf32>, vector<50x16xf32> -> vector<50x16xf32>
    %175 = arith.addf %53, %174 : vector<50x16xf32>
    %176 = vector.broadcast %60 : vector<1x16xf32> to vector<50x16xf32>
    %177 = arith.addf %175, %176 : vector<50x16xf32>
    %cst_58 = arith.constant dense<0.000000e+00> : vector<50xf32>
    %178 = vector.multi_reduction <add>, %177, %cst_58 [1] : vector<50x16xf32> to vector<50xf32>
    %179 = vector.shape_cast %178 : vector<50xf32> to vector<50x1xf32>
    %cst_59 = arith.constant 1.600000e+01 : f32
    %180 = vector.broadcast %cst_59 : f32 to vector<50x1xf32>
    %181 = arith.divf %179, %180 : vector<50x1xf32>
    %182 = arith.mulf %177, %177 : vector<50x16xf32>
    %cst_60 = arith.constant dense<0.000000e+00> : vector<50xf32>
    %183 = vector.multi_reduction <add>, %182, %cst_60 [1] : vector<50x16xf32> to vector<50xf32>
    %184 = vector.shape_cast %183 : vector<50xf32> to vector<50x1xf32>
    %cst_61 = arith.constant 1.600000e+01 : f32
    %185 = vector.broadcast %cst_61 : f32 to vector<50x1xf32>
    %186 = arith.divf %184, %185 : vector<50x1xf32>
    %187 = vector.broadcast %181 : vector<50x1xf32> to vector<50x16xf32>
    %188 = arith.subf %177, %187 : vector<50x16xf32>
    %189 = arith.mulf %181, %181 : vector<50x1xf32>
    %190 = arith.subf %186, %189 : vector<50x1xf32>
    %cst_62 = arith.constant 9.99999974E-6 : f32
    %191 = vector.broadcast %cst_62 : f32 to vector<50x1xf32>
    %192 = arith.addf %190, %191 : vector<50x1xf32>
    %193 = math.rsqrt %192 : vector<50x1xf32>
    %194 = vector.broadcast %193 : vector<50x1xf32> to vector<50x16xf32>
    %195 = arith.mulf %188, %194 : vector<50x16xf32>
    %196 = vector.broadcast %61 : vector<1x16xf32> to vector<50x16xf32>
    %197 = arith.mulf %195, %196 : vector<50x16xf32>
    %198 = vector.broadcast %62 : vector<1x16xf32> to vector<50x16xf32>
    %199 = arith.addf %197, %198 : vector<50x16xf32>
    %cst_63 = arith.constant dense<0.000000e+00> : vector<50x32xf32>
    %200 = tpu.matmul %199, %67, %cst_63 {dimension_numbers = #tpu.dot_dimension_numbers<[1], [0], [0], [1], [0, 0, 1, 1], [], []>} : vector<50x16xf32>, vector<16x32xf32>, vector<50x32xf32> -> vector<50x32xf32>
    %201 = vector.broadcast %63 : vector<1x32xf32> to vector<50x32xf32>
    %202 = arith.addf %200, %201 : vector<50x32xf32>
    %cst_64 = arith.constant 0.000000e+00 : f32
    %203 = vector.broadcast %cst_64 : f32 to vector<50x32xf32>
    %204 = arith.maximumf %202, %203 : vector<50x32xf32>
    %cst_65 = arith.constant dense<0.000000e+00> : vector<50x16xf32>
    %205 = tpu.matmul %204, %68, %cst_65 {dimension_numbers = #tpu.dot_dimension_numbers<[1], [0], [0], [1], [0, 0, 1, 1], [], []>} : vector<50x32xf32>, vector<32x16xf32>, vector<50x16xf32> -> vector<50x16xf32>
    %206 = arith.addf %177, %205 : vector<50x16xf32>
    %207 = vector.broadcast %64 : vector<1x16xf32> to vector<50x16xf32>
    %208 = arith.addf %206, %207 : vector<50x16xf32>
    %c248 = arith.constant 248 : index
    %c0_66 = arith.constant 0 : index
    %209 = vector.load %arg2[%c248, %c0_66] : memref<336x128xf32, #tpu.memory_space<vmem>>, vector<8x128xf32>
    %210 = vector.extract_strided_slice %209 {offsets = [0, 0], sizes = [1, 16], strides = [1, 1]} : vector<8x128xf32> to vector<1x16xf32>
    %211 = vector.extract_strided_slice %209 {offsets = [1, 0], sizes = [1, 16], strides = [1, 1]} : vector<8x128xf32> to vector<1x16xf32>
    %212 = vector.extract_strided_slice %209 {offsets = [2, 0], sizes = [1, 48], strides = [1, 1]} : vector<8x128xf32> to vector<1x48xf32>
    %213 = vector.extract_strided_slice %209 {offsets = [3, 0], sizes = [1, 16], strides = [1, 1]} : vector<8x128xf32> to vector<1x16xf32>
    %214 = vector.extract_strided_slice %209 {offsets = [4, 0], sizes = [1, 16], strides = [1, 1]} : vector<8x128xf32> to vector<1x16xf32>
    %215 = vector.extract_strided_slice %209 {offsets = [5, 0], sizes = [1, 16], strides = [1, 1]} : vector<8x128xf32> to vector<1x16xf32>
    %216 = vector.extract_strided_slice %209 {offsets = [6, 0], sizes = [1, 32], strides = [1, 1]} : vector<8x128xf32> to vector<1x32xf32>
    %217 = vector.extract_strided_slice %209 {offsets = [7, 0], sizes = [1, 16], strides = [1, 1]} : vector<8x128xf32> to vector<1x16xf32>
    %c256 = arith.constant 256 : index
    %c0_67 = arith.constant 0 : index
    %218 = vector.load %arg2[%c256, %c0_67] : memref<336x128xf32, #tpu.memory_space<vmem>>, vector<16x48xf32>
    %c272 = arith.constant 272 : index
    %c0_68 = arith.constant 0 : index
    %219 = vector.load %arg2[%c272, %c0_68] : memref<336x128xf32, #tpu.memory_space<vmem>>, vector<16x16xf32>
    %c288 = arith.constant 288 : index
    %c0_69 = arith.constant 0 : index
    %220 = vector.load %arg2[%c288, %c0_69] : memref<336x128xf32, #tpu.memory_space<vmem>>, vector<16x32xf32>
    %c304 = arith.constant 304 : index
    %c0_70 = arith.constant 0 : index
    %221 = vector.load %arg2[%c304, %c0_70] : memref<336x128xf32, #tpu.memory_space<vmem>>, vector<32x16xf32>
    %cst_71 = arith.constant dense<0.000000e+00> : vector<50xf32>
    %222 = vector.multi_reduction <add>, %208, %cst_71 [1] : vector<50x16xf32> to vector<50xf32>
    %223 = vector.shape_cast %222 : vector<50xf32> to vector<50x1xf32>
    %cst_72 = arith.constant 1.600000e+01 : f32
    %224 = vector.broadcast %cst_72 : f32 to vector<50x1xf32>
    %225 = arith.divf %223, %224 : vector<50x1xf32>
    %226 = arith.mulf %208, %208 : vector<50x16xf32>
    %cst_73 = arith.constant dense<0.000000e+00> : vector<50xf32>
    %227 = vector.multi_reduction <add>, %226, %cst_73 [1] : vector<50x16xf32> to vector<50xf32>
    %228 = vector.shape_cast %227 : vector<50xf32> to vector<50x1xf32>
    %cst_74 = arith.constant 1.600000e+01 : f32
    %229 = vector.broadcast %cst_74 : f32 to vector<50x1xf32>
    %230 = arith.divf %228, %229 : vector<50x1xf32>
    %231 = vector.broadcast %225 : vector<50x1xf32> to vector<50x16xf32>
    %232 = arith.subf %208, %231 : vector<50x16xf32>
    %233 = arith.mulf %225, %225 : vector<50x1xf32>
    %234 = arith.subf %230, %233 : vector<50x1xf32>
    %cst_75 = arith.constant 9.99999974E-6 : f32
    %235 = vector.broadcast %cst_75 : f32 to vector<50x1xf32>
    %236 = arith.addf %234, %235 : vector<50x1xf32>
    %237 = math.rsqrt %236 : vector<50x1xf32>
    %238 = vector.broadcast %237 : vector<50x1xf32> to vector<50x16xf32>
    %239 = arith.mulf %232, %238 : vector<50x16xf32>
    %240 = vector.broadcast %210 : vector<1x16xf32> to vector<50x16xf32>
    %241 = arith.mulf %239, %240 : vector<50x16xf32>
    %242 = vector.broadcast %211 : vector<1x16xf32> to vector<50x16xf32>
    %243 = arith.addf %241, %242 : vector<50x16xf32>
    %cst_76 = arith.constant dense<0.000000e+00> : vector<50x48xf32>
    %244 = tpu.matmul %243, %218, %cst_76 {dimension_numbers = #tpu.dot_dimension_numbers<[1], [0], [0], [1], [0, 0, 1, 1], [], []>} : vector<50x16xf32>, vector<16x48xf32>, vector<50x48xf32> -> vector<50x48xf32>
    %245 = vector.broadcast %212 : vector<1x48xf32> to vector<50x48xf32>
    %246 = arith.addf %244, %245 : vector<50x48xf32>
    %247 = vector.extract_strided_slice %246 {offsets = [0, 0], sizes = [50, 16], strides = [1, 1]} : vector<50x48xf32> to vector<50x16xf32>
    %248 = vector.extract_strided_slice %246 {offsets = [0, 16], sizes = [50, 16], strides = [1, 1]} : vector<50x48xf32> to vector<50x16xf32>
    %249 = vector.extract_strided_slice %246 {offsets = [0, 32], sizes = [50, 16], strides = [1, 1]} : vector<50x48xf32> to vector<50x16xf32>
    %cst_77 = arith.constant 0.000000e+00 : f32
    %250 = vector.broadcast %cst_77 : f32 to vector<50x16xf32>
    %251 = vector.extract_strided_slice %54 {offsets = [0, 0], sizes = [1, 16], strides = [1, 1]} : vector<4x16xf32> to vector<1x16xf32>
    %252 = vector.broadcast %251 : vector<1x16xf32> to vector<50x16xf32>
    %253 = arith.mulf %248, %252 : vector<50x16xf32>
    %254 = vector.broadcast %251 : vector<1x16xf32> to vector<50x16xf32>
    %255 = arith.mulf %249, %254 : vector<50x16xf32>
    %cst_78 = arith.constant dense<0.000000e+00> : vector<50x50xf32>
    %256 = tpu.matmul %247, %253, %cst_78 {dimension_numbers = #tpu.dot_dimension_numbers<[1], [1], [0], [0], [0, 0, 1, 0], [], []>} : vector<50x16xf32>, vector<50x16xf32>, vector<50x50xf32> -> vector<50x50xf32>
    %cst_79 = arith.constant dense<0xFF800000> : vector<50xf32>
    %257 = vector.multi_reduction <maximumf>, %256, %cst_79 [1] : vector<50x50xf32> to vector<50xf32>
    %258 = vector.shape_cast %257 : vector<50xf32> to vector<50x1xf32>
    %259 = vector.broadcast %258 : vector<50x1xf32> to vector<50x50xf32>
    %260 = arith.subf %256, %259 : vector<50x50xf32>
    %261 = math.exp %260 : vector<50x50xf32>
    %262 = arith.mulf %261, %55 : vector<50x50xf32>
    %cst_80 = arith.constant dense<0.000000e+00> : vector<50xf32>
    %263 = vector.multi_reduction <add>, %262, %cst_80 [1] : vector<50x50xf32> to vector<50xf32>
    %264 = vector.shape_cast %263 : vector<50xf32> to vector<50x1xf32>
    %265 = tpu.reciprocal %264 {approx = true} : vector<50x1xf32> -> vector<50x1xf32>
    %266 = vector.broadcast %265 : vector<50x1xf32> to vector<50x50xf32>
    %267 = arith.mulf %262, %266 : vector<50x50xf32>
    %cst_81 = arith.constant dense<0.000000e+00> : vector<50x16xf32>
    %268 = tpu.matmul %267, %255, %cst_81 {dimension_numbers = #tpu.dot_dimension_numbers<[1], [0], [0], [1], [0, 0, 1, 1], [], []>} : vector<50x50xf32>, vector<50x16xf32>, vector<50x16xf32> -> vector<50x16xf32>
    %269 = arith.addf %250, %268 : vector<50x16xf32>
    %270 = vector.extract_strided_slice %54 {offsets = [1, 0], sizes = [1, 16], strides = [1, 1]} : vector<4x16xf32> to vector<1x16xf32>
    %271 = vector.broadcast %270 : vector<1x16xf32> to vector<50x16xf32>
    %272 = arith.mulf %248, %271 : vector<50x16xf32>
    %273 = vector.broadcast %270 : vector<1x16xf32> to vector<50x16xf32>
    %274 = arith.mulf %249, %273 : vector<50x16xf32>
    %cst_82 = arith.constant dense<0.000000e+00> : vector<50x50xf32>
    %275 = tpu.matmul %247, %272, %cst_82 {dimension_numbers = #tpu.dot_dimension_numbers<[1], [1], [0], [0], [0, 0, 1, 0], [], []>} : vector<50x16xf32>, vector<50x16xf32>, vector<50x50xf32> -> vector<50x50xf32>
    %cst_83 = arith.constant dense<0xFF800000> : vector<50xf32>
    %276 = vector.multi_reduction <maximumf>, %275, %cst_83 [1] : vector<50x50xf32> to vector<50xf32>
    %277 = vector.shape_cast %276 : vector<50xf32> to vector<50x1xf32>
    %278 = vector.broadcast %277 : vector<50x1xf32> to vector<50x50xf32>
    %279 = arith.subf %275, %278 : vector<50x50xf32>
    %280 = math.exp %279 : vector<50x50xf32>
    %281 = arith.mulf %280, %55 : vector<50x50xf32>
    %cst_84 = arith.constant dense<0.000000e+00> : vector<50xf32>
    %282 = vector.multi_reduction <add>, %281, %cst_84 [1] : vector<50x50xf32> to vector<50xf32>
    %283 = vector.shape_cast %282 : vector<50xf32> to vector<50x1xf32>
    %284 = tpu.reciprocal %283 {approx = true} : vector<50x1xf32> -> vector<50x1xf32>
    %285 = vector.broadcast %284 : vector<50x1xf32> to vector<50x50xf32>
    %286 = arith.mulf %281, %285 : vector<50x50xf32>
    %cst_85 = arith.constant dense<0.000000e+00> : vector<50x16xf32>
    %287 = tpu.matmul %286, %274, %cst_85 {dimension_numbers = #tpu.dot_dimension_numbers<[1], [0], [0], [1], [0, 0, 1, 1], [], []>} : vector<50x50xf32>, vector<50x16xf32>, vector<50x16xf32> -> vector<50x16xf32>
    %288 = arith.addf %269, %287 : vector<50x16xf32>
    %289 = vector.extract_strided_slice %54 {offsets = [2, 0], sizes = [1, 16], strides = [1, 1]} : vector<4x16xf32> to vector<1x16xf32>
    %290 = vector.broadcast %289 : vector<1x16xf32> to vector<50x16xf32>
    %291 = arith.mulf %248, %290 : vector<50x16xf32>
    %292 = vector.broadcast %289 : vector<1x16xf32> to vector<50x16xf32>
    %293 = arith.mulf %249, %292 : vector<50x16xf32>
    %cst_86 = arith.constant dense<0.000000e+00> : vector<50x50xf32>
    %294 = tpu.matmul %247, %291, %cst_86 {dimension_numbers = #tpu.dot_dimension_numbers<[1], [1], [0], [0], [0, 0, 1, 0], [], []>} : vector<50x16xf32>, vector<50x16xf32>, vector<50x50xf32> -> vector<50x50xf32>
    %cst_87 = arith.constant dense<0xFF800000> : vector<50xf32>
    %295 = vector.multi_reduction <maximumf>, %294, %cst_87 [1] : vector<50x50xf32> to vector<50xf32>
    %296 = vector.shape_cast %295 : vector<50xf32> to vector<50x1xf32>
    %297 = vector.broadcast %296 : vector<50x1xf32> to vector<50x50xf32>
    %298 = arith.subf %294, %297 : vector<50x50xf32>
    %299 = math.exp %298 : vector<50x50xf32>
    %300 = arith.mulf %299, %55 : vector<50x50xf32>
    %cst_88 = arith.constant dense<0.000000e+00> : vector<50xf32>
    %301 = vector.multi_reduction <add>, %300, %cst_88 [1] : vector<50x50xf32> to vector<50xf32>
    %302 = vector.shape_cast %301 : vector<50xf32> to vector<50x1xf32>
    %303 = tpu.reciprocal %302 {approx = true} : vector<50x1xf32> -> vector<50x1xf32>
    %304 = vector.broadcast %303 : vector<50x1xf32> to vector<50x50xf32>
    %305 = arith.mulf %300, %304 : vector<50x50xf32>
    %cst_89 = arith.constant dense<0.000000e+00> : vector<50x16xf32>
    %306 = tpu.matmul %305, %293, %cst_89 {dimension_numbers = #tpu.dot_dimension_numbers<[1], [0], [0], [1], [0, 0, 1, 1], [], []>} : vector<50x50xf32>, vector<50x16xf32>, vector<50x16xf32> -> vector<50x16xf32>
    %307 = arith.addf %288, %306 : vector<50x16xf32>
    %308 = vector.extract_strided_slice %54 {offsets = [3, 0], sizes = [1, 16], strides = [1, 1]} : vector<4x16xf32> to vector<1x16xf32>
    %309 = vector.broadcast %308 : vector<1x16xf32> to vector<50x16xf32>
    %310 = arith.mulf %248, %309 : vector<50x16xf32>
    %311 = vector.broadcast %308 : vector<1x16xf32> to vector<50x16xf32>
    %312 = arith.mulf %249, %311 : vector<50x16xf32>
    %cst_90 = arith.constant dense<0.000000e+00> : vector<50x50xf32>
    %313 = tpu.matmul %247, %310, %cst_90 {dimension_numbers = #tpu.dot_dimension_numbers<[1], [1], [0], [0], [0, 0, 1, 0], [], []>} : vector<50x16xf32>, vector<50x16xf32>, vector<50x50xf32> -> vector<50x50xf32>
    %cst_91 = arith.constant dense<0xFF800000> : vector<50xf32>
    %314 = vector.multi_reduction <maximumf>, %313, %cst_91 [1] : vector<50x50xf32> to vector<50xf32>
    %315 = vector.shape_cast %314 : vector<50xf32> to vector<50x1xf32>
    %316 = vector.broadcast %315 : vector<50x1xf32> to vector<50x50xf32>
    %317 = arith.subf %313, %316 : vector<50x50xf32>
    %318 = math.exp %317 : vector<50x50xf32>
    %319 = arith.mulf %318, %55 : vector<50x50xf32>
    %cst_92 = arith.constant dense<0.000000e+00> : vector<50xf32>
    %320 = vector.multi_reduction <add>, %319, %cst_92 [1] : vector<50x50xf32> to vector<50xf32>
    %321 = vector.shape_cast %320 : vector<50xf32> to vector<50x1xf32>
    %322 = tpu.reciprocal %321 {approx = true} : vector<50x1xf32> -> vector<50x1xf32>
    %323 = vector.broadcast %322 : vector<50x1xf32> to vector<50x50xf32>
    %324 = arith.mulf %319, %323 : vector<50x50xf32>
    %cst_93 = arith.constant dense<0.000000e+00> : vector<50x16xf32>
    %325 = tpu.matmul %324, %312, %cst_93 {dimension_numbers = #tpu.dot_dimension_numbers<[1], [0], [0], [1], [0, 0, 1, 1], [], []>} : vector<50x50xf32>, vector<50x16xf32>, vector<50x16xf32> -> vector<50x16xf32>
    %326 = arith.addf %307, %325 : vector<50x16xf32>
    %cst_94 = arith.constant dense<0.000000e+00> : vector<50x16xf32>
    %327 = tpu.matmul %326, %219, %cst_94 {dimension_numbers = #tpu.dot_dimension_numbers<[1], [0], [0], [1], [0, 0, 1, 1], [], []>} : vector<50x16xf32>, vector<16x16xf32>, vector<50x16xf32> -> vector<50x16xf32>
    %328 = arith.addf %208, %327 : vector<50x16xf32>
    %329 = vector.broadcast %213 : vector<1x16xf32> to vector<50x16xf32>
    %330 = arith.addf %328, %329 : vector<50x16xf32>
    %cst_95 = arith.constant dense<0.000000e+00> : vector<50xf32>
    %331 = vector.multi_reduction <add>, %330, %cst_95 [1] : vector<50x16xf32> to vector<50xf32>
    %332 = vector.shape_cast %331 : vector<50xf32> to vector<50x1xf32>
    %cst_96 = arith.constant 1.600000e+01 : f32
    %333 = vector.broadcast %cst_96 : f32 to vector<50x1xf32>
    %334 = arith.divf %332, %333 : vector<50x1xf32>
    %335 = arith.mulf %330, %330 : vector<50x16xf32>
    %cst_97 = arith.constant dense<0.000000e+00> : vector<50xf32>
    %336 = vector.multi_reduction <add>, %335, %cst_97 [1] : vector<50x16xf32> to vector<50xf32>
    %337 = vector.shape_cast %336 : vector<50xf32> to vector<50x1xf32>
    %cst_98 = arith.constant 1.600000e+01 : f32
    %338 = vector.broadcast %cst_98 : f32 to vector<50x1xf32>
    %339 = arith.divf %337, %338 : vector<50x1xf32>
    %340 = vector.broadcast %334 : vector<50x1xf32> to vector<50x16xf32>
    %341 = arith.subf %330, %340 : vector<50x16xf32>
    %342 = arith.mulf %334, %334 : vector<50x1xf32>
    %343 = arith.subf %339, %342 : vector<50x1xf32>
    %cst_99 = arith.constant 9.99999974E-6 : f32
    %344 = vector.broadcast %cst_99 : f32 to vector<50x1xf32>
    %345 = arith.addf %343, %344 : vector<50x1xf32>
    %346 = math.rsqrt %345 : vector<50x1xf32>
    %347 = vector.broadcast %346 : vector<50x1xf32> to vector<50x16xf32>
    %348 = arith.mulf %341, %347 : vector<50x16xf32>
    %349 = vector.broadcast %214 : vector<1x16xf32> to vector<50x16xf32>
    %350 = arith.mulf %348, %349 : vector<50x16xf32>
    %351 = vector.broadcast %215 : vector<1x16xf32> to vector<50x16xf32>
    %352 = arith.addf %350, %351 : vector<50x16xf32>
    %cst_100 = arith.constant dense<0.000000e+00> : vector<50x32xf32>
    %353 = tpu.matmul %352, %220, %cst_100 {dimension_numbers = #tpu.dot_dimension_numbers<[1], [0], [0], [1], [0, 0, 1, 1], [], []>} : vector<50x16xf32>, vector<16x32xf32>, vector<50x32xf32> -> vector<50x32xf32>
    %354 = vector.broadcast %216 : vector<1x32xf32> to vector<50x32xf32>
    %355 = arith.addf %353, %354 : vector<50x32xf32>
    %cst_101 = arith.constant 0.000000e+00 : f32
    %356 = vector.broadcast %cst_101 : f32 to vector<50x32xf32>
    %357 = arith.maximumf %355, %356 : vector<50x32xf32>
    %cst_102 = arith.constant dense<0.000000e+00> : vector<50x16xf32>
    %358 = tpu.matmul %357, %221, %cst_102 {dimension_numbers = #tpu.dot_dimension_numbers<[1], [0], [0], [1], [0, 0, 1, 1], [], []>} : vector<50x32xf32>, vector<32x16xf32>, vector<50x16xf32> -> vector<50x16xf32>
    %359 = arith.addf %330, %358 : vector<50x16xf32>
    %360 = vector.broadcast %217 : vector<1x16xf32> to vector<50x16xf32>
    %361 = arith.addf %359, %360 : vector<50x16xf32>
    %c36 = arith.constant 36 : index
    %c0_103 = arith.constant 0 : index
    %362 = vector.load %arg2[%c36, %c0_103] : memref<336x128xf32, #tpu.memory_space<vmem>>, vector<2x50xf32>
    %cst_104 = arith.constant dense<0.000000e+00> : vector<2x16xf32>
    %363 = tpu.matmul %362, %361, %cst_104 {dimension_numbers = #tpu.dot_dimension_numbers<[1], [0], [0], [1], [0, 0, 1, 1], [], []>} : vector<2x50xf32>, vector<50x16xf32>, vector<2x16xf32> -> vector<2x16xf32>
    %c112 = arith.constant 112 : index
    %c0_105 = arith.constant 0 : index
    %364 = vector.load %arg2[%c112, %c0_105] : memref<336x128xf32, #tpu.memory_space<vmem>>, vector<16x32xf32>
    %c38 = arith.constant 38 : index
    %c0_106 = arith.constant 0 : index
    %365 = vector.load %arg2[%c38, %c0_106] : memref<336x128xf32, #tpu.memory_space<vmem>>, vector<1x32xf32>
    %c128 = arith.constant 128 : index
    %c0_107 = arith.constant 0 : index
    %366 = vector.load %arg2[%c128, %c0_107] : memref<336x128xf32, #tpu.memory_space<vmem>>, vector<32x3xf32>
    %c39 = arith.constant 39 : index
    %c0_108 = arith.constant 0 : index
    %367 = vector.load %arg2[%c39, %c0_108] : memref<336x128xf32, #tpu.memory_space<vmem>>, vector<1x3xf32>
    %cst_109 = arith.constant dense<0.000000e+00> : vector<2x32xf32>
    %368 = tpu.matmul %363, %364, %cst_109 {dimension_numbers = #tpu.dot_dimension_numbers<[1], [0], [0], [1], [0, 0, 1, 1], [], []>} : vector<2x16xf32>, vector<16x32xf32>, vector<2x32xf32> -> vector<2x32xf32>
    %369 = vector.broadcast %365 : vector<1x32xf32> to vector<2x32xf32>
    %370 = arith.addf %368, %369 : vector<2x32xf32>
    %cst_110 = arith.constant 0.000000e+00 : f32
    %371 = vector.broadcast %cst_110 : f32 to vector<2x32xf32>
    %372 = arith.maximumf %370, %371 : vector<2x32xf32>
    %cst_111 = arith.constant dense<0.000000e+00> : vector<2x3xf32>
    %373 = tpu.matmul %372, %366, %cst_111 {dimension_numbers = #tpu.dot_dimension_numbers<[1], [0], [0], [1], [0, 0, 1, 1], [], []>} : vector<2x32xf32>, vector<32x3xf32>, vector<2x3xf32> -> vector<2x3xf32>
    %374 = vector.broadcast %367 : vector<1x3xf32> to vector<2x3xf32>
    %375 = arith.addf %373, %374 : vector<2x3xf32>
    %c0_112 = arith.constant 0 : index
    %c0_113 = arith.constant 0 : index
    %376 = vector.load %arg3[%c0_112, %c0_113] : memref<2x3xf32, #tpu.memory_space<vmem>>, vector<2x3xf32>
    tpu.vector_store %arg3[%c0_112, %c0_113], %375 {strides = array<i32>} : memref<2x3xf32, #tpu.memory_space<vmem>>, vector<2x3xf32>,
    return
  }
  func.func @transform_0(%arg0: i32) -> (i32, i32, i32) {
    %c0_i32 = arith.constant 0 : i32
    %c0_i32_0 = arith.constant 0 : i32
    %c0_i32_1 = arith.constant 0 : i32
    %c0_i32_2 = arith.constant 0 : i32
    return %c0_i32, %c0_i32_0, %c0_i32_1 : i32, i32, i32
  }
  func.func @transform_1(%arg0: i32) -> (i32, i32) {
    %c0_i32 = arith.constant 0 : i32
    %c0_i32_0 = arith.constant 0 : i32
    %c0_i32_1 = arith.constant 0 : i32
    return %c0_i32, %c0_i32_0 : i32, i32
  }
  func.func @transform_2(%arg0: i32) -> (i32, i32) {
    %c0_i32 = arith.constant 0 : i32
    %c0_i32_0 = arith.constant 0 : i32
    %c0_i32_1 = arith.constant 0 : i32
    return %c0_i32, %c0_i32_0 : i32, i32
  }
}

</mosaic_0001>

<llo_original>
// kernel: eeg_conformer_forward.1
$region0: #{eeg_conformer_forward.1}
  #allocation0 [shape = 'u32[]', space=smem, size = 0x4, offset = 0x4, fixed_abs, tag = 'smem constant byte address 0x4 - core index']
  #allocation1 [shape = 'u32[144,128]{1,0:T(1,128)}', space=vmem, size = 0x12000, scoped, tag = 'internal scratch']
  #allocation2 [shape = 'f32[2,4,128]{2,1,0:T(4,128)}', space=vmem, size = 0x1000, scoped, tag = 'scratch operand']
  %s0 = inlined_call_operand.hbm [shape: f32[2,4,120], index: 0, kind: input, shape index: {}]
  %s1 = inlined_call_operand.hbm [shape: f32[336,128], index: 1, kind: input, shape index: {}]
  %s2 = inlined_call_operand.hbm [shape: f32[2,3], index: 2, kind: output, shape index: {}]
  %s3 = sld [smem:[#allocation0]]
  $region26: #{eeg_conformer_forward.1} parent=0
    _
  %s5 = ssub.s32 1, %s3
  %s6 = scalar_select 0, %s5, %s3
  $region1: #{eeg_conformer_forward.1} parent=0
    #allocation3 [shape = 'u8[4096]{0}', space=vmem, size = 0x1000, scoped, tag = 'input window, operand 0, single buffered']
    #allocation4 [shape = 's32[1]{0}', space=sflag, size = 0x4, scoped, tag = 'scoped memory for eeg_conformer_forward.1']
    #allocation5 [shape = 's32[1]{0}', space=sflag, size = 0x4, scoped, tag = 'scoped memory for eeg_conformer_forward.1']
    #allocation6 [shape = 'u8[172032]{0}', space=vmem, size = 0x2a000, scoped, tag = 'input window, operand 1, single buffered']
    #allocation7 [shape = 's32[1]{0}', space=sflag, size = 0x4, scoped, tag = 'scoped memory for eeg_conformer_forward.1']
    #allocation8 [shape = 'u8[1024]{0}', space=vmem, size = 0x400, scoped, tag = 'output window, operand 0, single buffered']
    %7 = vsyncpa [#allocation4], 0
    %8 = vsyncpa [#allocation7], 0
    %9 = vsyncpa [#allocation5], 0
    // Predicated region
    $region2: #{eeg_conformer_forward.1} parent=1 // pred_check
      _
    $region3: #{eeg_conformer_forward.1} parent=1 // pred_check_branch
      %11 = sbr.rel (0) target = $region5
    $region4: #{eeg_conformer_forward.1} parent=1 // pred_region
      %s13 = ssub.s32 128, 128
      %14 = vsyncadd [#allocation4], %s13
      %s15 = sshll.u32 [#allocation3], 4
      %s16 = int_to_ptr.vmem [resolvable:$true] %s15
      %21 = dma.hbm_to_vmem [thread:$0]  %s0, 128, %s16, [#allocation4], 64, 64, 4
    $region5: #{eeg_conformer_forward.1} parent=1 // pred_fallthru
      _
    // Predicated region
    $region6: #{eeg_conformer_forward.1} parent=1 // pred_check
      _
    $region7: #{eeg_conformer_forward.1} parent=1 // pred_check_branch
      %23 = sbr.rel (0) target = $region9
    $region8: #{eeg_conformer_forward.1} parent=1 // pred_region
      %s25 = ssub.s32 5376, 5376
      %26 = vsyncadd [#allocation7], %s25
      %s27 = sshll.u32 [#allocation6], 4
      %s28 = int_to_ptr.vmem [resolvable:$true] %s27
      %33 = dma.hbm_to_vmem [thread:$0]  %s1, 5376, %s28, [#allocation7], 128, 128, 8
    $region9: #{eeg_conformer_forward.1} parent=1 // pred_fallthru
      _
    // Predicated region
    $region10: #{eeg_conformer_forward.1} parent=1 // pred_check
      _
    $region11: #{eeg_conformer_forward.1} parent=1 // pred_check_branch
      %35 = sbr.rel (0) target = $region13
    $region12: #{eeg_conformer_forward.1} parent=1 // pred_region
      %36 = dma.done [#allocation4], 128
    $region13: #{eeg_conformer_forward.1} parent=1 // pred_fallthru
      _
    // Predicated region
    $region14: #{eeg_conformer_forward.1} parent=1 // pred_check
      _
    $region15: #{eeg_conformer_forward.1} parent=1 // pred_check_branch
      %38 = sbr.rel (0) target = $region17
    $region16: #{eeg_conformer_forward.1} parent=1 // pred_region
      %39 = dma.done [#allocation7], 5376
    $region17: #{eeg_conformer_forward.1} parent=1 // pred_fallthru
      _
    %v40 = vld [vmem:[#allocation6 + $0x60] sm:$0xff]
    %v41 = vld [vmem:[#allocation6 + $0x68] sm:$0xff]
    %v42 = vld [vmem:[#allocation6] sm:$0xff]
    %v43 = vld [vmem:[#allocation6 + $0x8] sm:$0xff]
    %v44 = vld [vmem:[#allocation6 + $0x10] sm:$0xff]
    %v45 = vld [vmem:[#allocation6 + $0x18] sm:$0x1]
    %46 = vst [vmem:[#allocation2] sm:$0xf] 0.0
    %47 = vst [vmem:[#allocation2 + $0x4] sm:$0xf] 0.0
    %v48 = vld [vmem:[#allocation3] sm:$0xf]
    %v49 = vld [vmem:[#allocation3 + $0x4] sm:$0xf]
    %52 = vrot.lane.b32.xlu0 %v48, 4
    %v53 = vpop.permute.xlu0 %52
    %54 = vrot.lane.b32.xlu0 %v49, 4
    %v55 = vpop.permute.xlu0 %54
    %vm58 = vcmask 1010720
    %59 = vst.msk [vmem:[#allocation2] sm:$0xf] %vm58, %v53
    %60 = vst.msk [vmem:[#allocation2 + $0x4] sm:$0xf] %vm58, %v55
    %v61 = vld [vmem:[#allocation2] sm:$0xf]
    %v63 = vrot.slane %v61, 4
    %64 = vrot.lane.b32.xlu0 %v63, 127
    %v65 = vpop.permute.xlu0 %64
    %67 = vrot.lane.b32.xlu0 %v61, 126
    %v68 = vpop.permute.xlu0 %67
    %70 = vrot.lane.b32.xlu0 %v63, 125
    %v71 = vpop.permute.xlu0 %70
    %73 = vrot.lane.b32.xlu0 %v61, 124
    %v74 = vpop.permute.xlu0 %73
    %76 = vrot.lane.b32.xlu0 %v63, 123
    %v77 = vpop.permute.xlu0 %76
    %79 = vrot.lane.b32.xlu0 %v61, 122
    %v80 = vpop.permute.xlu0 %79
    %82 = vrot.lane.b32.xlu0 %v63, 121
    %v83 = vpop.permute.xlu0 %82
    %vm85 = vcmask 1043456
    %v86 = vsel %vm85, %v61, %v65
    %v87 = vsel %vm85, %v68, %v71
    %v88 = vsel %vm85, %v74, %v77
    %v89 = vsel %vm85, %v80, %v83
    %91 = vset.pattern.permute.xlu0 32
    %92 = vperm.xlu0 %91, %v40
    %v93 = vpop.permute.xlu0 %92
    %96 = vset.pattern.permute.xlu0 32
    %97 = vperm.xlu0 %96, %v41
    %v98 = vpop.permute.xlu0 %97
    %vm100 = vcmask 261120
    %v101 = vsel %vm100, %v40, 0
    %v103 = vsel %vm100, %v41, 0
    %105 = vmatprep.subr.mxu0 0.0
    %106 = vmatpush1.msra.mxu0 %v86
    %107 = vmatprep.subr.mxu0 0.0
    %108 = vmatpush1.msra.mxu0 %v87
    %109 = vmatprep.subr.mxu0 0.0
    %110 = vmatpush1.msra.mxu0 %v88
    %111 = vmatprep.subr.mxu0 0.0
    %112 = vmatpush1.msra.mxu0 %v89
    %113 = vmatprep.subr.mxu0 0.0
    %114 = vmatpush1.msra.mxu0 0.0
    %115 = vmatprep.subr.mxu0 0.0
    %116 = vmatpush1.msra.mxu0 0.0
    %117 = vmatprep.subr.mxu0 0.0
    %118 = vmatpush1.msra.mxu0 0.0
    %119 = vmatprep.subr.mxu0 0.0
    %120 = vmatpush1.msra.mxu0 0.0
    %121 = vmatprep.subr.mxu0 0.0
    %122 = vmatpush1.msra.mxu0 0.0
    %123 = vmatprep.subr.mxu0 0.0
    %124 = vmatpush1.msra.mxu0 0.0
    %125 = vmatprep.subr.mxu0 0.0
    %126 = vmatpush1.msra.mxu0 0.0
    %127 = vmatprep.subr.mxu0 0.0
    %128 = vmatpush1.msra.mxu0 0.0
    %129 = vmatprep.subr.mxu0 0.0
    %130 = vmatpush1.msra.mxu0 0.0
    %131 = vmatprep.subr.mxu0 0.0
    %132 = vmatpush1.msra.mxu0 0.0
    %133 = vmatprep.subr.mxu0 0.0
    %134 = vmatpush1.msra.mxu0 0.0
    %135 = vmatprep.subr.mxu0 0.0
    %136 = vmatpush1.msra.mxu0 0.0
    %137 = vmatprep.subr.mxu0 0.0
    %138 = vmatpush1.msra.mxu0 0.0
    %139 = vmatprep.subr.mxu0 0.0
    %140 = vmatpush1.msra.mxu0 0.0
    %141 = vmatprep.subr.mxu0 0.0
    %142 = vmatpush1.msra.mxu0 0.0
    %143 = vmatprep.subr.mxu0 0.0
    %144 = vmatpush1.msra.mxu0 0.0
    %145 = vmatprep.subr.mxu0 0.0
    %146 = vmatpush1.msra.mxu0 0.0
    %147 = vmatprep.subr.mxu0 0.0
    %148 = vmatpush1.msra.mxu0 0.0
    %149 = vmatprep.subr.mxu0 0.0
    %150 = vmatpush1.msra.mxu0 0.0
    %151 = vmatprep.subr.mxu0 0.0
    %152 = vmatpush1.msra.mxu0 0.0
    %153 = vmatprep.subr.mxu0 0.0
    %154 = vmatpush1.msra.mxu0 0.0
    %155 = vmatprep.subr.mxu0 0.0
    %156 = vmatpush1.msra.mxu0 0.0
    %157 = vmatprep.subr.mxu0 0.0
    %158 = vmatpush1.msra.mxu0 0.0
    %159 = vmatprep.subr.mxu0 0.0
    %160 = vmatpush1.msra.mxu0 0.0
    %161 = vmatprep.subr.mxu0 0.0
    %162 = vmatpush1.msra.mxu0 0.0
    %163 = vmatprep.subr.mxu0 0.0
    %164 = vmatpush1.msra.mxu0 0.0
    %165 = vmatprep.subr.mxu0 0.0
    %166 = vmatpush1.msra.mxu0 0.0
    %167 = vmatprep.subr.mxu0 0.0
    %168 = vmatpush1.msra.mxu0 0.0
    %169 = vmatprep.mubr.f32.mxu0 0.0
    %170 = vmatmul.mubr.f32.gmra.mrb[0].mxu0 %v101
    %v171 = vpop.f32.mrb[0].mxu0
    %v172 = vadd.f32 %v93, %v171
    %v173 = vpop.f32.mrb[0].mxu0
    %174 = vmatprep.mubr.f32.mxu0 0.0
    %175 = vmatmul.mubr.f32.gmra.mrb[0].mxu0 %v103
    %v176 = vpop.f32.mrb[0].mxu0
    %v177 = vadd.f32 %v98, %v176
    %v178 = vpop.f32.mrb[0].mxu0
    %179 = vdwg.mxu0
    %vm180 = vcmp.gt.f32.partialorder %v172, 0.0
    %vm181 = vcmp.gt.f32.partialorder %v177, 0.0
    %v182 = vmin.f32 %v172, 0.0
    %v183 = vmin.f32 %v177, 0.0
    %v184 = vmul.f32 %v182, 1.442695
    %v185 = vpow.pop %v184
    %v186 = vmul.f32 %v183, 1.442695
    %v187 = vpow.pop %v186
    %v188 = vsub.f32 %v185, 1.0
    %v189 = vsub.f32 %v187, 1.0
    %v190 = vsel %vm180, %v172, %v188
    %v191 = vsel %vm181, %v177, %v189
    %vm192 = vcmask 990208
    %v194 = vsel %vm192, %v42, 0
    %v197 = vsel %vm192, %v43, 0
    %v200 = vsel %vm192, %v44, 0
    %v203 = vsel %vm192, %v45, 0
    %v206 = vsel %vm192, %v190, 0
    %v209 = vsel %vm192, %v191, 0
    %211 = vmatprep.subr.mxu0 0.0
    %212 = vmatpush1.xpose.msra.mxu0 %v206
    %213 = vmatprep.subr.mxu0 0.0
    %214 = vmatpush1.xpose.msra.mxu0 %v209
    %215 = vmatprep.subr.mxu0 0.0
    %216 = vmatpush1.xpose.msra.mxu0 0.0
    %217 = vmatprep.subr.mxu0 0.0
    %218 = vmatpush1.xpose.msra.mxu0 0.0
    %219 = vmatprep.subr.mxu0 0.0
    %220 = vmatpush1.xpose.msra.mxu0 0.0
    %221 = vmatprep.subr.mxu0 0.0
    %222 = vmatpush1.xpose.msra.mxu0 0.0
    %223 = vmatprep.subr.mxu0 0.0
    %224 = vmatpush1.xpose.msra.mxu0 0.0
    %225 = vmatprep.subr.mxu0 0.0
    %226 = vmatpush1.xpose.msra.mxu0 0.0
    %227 = vmatprep.subr.mxu0 0.0
    %228 = vmatpush1.xpose.msra.mxu0 0.0
    %229 = vmatprep.subr.mxu0 0.0
    %230 = vmatpush1.xpose.msra.mxu0 0.0
    %231 = vmatprep.subr.mxu0 0.0
    %232 = vmatpush1.xpose.msra.mxu0 0.0
    %233 = vmatprep.subr.mxu0 0.0
    %234 = vmatpush1.xpose.msra.mxu0 0.0
    %235 = vmatprep.subr.mxu0 0.0
    %236 = vmatpush1.xpose.msra.mxu0 0.0
    %237 = vmatprep.subr.mxu0 0.0
    %238 = vmatpush1.xpose.msra.mxu0 0.0
    %239 = vmatprep.subr.mxu0 0.0
    %240 = vmatpush1.xpose.msra.mxu0 0.0
    %241 = vmatprep.subr.mxu0 0.0
    %242 = vmatpush1.xpose.msra.mxu0 0.0
    %243 = vmatprep.subr.mxu0 0.0
    %244 = vmatpush1.xpose.msra.mxu0 0.0
    %245 = vmatprep.subr.mxu0 0.0
    %246 = vmatpush1.xpose.msra.mxu0 0.0
    %247 = vmatprep.subr.mxu0 0.0
    %248 = vmatpush1.xpose.msra.mxu0 0.0
    %249 = vmatprep.subr.mxu0 0.0
    %250 = vmatpush1.xpose.msra.mxu0 0.0
    %251 = vmatprep.subr.mxu0 0.0
    %252 = vmatpush1.xpose.msra.mxu0 0.0
    %253 = vmatprep.subr.mxu0 0.0
    %254 = vmatpush1.xpose.msra.mxu0 0.0
    %255 = vmatprep.subr.mxu0 0.0
    %256 = vmatpush1.xpose.msra.mxu0 0.0
    %257 = vmatprep.subr.mxu0 0.0
    %258 = vmatpush1.xpose.msra.mxu0 0.0
    %259 = vmatprep.subr.mxu0 0.0
    %260 = vmatpush1.xpose.msra.mxu0 0.0
    %261 = vmatprep.subr.mxu0 0.0
    %262 = vmatpush1.xpose.msra.mxu0 0.0
    %263 = vmatprep.subr.mxu0 0.0
    %264 = vmatpush1.xpose.msra.mxu0 0.0
    %265 = vmatprep.subr.mxu0 0.0
    %266 = vmatpush1.xpose.msra.mxu0 0.0
    %267 = vmatprep.subr.mxu0 0.0
    %268 = vmatpush1.xpose.msra.mxu0 0.0
    %269 = vmatprep.subr.mxu0 0.0
    %270 = vmatpush1.xpose.msra.mxu0 0.0
    %271 = vmatprep.subr.mxu0 0.0
    %272 = vmatpush1.xpose.msra.mxu0 0.0
    %273 = vmatprep.subr.mxu0 0.0
    %274 = vmatpush1.xpose.msra.mxu0 0.0
    %275 = vmatprep.mubr.f32.mxu0 0.0
    %276 = vmatmul.mubr.f32.gmra.mrb[0].mxu0 %v194
    %v277 = vpop.f32.mrb[0].mxu0
    %v278 = vadd.f32 0.0, %v277
    %v279 = vpop.f32.mrb[0].mxu0
    %280 = vmatprep.mubr.f32.mxu0 0.0
    %281 = vmatmul.mubr.f32.gmra.mrb[0].mxu0 %v197
    %v282 = vpop.f32.mrb[0].mxu0
    %v283 = vadd.f32 0.0, %v282
    %v284 = vpop.f32.mrb[0].mxu0
    %285 = vmatprep.mubr.f32.mxu0 0.0
    %286 = vmatmul.mubr.f32.gmra.mrb[0].mxu0 %v200
    %v287 = vpop.f32.mrb[0].mxu0
    %v288 = vadd.f32 0.0, %v287
    %v289 = vpop.f32.mrb[0].mxu0
    %290 = vmatprep.mubr.f32.mxu0 0.0
    %291 = vmatmul.mubr.f32.gmra.mrb[0].mxu0 %v203
    %v292 = vpop.f32.mrb[0].mxu0
    %v293 = vadd.f32 0.0, %v292
    %v294 = vpop.f32.mrb[0].mxu0
    %295 = vdwg.mxu0
    %s296 = scalar_lea.vmem [#allocation2], 4
    %v297 = vld [vmem:[%s296] sm:$0xf]
    %v299 = vrot.slane %v297, 4
    %300 = vrot.lane.b32.xlu0 %v299, 127
    %v301 = vpop.permute.xlu0 %300
    %303 = vrot.lane.b32.xlu0 %v297, 126
    %v304 = vpop.permute.xlu0 %303
    %306 = vrot.lane.b32.xlu0 %v299, 125
    %v307 = vpop.permute.xlu0 %306
    %309 = vrot.lane.b32.xlu0 %v297, 124
    %v310 = vpop.permute.xlu0 %309
    %312 = vrot.lane.b32.xlu0 %v299, 123
    %v313 = vpop.permute.xlu0 %312
    %315 = vrot.lane.b32.xlu0 %v297, 122
    %v316 = vpop.permute.xlu0 %315
    %318 = vrot.lane.b32.xlu0 %v299, 121
    %v319 = vpop.permute.xlu0 %318
    %v321 = vsel %vm85, %v297, %v301
    %v322 = vsel %vm85, %v304, %v307
    %v323 = vsel %vm85, %v310, %v313
    %v324 = vsel %vm85, %v316, %v319
    %325 = vmatprep.subr.mxu0 0.0
    %326 = vmatpush1.msra.mxu0 %v321
    %327 = vmatprep.subr.mxu0 0.0
    %328 = vmatpush1.msra.mxu0 %v322
    %329 = vmatprep.subr.mxu0 0.0
    %330 = vmatpush1.msra.mxu0 %v323
    %331 = vmatprep.subr.mxu0 0.0
    %332 = vmatpush1.msra.mxu0 %v324
    %333 = vmatprep.subr.mxu0 0.0
    %334 = vmatpush1.msra.mxu0 0.0
    %335 = vmatprep.subr.mxu0 0.0
    %336 = vmatpush1.msra.mxu0 0.0
    %337 = vmatprep.subr.mxu0 0.0
    %338 = vmatpush1.msra.mxu0 0.0
    %339 = vmatprep.subr.mxu0 0.0
    %340 = vmatpush1.msra.mxu0 0.0
    %341 = vmatprep.subr.mxu0 0.0
    %342 = vmatpush1.msra.mxu0 0.0
    %343 = vmatprep.subr.mxu0 0.0
    %344 = vmatpush1.msra.mxu0 0.0
    %345 = vmatprep.subr.mxu0 0.0
    %346 = vmatpush1.msra.mxu0 0.0
    %347 = vmatprep.subr.mxu0 0.0
    %348 = vmatpush1.msra.mxu0 0.0
    %349 = vmatprep.subr.mxu0 0.0
    %350 = vmatpush1.msra.mxu0 0.0
    %351 = vmatprep.subr.mxu0 0.0
    %352 = vmatpush1.msra.mxu0 0.0
    %353 = vmatprep.subr.mxu0 0.0
    %354 = vmatpush1.msra.mxu0 0.0
    %355 = vmatprep.subr.mxu0 0.0
    %356 = vmatpush1.msra.mxu0 0.0
    %357 = vmatprep.subr.mxu0 0.0
    %358 = vmatpush1.msra.mxu0 0.0
    %359 = vmatprep.subr.mxu0 0.0
    %360 = vmatpush1.msra.mxu0 0.0
    %361 = vmatprep.subr.mxu0 0.0
    %362 = vmatpush1.msra.mxu0 0.0
    %363 = vmatprep.subr.mxu0 0.0
    %364 = vmatpush1.msra.mxu0 0.0
    %365 = vmatprep.subr.mxu0 0.0
    %366 = vmatpush1.msra.mxu0 0.0
    %367 = vmatprep.subr.mxu0 0.0
    %368 = vmatpush1.msra.mxu0 0.0
    %369 = vmatprep.subr.mxu0 0.0
    %370 = vmatpush1.msra.mxu0 0.0
    %371 = vmatprep.subr.mxu0 0.0
    %372 = vmatpush1.msra.mxu0 0.0
    %373 = vmatprep.subr.mxu0 0.0
    %374 = vmatpush1.msra.mxu0 0.0
    %375 = vmatprep.subr.mxu0 0.0
    %376 = vmatpush1.msra.mxu0 0.0
    %377 = vmatprep.subr.mxu0 0.0
    %378 = vmatpush1.msra.mxu0 0.0
    %379 = vmatprep.subr.mxu0 0.0
    %380 = vmatpush1.msra.mxu0 0.0
    %381 = vmatprep.subr.mxu0 0.0
    %382 = vmatpush1.msra.mxu0 0.0
    %383 = vmatprep.subr.mxu0 0.0
    %384 = vmatpush1.msra.mxu0 0.0
    %385 = vmatprep.subr.mxu0 0.0
    %386 = vmatpush1.msra.mxu0 0.0
    %387 = vmatprep.subr.mxu0 0.0
    %388 = vmatpush1.msra.mxu0 0.0
    %389 = vmatprep.mubr.f32.mxu0 0.0
    %390 = vmatmul.mubr.f32.gmra.mrb[0].mxu0 %v101
    %v391 = vpop.f32.mrb[0].mxu0
    %v392 = vadd.f32 %v93, %v391
    %v393 = vpop.f32.mrb[0].mxu0
    %394 = vmatprep.mubr.f32.mxu0 0.0
    %395 = vmatmul.mubr.f32.gmra.mrb[0].mxu0 %v103
    %v396 = vpop.f32.mrb[0].mxu0
    %v397 = vadd.f32 %v98, %v396
    %v398 = vpop.f32.mrb[0].mxu0
    %399 = vdwg.mxu0
    %vm400 = vcmp.gt.f32.partialorder %v392, 0.0
    %vm401 = vcmp.gt.f32.partialorder %v397, 0.0
    %v402 = vmin.f32 %v392, 0.0
    %v403 = vmin.f32 %v397, 0.0
    %v404 = vmul.f32 %v402, 1.442695
    %v405 = vpow.pop %v404
    %v406 = vmul.f32 %v403, 1.442695
    %v407 = vpow.pop %v406
    %v408 = vsub.f32 %v405, 1.0
    %v409 = vsub.f32 %v407, 1.0
    %v410 = vsel %vm400, %v392, %v408
    %v411 = vsel %vm401, %v397, %v409
    %v413 = vsel %vm192, %v410, 0
    %v416 = vsel %vm192, %v411, 0
    %418 = vmatprep.subr.mxu0 0.0
    %419 = vmatpush1.xpose.msra.mxu0 %v413
    %420 = vmatprep.subr.mxu0 0.0
    %421 = vmatpush1.xpose.msra.mxu0 %v416
    %422 = vmatprep.subr.mxu0 0.0
    %423 = vmatpush1.xpose.msra.mxu0 0.0
    %424 = vmatprep.subr.mxu0 0.0
    %425 = vmatpush1.xpose.msra.mxu0 0.0
    %426 = vmatprep.subr.mxu0 0.0
    %427 = vmatpush1.xpose.msra.mxu0 0.0
    %428 = vmatprep.subr.mxu0 0.0
    %429 = vmatpush1.xpose.msra.mxu0 0.0
    %430 = vmatprep.subr.mxu0 0.0
    %431 = vmatpush1.xpose.msra.mxu0 0.0
    %432 = vmatprep.subr.mxu0 0.0
    %433 = vmatpush1.xpose.msra.mxu0 0.0
    %434 = vmatprep.subr.mxu0 0.0
    %435 = vmatpush1.xpose.msra.mxu0 0.0
    %436 = vmatprep.subr.mxu0 0.0
    %437 = vmatpush1.xpose.msra.mxu0 0.0
    %438 = vmatprep.subr.mxu0 0.0
    %439 = vmatpush1.xpose.msra.mxu0 0.0
    %440 = vmatprep.subr.mxu0 0.0
    %441 = vmatpush1.xpose.msra.mxu0 0.0
    %442 = vmatprep.subr.mxu0 0.0
    %443 = vmatpush1.xpose.msra.mxu0 0.0
    %444 = vmatprep.subr.mxu0 0.0
    %445 = vmatpush1.xpose.msra.mxu0 0.0
    %446 = vmatprep.subr.mxu0 0.0
    %447 = vmatpush1.xpose.msra.mxu0 0.0
    %448 = vmatprep.subr.mxu0 0.0
    %449 = vmatpush1.xpose.msra.mxu0 0.0
    %450 = vmatprep.subr.mxu0 0.0
    %451 = vmatpush1.xpose.msra.mxu0 0.0
    %452 = vmatprep.subr.mxu0 0.0
    %453 = vmatpush1.xpose.msra.mxu0 0.0
    %454 = vmatprep.subr.mxu0 0.0
    %455 = vmatpush1.xpose.msra.mxu0 0.0
    %456 = vmatprep.subr.mxu0 0.0
    %457 = vmatpush1.xpose.msra.mxu0 0.0
    %458 = vmatprep.subr.mxu0 0.0
    %459 = vmatpush1.xpose.msra.mxu0 0.0
    %460 = vmatprep.subr.mxu0 0.0
    %461 = vmatpush1.xpose.msra.mxu0 0.0
    %462 = vmatprep.subr.mxu0 0.0
    %463 = vmatpush1.xpose.msra.mxu0 0.0
    %464 = vmatprep.subr.mxu0 0.0
    %465 = vmatpush1.xpose.msra.mxu0 0.0
    %466 = vmatprep.subr.mxu0 0.0
    %467 = vmatpush1.xpose.msra.mxu0 0.0
    %468 = vmatprep.subr.mxu0 0.0
    %469 = vmatpush1.xpose.msra.mxu0 0.0
    %470 = vmatprep.subr.mxu0 0.0
    %471 = vmatpush1.xpose.msra.mxu0 0.0
    %472 = vmatprep.subr.mxu0 0.0
    %473 = vmatpush1.xpose.msra.mxu0 0.0
    %474 = vmatprep.subr.mxu0 0.0
    %475 = vmatpush1.xpose.msra.mxu0 0.0
    %476 = vmatprep.subr.mxu0 0.0
    %477 = vmatpush1.xpose.msra.mxu0 0.0
    %478 = vmatprep.subr.mxu0 0.0
    %479 = vmatpush1.xpose.msra.mxu0 0.0
    %480 = vmatprep.subr.mxu0 0.0
    %481 = vmatpush1.xpose.msra.mxu0 0.0
    %482 = vmatprep.mubr.f32.mxu0 0.0
    %483 = vmatmul.mubr.f32.gmra.mrb[0].mxu0 %v194
    %v484 = vpop.f32.mrb[0].mxu0
    %v485 = vadd.f32 0.0, %v484
    %v486 = vpop.f32.mrb[0].mxu0
    %487 = vmatprep.mubr.f32.mxu0 0.0
    %488 = vmatmul.mubr.f32.gmra.mrb[0].mxu0 %v197
    %v489 = vpop.f32.mrb[0].mxu0
    %v490 = vadd.f32 0.0, %v489
    %v491 = vpop.f32.mrb[0].mxu0
    %492 = vmatprep.mubr.f32.mxu0 0.0
    %493 = vmatmul.mubr.f32.gmra.mrb[0].mxu0 %v200
    %v494 = vpop.f32.mrb[0].mxu0
    %v495 = vadd.f32 0.0, %v494
    %v496 = vpop.f32.mrb[0].mxu0
    %497 = vmatprep.mubr.f32.mxu0 0.0
    %498 = vmatmul.mubr.f32.gmra.mrb[0].mxu0 %v203
    %v499 = vpop.f32.mrb[0].mxu0
    %v500 = vadd.f32 0.0, %v499
    %v501 = vpop.f32.mrb[0].mxu0
    %502 = vdwg.mxu0
    %vm507 = vcmask 1040384
    %v508 = vrot.slane %v485, 7
    %v509 = vrot.slane %v490, 7
    %v510 = vsel %vm507, %v508, %v509
    %v511 = vrot.slane %v495, 7
    %v512 = vsel %vm507, %v509, %v511
    %v513 = vrot.slane %v500, 7
    %v514 = vsel %vm507, %v511, %v513
    %v519 = vsel %vm507, %v293, %v508
    %v520 = vld [vmem:[#allocation6 + $0x20] sm:$0xf]
    %v521 = vld [vmem:[#allocation6 + $0x28] sm:$0xff]
    %v522 = vld [vmem:[#allocation6 + $0x30] sm:$0xff]
    %v523 = vld [vmem:[#allocation6 + $0x38] sm:$0xff]
    %v524 = vld [vmem:[#allocation6 + $0x40] sm:$0xff]
    %v525 = vld [vmem:[#allocation6 + $0x48] sm:$0xff]
    %v526 = vld [vmem:[#allocation6 + $0x50] sm:$0xff]
    %v527 = vld [vmem:[#allocation6 + $0x58] sm:$0x3]
    %v528 = vld [vmem:[#allocation6 + $0xa0] sm:$0xff]
    %v529 = vld [vmem:[#allocation6 + $0xa8] sm:$0xff]
    %v530 = vld [vmem:[#allocation6 + $0xb0] sm:$0xff]
    %v531 = vld [vmem:[#allocation6 + $0xb8] sm:$0xff]
    %v532 = vld [vmem:[#allocation6 + $0xc0] sm:$0xff]
    %v533 = vld [vmem:[#allocation6 + $0xc8] sm:$0xff]
    %v534 = vld [vmem:[#allocation6 + $0xd0] sm:$0xff]
    %v535 = vld [vmem:[#allocation6 + $0xd8] sm:$0xff]
    %v536 = vld [vmem:[#allocation6 + $0xe0] sm:$0xff]
    %v537 = vld [vmem:[#allocation6 + $0xe8] sm:$0xff]
    %v538 = vld [vmem:[#allocation6 + $0xf0] sm:$0xff]
    %vm539 = vcmask 130048
    %v540 = vsel %vm539, %v278, 0.0
    %541 = vadd.xlane.f32.xlu0 %v540
    %v542 = vpop.xlane.xlu0 %541
    %v543 = vsel %vm539, %v283, 0.0
    %544 = vadd.xlane.f32.xlu0 %v543
    %v545 = vpop.xlane.xlu0 %544
    %v546 = vsel %vm539, %v288, 0.0
    %547 = vadd.xlane.f32.xlu0 %v546
    %v548 = vpop.xlane.xlu0 %547
    %v549 = vsel %vm539, %v519, 0.0
    %550 = vadd.xlane.f32.xlu0 %v549
    %v551 = vpop.xlane.xlu0 %550
    %v552 = vsel %vm539, %v510, 0.0
    %553 = vadd.xlane.f32.xlu0 %v552
    %v554 = vpop.xlane.xlu0 %553
    %v555 = vsel %vm539, %v512, 0.0
    %556 = vadd.xlane.f32.xlu0 %v555
    %v557 = vpop.xlane.xlu0 %556
    %vm558 = vcmask 123904
    %v559 = vsel %vm558, %v514, 0.0
    %560 = vadd.xlane.f32.xlu0 %v559
    %v561 = vpop.xlane.xlu0 %560
    %v562 = vrcp.pop 16.0
    %v563 = vmul.f32 %v542, %v562
    %v564 = vmul.f32 %v545, %v562
    %v565 = vmul.f32 %v548, %v562
    %v566 = vmul.f32 %v551, %v562
    %v567 = vmul.f32 %v554, %v562
    %v568 = vmul.f32 %v557, %v562
    %v569 = vmul.f32 %v561, %v562
    %v570 = vmul.f32 %v278, %v278
    %v571 = vmul.f32 %v283, %v283
    %v572 = vmul.f32 %v288, %v288
    %v573 = vmul.f32 %v519, %v519
    %v574 = vmul.f32 %v510, %v510
    %v575 = vmul.f32 %v512, %v512
    %v576 = vmul.f32 %v514, %v514
    %v577 = vsel %vm539, %v570, 0.0
    %578 = vadd.xlane.f32.xlu0 %v577
    %v579 = vpop.xlane.xlu0 %578
    %v580 = vsel %vm539, %v571, 0.0
    %581 = vadd.xlane.f32.xlu0 %v580
    %v582 = vpop.xlane.xlu0 %581
    %v583 = vsel %vm539, %v572, 0.0
    %584 = vadd.xlane.f32.xlu0 %v583
    %v585 = vpop.xlane.xlu0 %584
    %v586 = vsel %vm539, %v573, 0.0
    %587 = vadd.xlane.f32.xlu0 %v586
    %v588 = vpop.xlane.xlu0 %587
    %v589 = vsel %vm539, %v574, 0.0
    %590 = vadd.xlane.f32.xlu0 %v589
    %v591 = vpop.xlane.xlu0 %590
    %v592 = vsel %vm539, %v575, 0.0
    %593 = vadd.xlane.f32.xlu0 %v592
    %v594 = vpop.xlane.xlu0 %593
    %v595 = vsel %vm558, %v576, 0.0
    %596 = vadd.xlane.f32.xlu0 %v595
    %v597 = vpop.xlane.xlu0 %596
    %v598 = vmul.f32 %v579, %v562
    %v599 = vmul.f32 %v582, %v562
    %v600 = vmul.f32 %v585, %v562
    %v601 = vmul.f32 %v588, %v562
    %v602 = vmul.f32 %v591, %v562
    %v603 = vmul.f32 %v594, %v562
    %v604 = vmul.f32 %v597, %v562
    %v605 = vsub.f32 %v278, %v563
    %v606 = vsub.f32 %v283, %v564
    %v607 = vsub.f32 %v288, %v565
    %v608 = vsub.f32 %v519, %v566
    %v609 = vsub.f32 %v510, %v567
    %v610 = vsub.f32 %v512, %v568
    %v611 = vsub.f32 %v514, %v569
    %v612 = vmul.f32 %v563, %v563
    %v613 = vmul.f32 %v564, %v564
    %v614 = vmul.f32 %v565, %v565
    %v615 = vmul.f32 %v566, %v566
    %v616 = vmul.f32 %v567, %v567
    %v617 = vmul.f32 %v568, %v568
    %v618 = vmul.f32 %v569, %v569
    %v619 = vsub.f32 %v598, %v612
    %v620 = vsub.f32 %v599, %v613
    %v621 = vsub.f32 %v600, %v614
    %v622 = vsub.f32 %v601, %v615
    %v623 = vsub.f32 %v602, %v616
    %v624 = vsub.f32 %v603, %v617
    %v625 = vsub.f32 %v604, %v618
    %v626 = vadd.f32 %v619, 1e-05
    %v627 = vadd.f32 %v620, 1e-05
    %v628 = vadd.f32 %v621, 1e-05
    %v629 = vadd.f32 %v622, 1e-05
    %v630 = vadd.f32 %v623, 1e-05
    %v631 = vadd.f32 %v624, 1e-05
    %v632 = vadd.f32 %v625, 1e-05
    %v633 = vrsqrt.pop %v626
    %v634 = vrsqrt.pop %v627
    %v635 = vrsqrt.pop %v628
    %v636 = vrsqrt.pop %v629
    %v637 = vrsqrt.pop %v630
    %v638 = vrsqrt.pop %v631
    %v639 = vrsqrt.pop %v632
    %v640 = vmul.f32 %v605, %v633
    %v641 = vmul.f32 %v606, %v634
    %v642 = vmul.f32 %v607, %v635
    %v643 = vmul.f32 %v608, %v636
    %v644 = vmul.f32 %v609, %v637
    %v645 = vmul.f32 %v610, %v638
    %v646 = vmul.f32 %v611, %v639
    %v647 = vlaneseq
    %v648 = vshrl.u32 %v647, 7
    %v649 = vsub.s32 0, %v648
    %v650 = vrot.slane %v528, %v649
    %v651 = vmul.f32 %v640, %v650
    %v652 = vmul.f32 %v641, %v650
    %v653 = vmul.f32 %v642, %v650
    %v654 = vmul.f32 %v643, %v650
    %v655 = vmul.f32 %v644, %v650
    %v656 = vmul.f32 %v645, %v650
    %v657 = vmul.f32 %v646, %v650
    %v658 = vlaneseq
    %v659 = vshrl.u32 %v658, 7
    %v660 = vsub.s32 1, %v659
    %v661 = vrot.slane %v528, %v660
    %v662 = vadd.f32 %v651, %v661
    %v663 = vadd.f32 %v652, %v661
    %v664 = vadd.f32 %v653, %v661
    %v665 = vadd.f32 %v654, %v661
    %v666 = vadd.f32 %v655, %v661
    %v667 = vadd.f32 %v656, %v661
    %v668 = vadd.f32 %v657, %v661
    %v669 = vlaneseq
    %v670 = vshrl.u32 %v669, 7
    %v671 = vsub.s32 2, %v670
    %v672 = vrot.slane %v528, %v671
    %v674 = vsel %vm539, %v662, 0
    %v677 = vsel %vm539, %v663, 0
    %v680 = vsel %vm539, %v664, 0
    %v683 = vsel %vm539, %v665, 0
    %v686 = vsel %vm539, %v666, 0
    %v689 = vsel %vm539, %v667, 0
    %v692 = vsel %vm539, %v668, 0
    %694 = vmatprep.subr.mxu0 0.0
    %695 = vmatpush1.msra.mxu0 %v529
    %696 = vmatprep.subr.mxu0 0.0
    %697 = vmatpush1.msra.mxu0 %v530
    %698 = vmatprep.subr.mxu0 0.0
    %699 = vmatpush1.msra.mxu0 0.0
    %700 = vmatprep.subr.mxu0 0.0
    %701 = vmatpush1.msra.mxu0 0.0
    %702 = vmatprep.subr.mxu0 0.0
    %703 = vmatpush1.msra.mxu0 0.0
    %704 = vmatprep.subr.mxu0 0.0
    %705 = vmatpush1.msra.mxu0 0.0
    %706 = vmatprep.subr.mxu0 0.0
    %707 = vmatpush1.msra.mxu0 0.0
    %708 = vmatprep.subr.mxu0 0.0
    %709 = vmatpush1.msra.mxu0 0.0
    %710 = vmatprep.subr.mxu0 0.0
    %711 = vmatpush1.msra.mxu0 0.0
    %712 = vmatprep.subr.mxu0 0.0
    %713 = vmatpush1.msra.mxu0 0.0
    %714 = vmatprep.subr.mxu0 0.0
    %715 = vmatpush1.msra.mxu0 0.0
    %716 = vmatprep.subr.mxu0 0.0
    %717 = vmatpush1.msra.mxu0 0.0
    %718 = vmatprep.subr.mxu0 0.0
    %719 = vmatpush1.msra.mxu0 0.0
    %720 = vmatprep.subr.mxu0 0.0
    %721 = vmatpush1.msra.mxu0 0.0
    %722 = vmatprep.subr.mxu0 0.0
    %723 = vmatpush1.msra.mxu0 0.0
    %724 = vmatprep.subr.mxu0 0.0
    %725 = vmatpush1.msra.mxu0 0.0
    %726 = vmatprep.subr.mxu0 0.0
    %727 = vmatpush1.msra.mxu0 0.0
    %728 = vmatprep.subr.mxu0 0.0
    %729 = vmatpush1.msra.mxu0 0.0
    %730 = vmatprep.subr.mxu0 0.0
    %731 = vmatpush1.msra.mxu0 0.0
    %732 = vmatprep.subr.mxu0 0.0
    %733 = vmatpush1.msra.mxu0 0.0
    %734 = vmatprep.subr.mxu0 0.0
    %735 = vmatpush1.msra.mxu0 0.0
    %736 = vmatprep.subr.mxu0 0.0
    %737 = vmatpush1.msra.mxu0 0.0
    %738 = vmatprep.subr.mxu0 0.0
    %739 = vmatpush1.msra.mxu0 0.0
    %740 = vmatprep.subr.mxu0 0.0
    %741 = vmatpush1.msra.mxu0 0.0
    %742 = vmatprep.subr.mxu0 0.0
    %743 = vmatpush1.msra.mxu0 0.0
    %744 = vmatprep.subr.mxu0 0.0
    %745 = vmatpush1.msra.mxu0 0.0
    %746 = vmatprep.subr.mxu0 0.0
    %747 = vmatpush1.msra.mxu0 0.0
    %748 = vmatprep.subr.mxu0 0.0
    %749 = vmatpush1.msra.mxu0 0.0
    %750 = vmatprep.subr.mxu0 0.0
    %751 = vmatpush1.msra.mxu0 0.0
    %752 = vmatprep.subr.mxu0 0.0
    %753 = vmatpush1.msra.mxu0 0.0
    %754 = vmatprep.subr.mxu0 0.0
    %755 = vmatpush1.msra.mxu0 0.0
    %756 = vmatprep.subr.mxu0 0.0
    %757 = vmatpush1.msra.mxu0 0.0
    %758 = vmatprep.mubr.f32.mxu0 0.0
    %759 = vmatmul.mubr.f32.gmra.mrb[0].mxu0 %v674
    %v760 = vpop.f32.mrb[0].mxu0
    %v761 = vadd.f32 %v672, %v760
    %v762 = vpop.f32.mrb[0].mxu0
    %763 = vmatprep.mubr.f32.mxu0 0.0
    %764 = vmatmul.mubr.f32.gmra.mrb[0].mxu0 %v677
    %v765 = vpop.f32.mrb[0].mxu0
    %v766 = vadd.f32 %v672, %v765
    %v767 = vpop.f32.mrb[0].mxu0
    %768 = vmatprep.mubr.f32.mxu0 0.0
    %769 = vmatmul.mubr.f32.gmra.mrb[0].mxu0 %v680
    %v770 = vpop.f32.mrb[0].mxu0
    %v771 = vadd.f32 %v672, %v770
    %v772 = vpop.f32.mrb[0].mxu0
    %773 = vmatprep.mubr.f32.mxu0 0.0
    %774 = vmatmul.mubr.f32.gmra.mrb[0].mxu0 %v683
    %v775 = vpop.f32.mrb[0].mxu0
    %v776 = vadd.f32 %v672, %v775
    %v777 = vpop.f32.mrb[0].mxu0
    %778 = vmatprep.mubr.f32.mxu0 0.0
    %779 = vmatmul.mubr.f32.gmra.mrb[0].mxu0 %v686
    %v780 = vpop.f32.mrb[0].mxu0
    %v781 = vadd.f32 %v672, %v780
    %v782 = vpop.f32.mrb[0].mxu0
    %783 = vmatprep.mubr.f32.mxu0 0.0
    %784 = vmatmul.mubr.f32.gmra.mrb[0].mxu0 %v689
    %v785 = vpop.f32.mrb[0].mxu0
    %v786 = vadd.f32 %v672, %v785
    %v787 = vpop.f32.mrb[0].mxu0
    %788 = vmatprep.mubr.f32.mxu0 0.0
    %789 = vmatmul.mubr.f32.gmra.mrb[0].mxu0 %v692
    %v790 = vpop.f32.mrb[0].mxu0
    %v791 = vadd.f32 %v672, %v790
    %v792 = vpop.f32.mrb[0].mxu0
    %793 = vdwg.mxu0
    %v794 = vlaneseq
    %v795 = vshrl.u32 %v794, 7
    %v796 = vsub.s32 0, %v795
    %v797 = vrot.slane %v520, %v796
    %799 = vrot.lane.b32.xlu0 %v797, 16
    %v800 = vpop.permute.xlu0 %799
    %v802 = vmul.f32 %v761, %v800
    %v803 = vmul.f32 %v766, %v800
    %v804 = vmul.f32 %v771, %v800
    %v805 = vmul.f32 %v776, %v800
    %v806 = vmul.f32 %v781, %v800
    %v807 = vmul.f32 %v786, %v800
    %v808 = vmul.f32 %v791, %v800
    %809 = vrot.lane.b32.xlu0 %v797, 32
    %v810 = vpop.permute.xlu0 %809
    %v812 = vmul.f32 %v761, %v810
    %v813 = vmul.f32 %v766, %v810
    %v814 = vmul.f32 %v771, %v810
    %v815 = vmul.f32 %v776, %v810
    %v816 = vmul.f32 %v781, %v810
    %v817 = vmul.f32 %v786, %v810
    %v818 = vmul.f32 %v791, %v810
    %826 = vrot.lane.b32.xlu0 %v802, 112
    %v827 = vpop.permute.xlu0 %826
    %828 = vrot.lane.b32.xlu0 %v803, 112
    %v829 = vpop.permute.xlu0 %828
    %830 = vrot.lane.b32.xlu0 %v804, 112
    %v831 = vpop.permute.xlu0 %830
    %832 = vrot.lane.b32.xlu0 %v805, 112
    %v833 = vpop.permute.xlu0 %832
    %834 = vrot.lane.b32.xlu0 %v806, 112
    %v835 = vpop.permute.xlu0 %834
    %836 = vrot.lane.b32.xlu0 %v807, 112
    %v837 = vpop.permute.xlu0 %836
    %838 = vrot.lane.b32.xlu0 %v808, 112
    %v839 = vpop.permute.xlu0 %838
    %v841 = vsel %vm539, %v761, 0
    %v844 = vsel %vm539, %v766, 0
    %v847 = vsel %vm539, %v771, 0
    %v850 = vsel %vm539, %v776, 0
    %v853 = vsel %vm539, %v781, 0
    %v856 = vsel %vm539, %v786, 0
    %v859 = vsel %vm539, %v791, 0
    %v861 = vsel %vm539, %v827, 0
    %v863 = vsel %vm539, %v829, 0
    %v865 = vsel %vm539, %v831, 0
    %v867 = vsel %vm539, %v833, 0
    %v869 = vsel %vm539, %v835, 0
    %v871 = vsel %vm539, %v837, 0
    %v873 = vsel %vm539, %v839, 0
    %875 = vmatprep.subr.mxu0 0.0
    %876 = vmatpush1.xpose.msra.mxu0 %v861
    %877 = vmatprep.subr.mxu0 0.0
    %878 = vmatpush1.xpose.msra.mxu0 %v863
    %879 = vmatprep.subr.mxu0 0.0
    %880 = vmatpush1.xpose.msra.mxu0 %v865
    %881 = vmatprep.subr.mxu0 0.0
    %882 = vmatpush1.xpose.msra.mxu0 %v867
    %883 = vmatprep.subr.mxu0 0.0
    %884 = vmatpush1.xpose.msra.mxu0 %v869
    %885 = vmatprep.subr.mxu0 0.0
    %886 = vmatpush1.xpose.msra.mxu0 %v871
    %887 = vmatprep.subr.mxu0 0.0
    %888 = vmatpush1.xpose.msra.mxu0 %v873
    %889 = vmatprep.subr.mxu0 0.0
    %890 = vmatpush1.xpose.msra.mxu0 0.0
    %891 = vmatprep.subr.mxu0 0.0
    %892 = vmatpush1.xpose.msra.mxu0 0.0
    %893 = vmatprep.subr.mxu0 0.0
    %894 = vmatpush1.xpose.msra.mxu0 0.0
    %895 = vmatprep.subr.mxu0 0.0
    %896 = vmatpush1.xpose.msra.mxu0 0.0
    %897 = vmatprep.subr.mxu0 0.0
    %898 = vmatpush1.xpose.msra.mxu0 0.0
    %899 = vmatprep.subr.mxu0 0.0
    %900 = vmatpush1.xpose.msra.mxu0 0.0
    %901 = vmatprep.subr.mxu0 0.0
    %902 = vmatpush1.xpose.msra.mxu0 0.0
    %903 = vmatprep.subr.mxu0 0.0
    %904 = vmatpush1.xpose.msra.mxu0 0.0
    %905 = vmatprep.subr.mxu0 0.0
    %906 = vmatpush1.xpose.msra.mxu0 0.0
    %907 = vmatprep.subr.mxu0 0.0
    %908 = vmatpush1.xpose.msra.mxu0 0.0
    %909 = vmatprep.subr.mxu0 0.0
    %910 = vmatpush1.xpose.msra.mxu0 0.0
    %911 = vmatprep.subr.mxu0 0.0
    %912 = vmatpush1.xpose.msra.mxu0 0.0
    %913 = vmatprep.subr.mxu0 0.0
    %914 = vmatpush1.xpose.msra.mxu0 0.0
    %915 = vmatprep.subr.mxu0 0.0
    %916 = vmatpush1.xpose.msra.mxu0 0.0
    %917 = vmatprep.subr.mxu0 0.0
    %918 = vmatpush1.xpose.msra.mxu0 0.0
    %919 = vmatprep.subr.mxu0 0.0
    %920 = vmatpush1.xpose.msra.mxu0 0.0
    %921 = vmatprep.subr.mxu0 0.0
    %922 = vmatpush1.xpose.msra.mxu0 0.0
    %923 = vmatprep.subr.mxu0 0.0
    %924 = vmatpush1.xpose.msra.mxu0 0.0
    %925 = vmatprep.subr.mxu0 0.0
    %926 = vmatpush1.xpose.msra.mxu0 0.0
    %927 = vmatprep.subr.mxu0 0.0
    %928 = vmatpush1.xpose.msra.mxu0 0.0
    %929 = vmatprep.subr.mxu0 0.0
    %930 = vmatpush1.xpose.msra.mxu0 0.0
    %931 = vmatprep.subr.mxu0 0.0
    %932 = vmatpush1.xpose.msra.mxu0 0.0
    %933 = vmatprep.subr.mxu0 0.0
    %934 = vmatpush1.xpose.msra.mxu0 0.0
    %935 = vmatprep.subr.mxu0 0.0
    %936 = vmatpush1.xpose.msra.mxu0 0.0
    %937 = vmatprep.subr.mxu0 0.0
    %938 = vmatpush1.xpose.msra.mxu0 0.0
    %939 = vmatprep.mubr.f32.mxu0 0.0
    %940 = vmatmul.mubr.f32.gmra.mrb[0].mxu0 %v841
    %v941 = vpop.f32.mrb[0].mxu0
    %v942 = vadd.f32 0.0, %v941
    %v943 = vpop.f32.mrb[0].mxu0
    %944 = vmatprep.mubr.f32.mxu0 0.0
    %945 = vmatmul.mubr.f32.gmra.mrb[0].mxu0 %v844
    %v946 = vpop.f32.mrb[0].mxu0
    %v947 = vadd.f32 0.0, %v946
    %v948 = vpop.f32.mrb[0].mxu0
    %949 = vmatprep.mubr.f32.mxu0 0.0
    %950 = vmatmul.mubr.f32.gmra.mrb[0].mxu0 %v847
    %v951 = vpop.f32.mrb[0].mxu0
    %v952 = vadd.f32 0.0, %v951
    %v953 = vpop.f32.mrb[0].mxu0
    %954 = vmatprep.mubr.f32.mxu0 0.0
    %955 = vmatmul.mubr.f32.gmra.mrb[0].mxu0 %v850
    %v956 = vpop.f32.mrb[0].mxu0
    %v957 = vadd.f32 0.0, %v956
    %v958 = vpop.f32.mrb[0].mxu0
    %959 = vmatprep.mubr.f32.mxu0 0.0
    %960 = vmatmul.mubr.f32.gmra.mrb[0].mxu0 %v853
    %v961 = vpop.f32.mrb[0].mxu0
    %v962 = vadd.f32 0.0, %v961
    %v963 = vpop.f32.mrb[0].mxu0
    %964 = vmatprep.mubr.f32.mxu0 0.0
    %965 = vmatmul.mubr.f32.gmra.mrb[0].mxu0 %v856
    %v966 = vpop.f32.mrb[0].mxu0
    %v967 = vadd.f32 0.0, %v966
    %v968 = vpop.f32.mrb[0].mxu0
    %969 = vmatprep.mubr.f32.mxu0 0.0
    %970 = vmatmul.mubr.f32.gmra.mrb[0].mxu0 %v859
    %v971 = vpop.f32.mrb[0].mxu0
    %v972 = vadd.f32 0.0, %v971
    %v973 = vpop.f32.mrb[0].mxu0
    %974 = vdwg.mxu0
    %vm975 = vcmask 408576
    %v976 = vsel %vm975, %v942, -inf
    %977 = vmax.xlane.f32.xlu0 %v976
    %v978 = vpop.xlane.xlu0 %977
    %v979 = vsel %vm975, %v947, -inf
    %980 = vmax.xlane.f32.xlu0 %v979
    %v981 = vpop.xlane.xlu0 %980
    %v982 = vsel %vm975, %v952, -inf
    %983 = vmax.xlane.f32.xlu0 %v982
    %v984 = vpop.xlane.xlu0 %983
    %v985 = vsel %vm975, %v957, -inf
    %986 = vmax.xlane.f32.xlu0 %v985
    %v987 = vpop.xlane.xlu0 %986
    %v988 = vsel %vm975, %v962, -inf
    %989 = vmax.xlane.f32.xlu0 %v988
    %v990 = vpop.xlane.xlu0 %989
    %v991 = vsel %vm975, %v967, -inf
    %992 = vmax.xlane.f32.xlu0 %v991
    %v993 = vpop.xlane.xlu0 %992
    %vm994 = vcmask 402432
    %v995 = vsel %vm994, %v972, -inf
    %996 = vmax.xlane.f32.xlu0 %v995
    %v997 = vpop.xlane.xlu0 %996
    %v998 = vsub.f32 %v942, %v978
    %v999 = vsub.f32 %v947, %v981
    %v1000 = vsub.f32 %v952, %v984
    %v1001 = vsub.f32 %v957, %v987
    %v1002 = vsub.f32 %v962, %v990
    %v1003 = vsub.f32 %v967, %v993
    %v1004 = vsub.f32 %v972, %v997
    %v1005 = vmul.f32 %v998, 1.442695
    %v1006 = vpow.pop %v1005
    %v1007 = vmul.f32 %v999, 1.442695
    %v1008 = vpow.pop %v1007
    %v1009 = vmul.f32 %v1000, 1.442695
    %v1010 = vpow.pop %v1009
    %v1011 = vmul.f32 %v1001, 1.442695
    %v1012 = vpow.pop %v1011
    %v1013 = vmul.f32 %v1002, 1.442695
    %v1014 = vpow.pop %v1013
    %v1015 = vmul.f32 %v1003, 1.442695
    %v1016 = vpow.pop %v1015
    %v1017 = vmul.f32 %v1004, 1.442695
    %v1018 = vpow.pop %v1017
    %v1019 = vmul.f32 %v1006, %v521
    %v1020 = vmul.f32 %v1008, %v522
    %v1021 = vmul.f32 %v1010, %v523
    %v1022 = vmul.f32 %v1012, %v524
    %v1023 = vmul.f32 %v1014, %v525
    %v1024 = vmul.f32 %v1016, %v526
    %v1025 = vmul.f32 %v1018, %v527
    %v1026 = vsel %vm975, %v1019, 0.0
    %1027 = vadd.xlane.f32.xlu0 %v1026
    %v1028 = vpop.xlane.xlu0 %1027
    %v1029 = vsel %vm975, %v1020, 0.0
    %1030 = vadd.xlane.f32.xlu0 %v1029
    %v1031 = vpop.xlane.xlu0 %1030
    %v1032 = vsel %vm975, %v1021, 0.0
    %1033 = vadd.xlane.f32.xlu0 %v1032
    %v1034 = vpop.xlane.xlu0 %1033
    %v1035 = vsel %vm975, %v1022, 0.0
    %1036 = vadd.xlane.f32.xlu0 %v1035
    %v1037 = vpop.xlane.xlu0 %1036
    %v1038 = vsel %vm975, %v1023, 0.0
    %1039 = vadd.xlane.f32.xlu0 %v1038
    %v1040 = vpop.xlane.xlu0 %1039
    %v1041 = vsel %vm975, %v1024, 0.0
    %1042 = vadd.xlane.f32.xlu0 %v1041
    %v1043 = vpop.xlane.xlu0 %1042
    %v1044 = vsel %vm994, %v1025, 0.0
    %1045 = vadd.xlane.f32.xlu0 %v1044
    %v1046 = vpop.xlane.xlu0 %1045
    %v1047 = vrcp.pop %v1028
    %v1048 = vrcp.pop %v1031
    %v1049 = vrcp.pop %v1034
    %v1050 = vrcp.pop %v1037
    %v1051 = vrcp.pop %v1040
    %v1052 = vrcp.pop %v1043
    %v1053 = vrcp.pop %v1046
    %v1054 = vmul.f32 %v1019, %v1047
    %v1055 = vmul.f32 %v1020, %v1048
    %v1056 = vmul.f32 %v1021, %v1049
    %v1057 = vmul.f32 %v1022, %v1050
    %v1058 = vmul.f32 %v1023, %v1051
    %v1059 = vmul.f32 %v1024, %v1052
    %v1060 = vmul.f32 %v1025, %v1053
    %v1061 = vlaneseq
    %v1062 = vshrl.u32 %v1061, 7
    %v1063 = vsub.s32 1, %v1062
    %v1064 = vrot.slane %v520, %v1063
    %1066 = vrot.lane.b32.xlu0 %v1064, 16
    %v1067 = vpop.permute.xlu0 %1066
    %v1069 = vmul.f32 %v761, %v1067
    %v1070 = vmul.f32 %v766, %v1067
    %v1071 = vmul.f32 %v771, %v1067
    %v1072 = vmul.f32 %v776, %v1067
    %v1073 = vmul.f32 %v781, %v1067
    %v1074 = vmul.f32 %v786, %v1067
    %v1075 = vmul.f32 %v791, %v1067
    %1076 = vrot.lane.b32.xlu0 %v1064, 32
    %v1077 = vpop.permute.xlu0 %1076
    %v1079 = vmul.f32 %v761, %v1077
    %v1080 = vmul.f32 %v766, %v1077
    %v1081 = vmul.f32 %v771, %v1077
    %v1082 = vmul.f32 %v776, %v1077
    %v1083 = vmul.f32 %v781, %v1077
    %v1084 = vmul.f32 %v786, %v1077
    %v1085 = vmul.f32 %v791, %v1077
    %1093 = vrot.lane.b32.xlu0 %v1069, 112
    %v1094 = vpop.permute.xlu0 %1093
    %1095 = vrot.lane.b32.xlu0 %v1070, 112
    %v1096 = vpop.permute.xlu0 %1095
    %1097 = vrot.lane.b32.xlu0 %v1071, 112
    %v1098 = vpop.permute.xlu0 %1097
    %1099 = vrot.lane.b32.xlu0 %v1072, 112
    %v1100 = vpop.permute.xlu0 %1099
    %1101 = vrot.lane.b32.xlu0 %v1073, 112
    %v1102 = vpop.permute.xlu0 %1101
    %1103 = vrot.lane.b32.xlu0 %v1074, 112
    %v1104 = vpop.permute.xlu0 %1103
    %1105 = vrot.lane.b32.xlu0 %v1075, 112
    %v1106 = vpop.permute.xlu0 %1105
    %v1107 = vsel %vm539, %v1094, 0
    %v1109 = vsel %vm539, %v1096, 0
    %v1111 = vsel %vm539, %v1098, 0
    %v1113 = vsel %vm539, %v1100, 0
    %v1115 = vsel %vm539, %v1102, 0
    %v1117 = vsel %vm539, %v1104, 0
    %v1119 = vsel %vm539, %v1106, 0
    %1121 = vmatprep.subr.mxu0 0.0
    %1122 = vmatpush1.xpose.msra.mxu0 %v1107
    %1123 = vmatprep.subr.mxu0 0.0
    %1124 = vmatpush1.xpose.msra.mxu0 %v1109
    %1125 = vmatprep.subr.mxu0 0.0
    %1126 = vmatpush1.xpose.msra.mxu0 %v1111
    %1127 = vmatprep.subr.mxu0 0.0
    %1128 = vmatpush1.xpose.msra.mxu0 %v1113
    %1129 = vmatprep.subr.mxu0 0.0
    %1130 = vmatpush1.xpose.msra.mxu0 %v1115
    %1131 = vmatprep.subr.mxu0 0.0
    %1132 = vmatpush1.xpose.msra.mxu0 %v1117
    %1133 = vmatprep.subr.mxu0 0.0
    %1134 = vmatpush1.xpose.msra.mxu0 %v1119
    %1135 = vmatprep.subr.mxu0 0.0
    %1136 = vmatpush1.xpose.msra.mxu0 0.0
    %1137 = vmatprep.subr.mxu0 0.0
    %1138 = vmatpush1.xpose.msra.mxu0 0.0
    %1139 = vmatprep.subr.mxu0 0.0
    %1140 = vmatpush1.xpose.msra.mxu0 0.0
    %1141 = vmatprep.subr.mxu0 0.0
    %1142 = vmatpush1.xpose.msra.mxu0 0.0
    %1143 = vmatprep.subr.mxu0 0.0
    %1144 = vmatpush1.xpose.msra.mxu0 0.0
    %1145 = vmatprep.subr.mxu0 0.0
    %1146 = vmatpush1.xpose.msra.mxu0 0.0
    %1147 = vmatprep.subr.mxu0 0.0
    %1148 = vmatpush1.xpose.msra.mxu0 0.0
    %1149 = vmatprep.subr.mxu0 0.0
    %1150 = vmatpush1.xpose.msra.mxu0 0.0
    %1151 = vmatprep.subr.mxu0 0.0
    %1152 = vmatpush1.xpose.msra.mxu0 0.0
    %1153 = vmatprep.subr.mxu0 0.0
    %1154 = vmatpush1.xpose.msra.mxu0 0.0
    %1155 = vmatprep.subr.mxu0 0.0
    %1156 = vmatpush1.xpose.msra.mxu0 0.0
    %1157 = vmatprep.subr.mxu0 0.0
    %1158 = vmatpush1.xpose.msra.mxu0 0.0
    %1159 = vmatprep.subr.mxu0 0.0
    %1160 = vmatpush1.xpose.msra.mxu0 0.0
    %1161 = vmatprep.subr.mxu0 0.0
    %1162 = vmatpush1.xpose.msra.mxu0 0.0
    %1163 = vmatprep.subr.mxu0 0.0
    %1164 = vmatpush1.xpose.msra.mxu0 0.0
    %1165 = vmatprep.subr.mxu0 0.0
    %1166 = vmatpush1.xpose.msra.mxu0 0.0
    %1167 = vmatprep.subr.mxu0 0.0
    %1168 = vmatpush1.xpose.msra.mxu0 0.0
    %1169 = vmatprep.subr.mxu0 0.0
    %1170 = vmatpush1.xpose.msra.mxu0 0.0
    %1171 = vmatprep.subr.mxu0 0.0
    %1172 = vmatpush1.xpose.msra.mxu0 0.0
    %1173 = vmatprep.subr.mxu0 0.0
    %1174 = vmatpush1.xpose.msra.mxu0 0.0
    %1175 = vmatprep.subr.mxu0 0.0
    %1176 = vmatpush1.xpose.msra.mxu0 0.0
    %1177 = vmatprep.subr.mxu0 0.0
    %1178 = vmatpush1.xpose.msra.mxu0 0.0
    %1179 = vmatprep.subr.mxu0 0.0
    %1180 = vmatpush1.xpose.msra.mxu0 0.0
    %1181 = vmatprep.subr.mxu0 0.0
    %1182 = vmatpush1.xpose.msra.mxu0 0.0
    %1183 = vmatprep.subr.mxu0 0.0
    %1184 = vmatpush1.xpose.msra.mxu0 0.0
    %1185 = vmatprep.mubr.f32.mxu0 0.0
    %1186 = vmatmul.mubr.f32.gmra.mrb[0].mxu0 %v841
    %v1187 = vpop.f32.mrb[0].mxu0
    %v1188 = vadd.f32 0.0, %v1187
    %v1189 = vpop.f32.mrb[0].mxu0
    %1190 = vmatprep.mubr.f32.mxu0 0.0
    %1191 = vmatmul.mubr.f32.gmra.mrb[0].mxu0 %v844
    %v1192 = vpop.f32.mrb[0].mxu0
    %v1193 = vadd.f32 0.0, %v1192
    %v1194 = vpop.f32.mrb[0].mxu0
    %1195 = vmatprep.mubr.f32.mxu0 0.0
    %1196 = vmatmul.mubr.f32.gmra.mrb[0].mxu0 %v847
    %v1197 = vpop.f32.mrb[0].mxu0
    %v1198 = vadd.f32 0.0, %v1197
    %v1199 = vpop.f32.mrb[0].mxu0
    %1200 = vmatprep.mubr.f32.mxu0 0.0
    %1201 = vmatmul.mubr.f32.gmra.mrb[0].mxu0 %v850
    %v1202 = vpop.f32.mrb[0].mxu0
    %v1203 = vadd.f32 0.0, %v1202
    %v1204 = vpop.f32.mrb[0].mxu0
    %1205 = vmatprep.mubr.f32.mxu0 0.0
    %1206 = vmatmul.mubr.f32.gmra.mrb[0].mxu0 %v853
    %v1207 = vpop.f32.mrb[0].mxu0
    %v1208 = vadd.f32 0.0, %v1207
    %v1209 = vpop.f32.mrb[0].mxu0
    %1210 = vmatprep.mubr.f32.mxu0 0.0
    %1211 = vmatmul.mubr.f32.gmra.mrb[0].mxu0 %v856
    %v1212 = vpop.f32.mrb[0].mxu0
    %v1213 = vadd.f32 0.0, %v1212
    %v1214 = vpop.f32.mrb[0].mxu0
    %1215 = vmatprep.mubr.f32.mxu0 0.0
    %1216 = vmatmul.mubr.f32.gmra.mrb[0].mxu0 %v859
    %v1217 = vpop.f32.mrb[0].mxu0
    %v1218 = vadd.f32 0.0, %v1217
    %v1219 = vpop.f32.mrb[0].mxu0
    %1220 = vdwg.mxu0
    %v1221 = vsel %vm975, %v1188, -inf
    %1222 = vmax.xlane.f32.xlu0 %v1221
    %v1223 = vpop.xlane.xlu0 %1222
    %v1224 = vsel %vm975, %v1193, -inf
    %1225 = vmax.xlane.f32.xlu0 %v1224
    %v1226 = vpop.xlane.xlu0 %1225
    %v1227 = vsel %vm975, %v1198, -inf
    %1228 = vmax.xlane.f32.xlu0 %v1227
    %v1229 = vpop.xlane.xlu0 %1228
    %v1230 = vsel %vm975, %v1203, -inf
    %1231 = vmax.xlane.f32.xlu0 %v1230
    %v1232 = vpop.xlane.xlu0 %1231
    %v1233 = vsel %vm975, %v1208, -inf
    %1234 = vmax.xlane.f32.xlu0 %v1233
    %v1235 = vpop.xlane.xlu0 %1234
    %v1236 = vsel %vm975, %v1213, -inf
    %1237 = vmax.xlane.f32.xlu0 %v1236
    %v1238 = vpop.xlane.xlu0 %1237
    %v1239 = vsel %vm994, %v1218, -inf
    %1240 = vmax.xlane.f32.xlu0 %v1239
    %v1241 = vpop.xlane.xlu0 %1240
    %v1242 = vsub.f32 %v1188, %v1223
    %v1243 = vsub.f32 %v1193, %v1226
    %v1244 = vsub.f32 %v1198, %v1229
    %v1245 = vsub.f32 %v1203, %v1232
    %v1246 = vsub.f32 %v1208, %v1235
    %v1247 = vsub.f32 %v1213, %v1238
    %v1248 = vsub.f32 %v1218, %v1241
    %v1249 = vmul.f32 %v1242, 1.442695
    %v1250 = vpow.pop %v1249
    %v1251 = vmul.f32 %v1243, 1.442695
    %v1252 = vpow.pop %v1251
    %v1253 = vmul.f32 %v1244, 1.442695
    %v1254 = vpow.pop %v1253
    %v1255 = vmul.f32 %v1245, 1.442695
    %v1256 = vpow.pop %v1255
    %v1257 = vmul.f32 %v1246, 1.442695
    %v1258 = vpow.pop %v1257
    %v1259 = vmul.f32 %v1247, 1.442695
    %v1260 = vpow.pop %v1259
    %v1261 = vmul.f32 %v1248, 1.442695
    %v1262 = vpow.pop %v1261
    %v1263 = vmul.f32 %v1250, %v521
    %v1264 = vmul.f32 %v1252, %v522
    %v1265 = vmul.f32 %v1254, %v523
    %v1266 = vmul.f32 %v1256, %v524
    %v1267 = vmul.f32 %v1258, %v525
    %v1268 = vmul.f32 %v1260, %v526
    %v1269 = vmul.f32 %v1262, %v527
    %v1270 = vsel %vm975, %v1263, 0.0
    %1271 = vadd.xlane.f32.xlu0 %v1270
    %v1272 = vpop.xlane.xlu0 %1271
    %v1273 = vsel %vm975, %v1264, 0.0
    %1274 = vadd.xlane.f32.xlu0 %v1273
    %v1275 = vpop.xlane.xlu0 %1274
    %v1276 = vsel %vm975, %v1265, 0.0
    %1277 = vadd.xlane.f32.xlu0 %v1276
    %v1278 = vpop.xlane.xlu0 %1277
    %v1279 = vsel %vm975, %v1266, 0.0
    %1280 = vadd.xlane.f32.xlu0 %v1279
    %v1281 = vpop.xlane.xlu0 %1280
    %v1282 = vsel %vm975, %v1267, 0.0
    %1283 = vadd.xlane.f32.xlu0 %v1282
    %v1284 = vpop.xlane.xlu0 %1283
    %v1285 = vsel %vm975, %v1268, 0.0
    %1286 = vadd.xlane.f32.xlu0 %v1285
    %v1287 = vpop.xlane.xlu0 %1286
    %v1288 = vsel %vm994, %v1269, 0.0
    %1289 = vadd.xlane.f32.xlu0 %v1288
    %v1290 = vpop.xlane.xlu0 %1289
    %v1291 = vrcp.pop %v1272
    %v1292 = vrcp.pop %v1275
    %v1293 = vrcp.pop %v1278
    %v1294 = vrcp.pop %v1281
    %v1295 = vrcp.pop %v1284
    %v1296 = vrcp.pop %v1287
    %v1297 = vrcp.pop %v1290
    %v1298 = vmul.f32 %v1263, %v1291
    %v1299 = vmul.f32 %v1264, %v1292
    %v1300 = vmul.f32 %v1265, %v1293
    %v1301 = vmul.f32 %v1266, %v1294
    %v1302 = vmul.f32 %v1267, %v1295
    %v1303 = vmul.f32 %v1268, %v1296
    %v1304 = vmul.f32 %v1269, %v1297
    %1312 = vrot.lane.b32.xlu0 %v1079, 96
    %v1313 = vpop.permute.xlu0 %1312
    %1314 = vrot.lane.b32.xlu0 %v1080, 96
    %v1315 = vpop.permute.xlu0 %1314
    %1316 = vrot.lane.b32.xlu0 %v1081, 96
    %v1317 = vpop.permute.xlu0 %1316
    %1318 = vrot.lane.b32.xlu0 %v1082, 96
    %v1319 = vpop.permute.xlu0 %1318
    %1320 = vrot.lane.b32.xlu0 %v1083, 96
    %v1321 = vpop.permute.xlu0 %1320
    %1322 = vrot.lane.b32.xlu0 %v1084, 96
    %v1323 = vpop.permute.xlu0 %1322
    %1324 = vrot.lane.b32.xlu0 %v1085, 96
    %v1325 = vpop.permute.xlu0 %1324
    %v1333 = vsel %vm975, %v1298, 0
    %v1336 = vsel %vm975, %v1299, 0
    %v1339 = vsel %vm975, %v1300, 0
    %v1342 = vsel %vm975, %v1301, 0
    %v1345 = vsel %vm975, %v1302, 0
    %v1348 = vsel %vm975, %v1303, 0
    %v1351 = vsel %vm975, %v1304, 0
    %vm1353 = vcmask 1041408
    %v1354 = vsel %vm1353, %v1325, 0
    %1356 = vmatprep.subr.mxu0 0.0
    %1357 = vmatpush1.msra.mxu0 %v1313
    %1358 = vmatprep.subr.mxu0 0.0
    %1359 = vmatpush1.msra.mxu0 %v1315
    %1360 = vmatprep.subr.mxu0 0.0
    %1361 = vmatpush1.msra.mxu0 %v1317
    %1362 = vmatprep.subr.mxu0 0.0
    %1363 = vmatpush1.msra.mxu0 %v1319
    %1364 = vmatprep.subr.mxu0 0.0
    %1365 = vmatpush1.msra.mxu0 %v1321
    %1366 = vmatprep.subr.mxu0 0.0
    %1367 = vmatpush1.msra.mxu0 %v1323
    %1368 = vmatprep.subr.mxu0 0.0
    %1369 = vmatpush1.msra.mxu0 %v1354
    %1370 = vmatprep.subr.mxu0 0.0
    %1371 = vmatpush1.msra.mxu0 0.0
    %1372 = vmatprep.subr.mxu0 0.0
    %1373 = vmatpush1.msra.mxu0 0.0
    %1374 = vmatprep.subr.mxu0 0.0
    %1375 = vmatpush1.msra.mxu0 0.0
    %1376 = vmatprep.subr.mxu0 0.0
    %1377 = vmatpush1.msra.mxu0 0.0
    %1378 = vmatprep.subr.mxu0 0.0
    %1379 = vmatpush1.msra.mxu0 0.0
    %1380 = vmatprep.subr.mxu0 0.0
    %1381 = vmatpush1.msra.mxu0 0.0
    %1382 = vmatprep.subr.mxu0 0.0
    %1383 = vmatpush1.msra.mxu0 0.0
    %1384 = vmatprep.subr.mxu0 0.0
    %1385 = vmatpush1.msra.mxu0 0.0
    %1386 = vmatprep.subr.mxu0 0.0
    %1387 = vmatpush1.msra.mxu0 0.0
    %1388 = vmatprep.subr.mxu0 0.0
    %1389 = vmatpush1.msra.mxu0 0.0
    %1390 = vmatprep.subr.mxu0 0.0
    %1391 = vmatpush1.msra.mxu0 0.0
    %1392 = vmatprep.subr.mxu0 0.0
    %1393 = vmatpush1.msra.mxu0 0.0
    %1394 = vmatprep.subr.mxu0 0.0
    %1395 = vmatpush1.msra.mxu0 0.0
    %1396 = vmatprep.subr.mxu0 0.0
    %1397 = vmatpush1.msra.mxu0 0.0
    %1398 = vmatprep.subr.mxu0 0.0
    %1399 = vmatpush1.msra.mxu0 0.0
    %1400 = vmatprep.subr.mxu0 0.0
    %1401 = vmatpush1.msra.mxu0 0.0
    %1402 = vmatprep.subr.mxu0 0.0
    %1403 = vmatpush1.msra.mxu0 0.0
    %1404 = vmatprep.subr.mxu0 0.0
    %1405 = vmatpush1.msra.mxu0 0.0
    %1406 = vmatprep.subr.mxu0 0.0
    %1407 = vmatpush1.msra.mxu0 0.0
    %1408 = vmatprep.subr.mxu0 0.0
    %1409 = vmatpush1.msra.mxu0 0.0
    %1410 = vmatprep.subr.mxu0 0.0
    %1411 = vmatpush1.msra.mxu0 0.0
    %1412 = vmatprep.subr.mxu0 0.0
    %1413 = vmatpush1.msra.mxu0 0.0
    %1414 = vmatprep.subr.mxu0 0.0
    %1415 = vmatpush1.msra.mxu0 0.0
    %1416 = vmatprep.subr.mxu0 0.0
    %1417 = vmatpush1.msra.mxu0 0.0
    %1418 = vmatprep.subr.mxu0 0.0
    %1419 = vmatpush1.msra.mxu0 0.0
    %1420 = vmatprep.mubr.f32.mxu0 0.0
    %1421 = vmatmul.mubr.f32.gmra.mrb[0].mxu0 %v1333
    %v1422 = vpop.f32.mrb[0].mxu0
    %v1423 = vadd.f32 0.0, %v1422
    %v1424 = vpop.f32.mrb[0].mxu0
    %1425 = vmatprep.mubr.f32.mxu0 0.0
    %1426 = vmatmul.mubr.f32.gmra.mrb[0].mxu0 %v1336
    %v1427 = vpop.f32.mrb[0].mxu0
    %v1428 = vadd.f32 0.0, %v1427
    %v1429 = vpop.f32.mrb[0].mxu0
    %1430 = vmatprep.mubr.f32.mxu0 0.0
    %1431 = vmatmul.mubr.f32.gmra.mrb[0].mxu0 %v1339
    %v1432 = vpop.f32.mrb[0].mxu0
    %v1433 = vadd.f32 0.0, %v1432
    %v1434 = vpop.f32.mrb[0].mxu0
    %1435 = vmatprep.mubr.f32.mxu0 0.0
    %1436 = vmatmul.mubr.f32.gmra.mrb[0].mxu0 %v1342
    %v1437 = vpop.f32.mrb[0].mxu0
    %v1438 = vadd.f32 0.0, %v1437
    %v1439 = vpop.f32.mrb[0].mxu0
    %1440 = vmatprep.mubr.f32.mxu0 0.0
    %1441 = vmatmul.mubr.f32.gmra.mrb[0].mxu0 %v1345
    %v1442 = vpop.f32.mrb[0].mxu0
    %v1443 = vadd.f32 0.0, %v1442
    %v1444 = vpop.f32.mrb[0].mxu0
    %1445 = vmatprep.mubr.f32.mxu0 0.0
    %1446 = vmatmul.mubr.f32.gmra.mrb[0].mxu0 %v1348
    %v1447 = vpop.f32.mrb[0].mxu0
    %v1448 = vadd.f32 0.0, %v1447
    %v1449 = vpop.f32.mrb[0].mxu0
    %1450 = vmatprep.mubr.f32.mxu0 0.0
    %1451 = vmatmul.mubr.f32.gmra.mrb[0].mxu0 %v1351
    %v1452 = vpop.f32.mrb[0].mxu0
    %v1453 = vadd.f32 0.0, %v1452
    %v1454 = vpop.f32.mrb[0].mxu0
    %1455 = vdwg.mxu0
    %1463 = vrot.lane.b32.xlu0 %v812, 96
    %v1464 = vpop.permute.xlu0 %1463
    %1465 = vrot.lane.b32.xlu0 %v813, 96
    %v1466 = vpop.permute.xlu0 %1465
    %1467 = vrot.lane.b32.xlu0 %v814, 96
    %v1468 = vpop.permute.xlu0 %1467
    %1469 = vrot.lane.b32.xlu0 %v815, 96
    %v1470 = vpop.permute.xlu0 %1469
    %1471 = vrot.lane.b32.xlu0 %v816, 96
    %v1472 = vpop.permute.xlu0 %1471
    %1473 = vrot.lane.b32.xlu0 %v817, 96
    %v1474 = vpop.permute.xlu0 %1473
    %1475 = vrot.lane.b32.xlu0 %v818, 96
    %v1476 = vpop.permute.xlu0 %1475
    %v1484 = vsel %vm975, %v1054, 0
    %v1487 = vsel %vm975, %v1055, 0
    %v1490 = vsel %vm975, %v1056, 0
    %v1493 = vsel %vm975, %v1057, 0
    %v1496 = vsel %vm975, %v1058, 0
    %v1499 = vsel %vm975, %v1059, 0
    %v1502 = vsel %vm975, %v1060, 0
    %v1504 = vsel %vm1353, %v1476, 0
    %1506 = vmatprep.subr.mxu0 0.0
    %1507 = vmatpush1.msra.mxu0 %v1464
    %1508 = vmatprep.subr.mxu0 0.0
    %1509 = vmatpush1.msra.mxu0 %v1466
    %1510 = vmatprep.subr.mxu0 0.0
    %1511 = vmatpush1.msra.mxu0 %v1468
    %1512 = vmatprep.subr.mxu0 0.0
    %1513 = vmatpush1.msra.mxu0 %v1470
    %1514 = vmatprep.subr.mxu0 0.0
    %1515 = vmatpush1.msra.mxu0 %v1472
    %1516 = vmatprep.subr.mxu0 0.0
    %1517 = vmatpush1.msra.mxu0 %v1474
    %1518 = vmatprep.subr.mxu0 0.0
    %1519 = vmatpush1.msra.mxu0 %v1504
    %1520 = vmatprep.subr.mxu0 0.0
    %1521 = vmatpush1.msra.mxu0 0.0
    %1522 = vmatprep.subr.mxu0 0.0
    %1523 = vmatpush1.msra.mxu0 0.0
    %1524 = vmatprep.subr.mxu0 0.0
    %1525 = vmatpush1.msra.mxu0 0.0
    %1526 = vmatprep.subr.mxu0 0.0
    %1527 = vmatpush1.msra.mxu0 0.0
    %1528 = vmatprep.subr.mxu0 0.0
    %1529 = vmatpush1.msra.mxu0 0.0
    %1530 = vmatprep.subr.mxu0 0.0
    %1531 = vmatpush1.msra.mxu0 0.0
    %1532 = vmatprep.subr.mxu0 0.0
    %1533 = vmatpush1.msra.mxu0 0.0
    %1534 = vmatprep.subr.mxu0 0.0
    %1535 = vmatpush1.msra.mxu0 0.0
    %1536 = vmatprep.subr.mxu0 0.0
    %1537 = vmatpush1.msra.mxu0 0.0
    %1538 = vmatprep.subr.mxu0 0.0
    %1539 = vmatpush1.msra.mxu0 0.0
    %1540 = vmatprep.subr.mxu0 0.0
    %1541 = vmatpush1.msra.mxu0 0.0
    %1542 = vmatprep.subr.mxu0 0.0
    %1543 = vmatpush1.msra.mxu0 0.0
    %1544 = vmatprep.subr.mxu0 0.0
    %1545 = vmatpush1.msra.mxu0 0.0
    %1546 = vmatprep.subr.mxu0 0.0
    %1547 = vmatpush1.msra.mxu0 0.0
    %1548 = vmatprep.subr.mxu0 0.0
    %1549 = vmatpush1.msra.mxu0 0.0
    %1550 = vmatprep.subr.mxu0 0.0
    %1551 = vmatpush1.msra.mxu0 0.0
    %1552 = vmatprep.subr.mxu0 0.0
    %1553 = vmatpush1.msra.mxu0 0.0
    %1554 = vmatprep.subr.mxu0 0.0
    %1555 = vmatpush1.msra.mxu0 0.0
    %1556 = vmatprep.subr.mxu0 0.0
    %1557 = vmatpush1.msra.mxu0 0.0
    %1558 = vmatprep.subr.mxu0 0.0
    %1559 = vmatpush1.msra.mxu0 0.0
    %1560 = vmatprep.subr.mxu0 0.0
    %1561 = vmatpush1.msra.mxu0 0.0
    %1562 = vmatprep.subr.mxu0 0.0
    %1563 = vmatpush1.msra.mxu0 0.0
    %1564 = vmatprep.subr.mxu0 0.0
    %1565 = vmatpush1.msra.mxu0 0.0
    %1566 = vmatprep.subr.mxu0 0.0
    %1567 = vmatpush1.msra.mxu0 0.0
    %1568 = vmatprep.subr.mxu0 0.0
    %1569 = vmatpush1.msra.mxu0 0.0
    %1570 = vmatprep.mubr.f32.mxu0 0.0
    %1571 = vmatmul.mubr.f32.gmra.mrb[0].mxu0 %v1484
    %v1572 = vpop.f32.mrb[0].mxu0
    %v1573 = vadd.f32 %v1423, %v1572
    %v1574 = vpop.f32.mrb[0].mxu0
    %1575 = vmatprep.mubr.f32.mxu0 0.0
    %1576 = vmatmul.mubr.f32.gmra.mrb[0].mxu0 %v1487
    %v1577 = vpop.f32.mrb[0].mxu0
    %v1578 = vadd.f32 %v1428, %v1577
    %v1579 = vpop.f32.mrb[0].mxu0
    %1580 = vmatprep.mubr.f32.mxu0 0.0
    %1581 = vmatmul.mubr.f32.gmra.mrb[0].mxu0 %v1490
    %v1582 = vpop.f32.mrb[0].mxu0
    %v1583 = vadd.f32 %v1433, %v1582
    %v1584 = vpop.f32.mrb[0].mxu0
    %1585 = vmatprep.mubr.f32.mxu0 0.0
    %1586 = vmatmul.mubr.f32.gmra.mrb[0].mxu0 %v1493
    %v1587 = vpop.f32.mrb[0].mxu0
    %v1588 = vadd.f32 %v1438, %v1587
    %v1589 = vpop.f32.mrb[0].mxu0
    %1590 = vmatprep.mubr.f32.mxu0 0.0
    %1591 = vmatmul.mubr.f32.gmra.mrb[0].mxu0 %v1496
    %v1592 = vpop.f32.mrb[0].mxu0
    %v1593 = vadd.f32 %v1443, %v1592
    %v1594 = vpop.f32.mrb[0].mxu0
    %1595 = vmatprep.mubr.f32.mxu0 0.0
    %1596 = vmatmul.mubr.f32.gmra.mrb[0].mxu0 %v1499
    %v1597 = vpop.f32.mrb[0].mxu0
    %v1598 = vadd.f32 %v1448, %v1597
    %v1599 = vpop.f32.mrb[0].mxu0
    %1600 = vmatprep.mubr.f32.mxu0 0.0
    %1601 = vmatmul.mubr.f32.gmra.mrb[0].mxu0 %v1502
    %v1602 = vpop.f32.mrb[0].mxu0
    %v1603 = vadd.f32 %v1453, %v1602
    %v1604 = vpop.f32.mrb[0].mxu0
    %1605 = vdwg.mxu0
    %v1606 = vlaneseq
    %v1607 = vshrl.u32 %v1606, 7
    %v1608 = vsub.s32 2, %v1607
    %v1609 = vrot.slane %v520, %v1608
    %1611 = vrot.lane.b32.xlu0 %v1609, 16
    %v1612 = vpop.permute.xlu0 %1611
    %v1614 = vmul.f32 %v761, %v1612
    %v1615 = vmul.f32 %v766, %v1612
    %v1616 = vmul.f32 %v771, %v1612
    %v1617 = vmul.f32 %v776, %v1612
    %v1618 = vmul.f32 %v781, %v1612
    %v1619 = vmul.f32 %v786, %v1612
    %v1620 = vmul.f32 %v791, %v1612
    %1621 = vrot.lane.b32.xlu0 %v1609, 32
    %v1622 = vpop.permute.xlu0 %1621
    %v1624 = vmul.f32 %v761, %v1622
    %v1625 = vmul.f32 %v766, %v1622
    %v1626 = vmul.f32 %v771, %v1622
    %v1627 = vmul.f32 %v776, %v1622
    %v1628 = vmul.f32 %v781, %v1622
    %v1629 = vmul.f32 %v786, %v1622
    %v1630 = vmul.f32 %v791, %v1622
    %1638 = vrot.lane.b32.xlu0 %v1614, 112
    %v1639 = vpop.permute.xlu0 %1638
    %1640 = vrot.lane.b32.xlu0 %v1615, 112
    %v1641 = vpop.permute.xlu0 %1640
    %1642 = vrot.lane.b32.xlu0 %v1616, 112
    %v1643 = vpop.permute.xlu0 %1642
    %1644 = vrot.lane.b32.xlu0 %v1617, 112
    %v1645 = vpop.permute.xlu0 %1644
    %1646 = vrot.lane.b32.xlu0 %v1618, 112
    %v1647 = vpop.permute.xlu0 %1646
    %1648 = vrot.lane.b32.xlu0 %v1619, 112
    %v1649 = vpop.permute.xlu0 %1648
    %1650 = vrot.lane.b32.xlu0 %v1620, 112
    %v1651 = vpop.permute.xlu0 %1650
    %v1652 = vsel %vm539, %v1639, 0
    %v1654 = vsel %vm539, %v1641, 0
    %v1656 = vsel %vm539, %v1643, 0
    %v1658 = vsel %vm539, %v1645, 0
    %v1660 = vsel %vm539, %v1647, 0
    %v1662 = vsel %vm539, %v1649, 0
    %v1664 = vsel %vm539, %v1651, 0
    %1666 = vmatprep.subr.mxu0 0.0
    %1667 = vmatpush1.xpose.msra.mxu0 %v1652
    %1668 = vmatprep.subr.mxu0 0.0
    %1669 = vmatpush1.xpose.msra.mxu0 %v1654
    %1670 = vmatprep.subr.mxu0 0.0
    %1671 = vmatpush1.xpose.msra.mxu0 %v1656
    %1672 = vmatprep.subr.mxu0 0.0
    %1673 = vmatpush1.xpose.msra.mxu0 %v1658
    %1674 = vmatprep.subr.mxu0 0.0
    %1675 = vmatpush1.xpose.msra.mxu0 %v1660
    %1676 = vmatprep.subr.mxu0 0.0
    %1677 = vmatpush1.xpose.msra.mxu0 %v1662
    %1678 = vmatprep.subr.mxu0 0.0
    %1679 = vmatpush1.xpose.msra.mxu0 %v1664
    %1680 = vmatprep.subr.mxu0 0.0
    %1681 = vmatpush1.xpose.msra.mxu0 0.0
    %1682 = vmatprep.subr.mxu0 0.0
    %1683 = vmatpush1.xpose.msra.mxu0 0.0
    %1684 = vmatprep.subr.mxu0 0.0
    %1685 = vmatpush1.xpose.msra.mxu0 0.0
    %1686 = vmatprep.subr.mxu0 0.0
    %1687 = vmatpush1.xpose.msra.mxu0 0.0
    %1688 = vmatprep.subr.mxu0 0.0
    %1689 = vmatpush1.xpose.msra.mxu0 0.0
    %1690 = vmatprep.subr.mxu0 0.0
    %1691 = vmatpush1.xpose.msra.mxu0 0.0
    %1692 = vmatprep.subr.mxu0 0.0
    %1693 = vmatpush1.xpose.msra.mxu0 0.0
    %1694 = vmatprep.subr.mxu0 0.0
    %1695 = vmatpush1.xpose.msra.mxu0 0.0
    %1696 = vmatprep.subr.mxu0 0.0
    %1697 = vmatpush1.xpose.msra.mxu0 0.0
    %1698 = vmatprep.subr.mxu0 0.0
    %1699 = vmatpush1.xpose.msra.mxu0 0.0
    %1700 = vmatprep.subr.mxu0 0.0
    %1701 = vmatpush1.xpose.msra.mxu0 0.0
    %1702 = vmatprep.subr.mxu0 0.0
    %1703 = vmatpush1.xpose.msra.mxu0 0.0
    %1704 = vmatprep.subr.mxu0 0.0
    %1705 = vmatpush1.xpose.msra.mxu0 0.0
    %1706 = vmatprep.subr.mxu0 0.0
    %1707 = vmatpush1.xpose.msra.mxu0 0.0
    %1708 = vmatprep.subr.mxu0 0.0
    %1709 = vmatpush1.xpose.msra.mxu0 0.0
    %1710 = vmatprep.subr.mxu0 0.0
    %1711 = vmatpush1.xpose.msra.mxu0 0.0
    %1712 = vmatprep.subr.mxu0 0.0
    %1713 = vmatpush1.xpose.msra.mxu0 0.0
    %1714 = vmatprep.subr.mxu0 0.0
    %1715 = vmatpush1.xpose.msra.mxu0 0.0
    %1716 = vmatprep.subr.mxu0 0.0
    %1717 = vmatpush1.xpose.msra.mxu0 0.0
    %1718 = vmatprep.subr.mxu0 0.0
    %1719 = vmatpush1.xpose.msra.mxu0 0.0
    %1720 = vmatprep.subr.mxu0 0.0
    %1721 = vmatpush1.xpose.msra.mxu0 0.0
    %1722 = vmatprep.subr.mxu0 0.0
    %1723 = vmatpush1.xpose.msra.mxu0 0.0
    %1724 = vmatprep.subr.mxu0 0.0
    %1725 = vmatpush1.xpose.msra.mxu0 0.0
    %1726 = vmatprep.subr.mxu0 0.0
    %1727 = vmatpush1.xpose.msra.mxu0 0.0
    %1728 = vmatprep.subr.mxu0 0.0
    %1729 = vmatpush1.xpose.msra.mxu0 0.0
    %1730 = vmatprep.mubr.f32.mxu0 0.0
    %1731 = vmatmul.mubr.f32.gmra.mrb[0].mxu0 %v841
    %v1732 = vpop.f32.mrb[0].mxu0
    %v1733 = vadd.f32 0.0, %v1732
    %v1734 = vpop.f32.mrb[0].mxu0
    %1735 = vmatprep.mubr.f32.mxu0 0.0
    %1736 = vmatmul.mubr.f32.gmra.mrb[0].mxu0 %v844
    %v1737 = vpop.f32.mrb[0].mxu0
    %v1738 = vadd.f32 0.0, %v1737
    %v1739 = vpop.f32.mrb[0].mxu0
    %1740 = vmatprep.mubr.f32.mxu0 0.0
    %1741 = vmatmul.mubr.f32.gmra.mrb[0].mxu0 %v847
    %v1742 = vpop.f32.mrb[0].mxu0
    %v1743 = vadd.f32 0.0, %v1742
    %v1744 = vpop.f32.mrb[0].mxu0
    %1745 = vmatprep.mubr.f32.mxu0 0.0
    %1746 = vmatmul.mubr.f32.gmra.mrb[0].mxu0 %v850
    %v1747 = vpop.f32.mrb[0].mxu0
    %v1748 = vadd.f32 0.0, %v1747
    %v1749 = vpop.f32.mrb[0].mxu0
    %1750 = vmatprep.mubr.f32.mxu0 0.0
    %1751 = vmatmul.mubr.f32.gmra.mrb[0].mxu0 %v853
    %v1752 = vpop.f32.mrb[0].mxu0
    %v1753 = vadd.f32 0.0, %v1752
    %v1754 = vpop.f32.mrb[0].mxu0
    %1755 = vmatprep.mubr.f32.mxu0 0.0
    %1756 = vmatmul.mubr.f32.gmra.mrb[0].mxu0 %v856
    %v1757 = vpop.f32.mrb[0].mxu0
    %v1758 = vadd.f32 0.0, %v1757
    %v1759 = vpop.f32.mrb[0].mxu0
    %1760 = vmatprep.mubr.f32.mxu0 0.0
    %1761 = vmatmul.mubr.f32.gmra.mrb[0].mxu0 %v859
    %v1762 = vpop.f32.mrb[0].mxu0
    %v1763 = vadd.f32 0.0, %v1762
    %v1764 = vpop.f32.mrb[0].mxu0
    %1765 = vdwg.mxu0
    %v1766 = vsel %vm975, %v1733, -inf
    %1767 = vmax.xlane.f32.xlu0 %v1766
    %v1768 = vpop.xlane.xlu0 %1767
    %v1769 = vsel %vm975, %v1738, -inf
    %1770 = vmax.xlane.f32.xlu0 %v1769
    %v1771 = vpop.xlane.xlu0 %1770
    %v1772 = vsel %vm975, %v1743, -inf
    %1773 = vmax.xlane.f32.xlu0 %v1772
    %v1774 = vpop.xlane.xlu0 %1773
    %v1775 = vsel %vm975, %v1748, -inf
    %1776 = vmax.xlane.f32.xlu0 %v1775
    %v1777 = vpop.xlane.xlu0 %1776
    %v1778 = vsel %vm975, %v1753, -inf
    %1779 = vmax.xlane.f32.xlu0 %v1778
    %v1780 = vpop.xlane.xlu0 %1779
    %v1781 = vsel %vm975, %v1758, -inf
    %1782 = vmax.xlane.f32.xlu0 %v1781
    %v1783 = vpop.xlane.xlu0 %1782
    %v1784 = vsel %vm994, %v1763, -inf
    %1785 = vmax.xlane.f32.xlu0 %v1784
    %v1786 = vpop.xlane.xlu0 %1785
    %v1787 = vsub.f32 %v1733, %v1768
    %v1788 = vsub.f32 %v1738, %v1771
    %v1789 = vsub.f32 %v1743, %v1774
    %v1790 = vsub.f32 %v1748, %v1777
    %v1791 = vsub.f32 %v1753, %v1780
    %v1792 = vsub.f32 %v1758, %v1783
    %v1793 = vsub.f32 %v1763, %v1786
    %v1794 = vmul.f32 %v1787, 1.442695
    %v1795 = vpow.pop %v1794
    %v1796 = vmul.f32 %v1788, 1.442695
    %v1797 = vpow.pop %v1796
    %v1798 = vmul.f32 %v1789, 1.442695
    %v1799 = vpow.pop %v1798
    %v1800 = vmul.f32 %v1790, 1.442695
    %v1801 = vpow.pop %v1800
    %v1802 = vmul.f32 %v1791, 1.442695
    %v1803 = vpow.pop %v1802
    %v1804 = vmul.f32 %v1792, 1.442695
    %v1805 = vpow.pop %v1804
    %v1806 = vmul.f32 %v1793, 1.442695
    %v1807 = vpow.pop %v1806
    %v1808 = vmul.f32 %v1795, %v521
    %v1809 = vmul.f32 %v1797, %v522
    %v1810 = vmul.f32 %v1799, %v523
    %v1811 = vmul.f32 %v1801, %v524
    %v1812 = vmul.f32 %v1803, %v525
    %v1813 = vmul.f32 %v1805, %v526
    %v1814 = vmul.f32 %v1807, %v527
    %v1815 = vsel %vm975, %v1808, 0.0
    %1816 = vadd.xlane.f32.xlu0 %v1815
    %v1817 = vpop.xlane.xlu0 %1816
    %v1818 = vsel %vm975, %v1809, 0.0
    %1819 = vadd.xlane.f32.xlu0 %v1818
    %v1820 = vpop.xlane.xlu0 %1819
    %v1821 = vsel %vm975, %v1810, 0.0
    %1822 = vadd.xlane.f32.xlu0 %v1821
    %v1823 = vpop.xlane.xlu0 %1822
    %v1824 = vsel %vm975, %v1811, 0.0
    %1825 = vadd.xlane.f32.xlu0 %v1824
    %v1826 = vpop.xlane.xlu0 %1825
    %v1827 = vsel %vm975, %v1812, 0.0
    %1828 = vadd.xlane.f32.xlu0 %v1827
    %v1829 = vpop.xlane.xlu0 %1828
    %v1830 = vsel %vm975, %v1813, 0.0
    %1831 = vadd.xlane.f32.xlu0 %v1830
    %v1832 = vpop.xlane.xlu0 %1831
    %v1833 = vsel %vm994, %v1814, 0.0
    %1834 = vadd.xlane.f32.xlu0 %v1833
    %v1835 = vpop.xlane.xlu0 %1834
    %v1836 = vrcp.pop %v1817
    %v1837 = vrcp.pop %v1820
    %v1838 = vrcp.pop %v1823
    %v1839 = vrcp.pop %v1826
    %v1840 = vrcp.pop %v1829
    %v1841 = vrcp.pop %v1832
    %v1842 = vrcp.pop %v1835
    %v1843 = vmul.f32 %v1808, %v1836
    %v1844 = vmul.f32 %v1809, %v1837
    %v1845 = vmul.f32 %v1810, %v1838
    %v1846 = vmul.f32 %v1811, %v1839
    %v1847 = vmul.f32 %v1812, %v1840
    %v1848 = vmul.f32 %v1813, %v1841
    %v1849 = vmul.f32 %v1814, %v1842
    %1857 = vrot.lane.b32.xlu0 %v1624, 96
    %v1858 = vpop.permute.xlu0 %1857
    %1859 = vrot.lane.b32.xlu0 %v1625, 96
    %v1860 = vpop.permute.xlu0 %1859
    %1861 = vrot.lane.b32.xlu0 %v1626, 96
    %v1862 = vpop.permute.xlu0 %1861
    %1863 = vrot.lane.b32.xlu0 %v1627, 96
    %v1864 = vpop.permute.xlu0 %1863
    %1865 = vrot.lane.b32.xlu0 %v1628, 96
    %v1866 = vpop.permute.xlu0 %1865
    %1867 = vrot.lane.b32.xlu0 %v1629, 96
    %v1868 = vpop.permute.xlu0 %1867
    %1869 = vrot.lane.b32.xlu0 %v1630, 96
    %v1870 = vpop.permute.xlu0 %1869
    %v1878 = vsel %vm975, %v1843, 0
    %v1881 = vsel %vm975, %v1844, 0
    %v1884 = vsel %vm975, %v1845, 0
    %v1887 = vsel %vm975, %v1846, 0
    %v1890 = vsel %vm975, %v1847, 0
    %v1893 = vsel %vm975, %v1848, 0
    %v1896 = vsel %vm975, %v1849, 0
    %v1898 = vsel %vm1353, %v1870, 0
    %1900 = vmatprep.subr.mxu0 0.0
    %1901 = vmatpush1.msra.mxu0 %v1858
    %1902 = vmatprep.subr.mxu0 0.0
    %1903 = vmatpush1.msra.mxu0 %v1860
    %1904 = vmatprep.subr.mxu0 0.0
    %1905 = vmatpush1.msra.mxu0 %v1862
    %1906 = vmatprep.subr.mxu0 0.0
    %1907 = vmatpush1.msra.mxu0 %v1864
    %1908 = vmatprep.subr.mxu0 0.0
    %1909 = vmatpush1.msra.mxu0 %v1866
    %1910 = vmatprep.subr.mxu0 0.0
    %1911 = vmatpush1.msra.mxu0 %v1868
    %1912 = vmatprep.subr.mxu0 0.0
    %1913 = vmatpush1.msra.mxu0 %v1898
    %1914 = vmatprep.subr.mxu0 0.0
    %1915 = vmatpush1.msra.mxu0 0.0
    %1916 = vmatprep.subr.mxu0 0.0
    %1917 = vmatpush1.msra.mxu0 0.0
    %1918 = vmatprep.subr.mxu0 0.0
    %1919 = vmatpush1.msra.mxu0 0.0
    %1920 = vmatprep.subr.mxu0 0.0
    %1921 = vmatpush1.msra.mxu0 0.0
    %1922 = vmatprep.subr.mxu0 0.0
    %1923 = vmatpush1.msra.mxu0 0.0
    %1924 = vmatprep.subr.mxu0 0.0
    %1925 = vmatpush1.msra.mxu0 0.0
    %1926 = vmatprep.subr.mxu0 0.0
    %1927 = vmatpush1.msra.mxu0 0.0
    %1928 = vmatprep.subr.mxu0 0.0
    %1929 = vmatpush1.msra.mxu0 0.0
    %1930 = vmatprep.subr.mxu0 0.0
    %1931 = vmatpush1.msra.mxu0 0.0
    %1932 = vmatprep.subr.mxu0 0.0
    %1933 = vmatpush1.msra.mxu0 0.0
    %1934 = vmatprep.subr.mxu0 0.0
    %1935 = vmatpush1.msra.mxu0 0.0
    %1936 = vmatprep.subr.mxu0 0.0
    %1937 = vmatpush1.msra.mxu0 0.0
    %1938 = vmatprep.subr.mxu0 0.0
    %1939 = vmatpush1.msra.mxu0 0.0
    %1940 = vmatprep.subr.mxu0 0.0
    %1941 = vmatpush1.msra.mxu0 0.0
    %1942 = vmatprep.subr.mxu0 0.0
    %1943 = vmatpush1.msra.mxu0 0.0
    %1944 = vmatprep.subr.mxu0 0.0
    %1945 = vmatpush1.msra.mxu0 0.0
    %1946 = vmatprep.subr.mxu0 0.0
    %1947 = vmatpush1.msra.mxu0 0.0
    %1948 = vmatprep.subr.mxu0 0.0
    %1949 = vmatpush1.msra.mxu0 0.0
    %1950 = vmatprep.subr.mxu0 0.0
    %1951 = vmatpush1.msra.mxu0 0.0
    %1952 = vmatprep.subr.mxu0 0.0
    %1953 = vmatpush1.msra.mxu0 0.0
    %1954 = vmatprep.subr.mxu0 0.0
    %1955 = vmatpush1.msra.mxu0 0.0
    %1956 = vmatprep.subr.mxu0 0.0
    %1957 = vmatpush1.msra.mxu0 0.0
    %1958 = vmatprep.subr.mxu0 0.0
    %1959 = vmatpush1.msra.mxu0 0.0
    %1960 = vmatprep.subr.mxu0 0.0
    %1961 = vmatpush1.msra.mxu0 0.0
    %1962 = vmatprep.subr.mxu0 0.0
    %1963 = vmatpush1.msra.mxu0 0.0
    %1964 = vmatprep.mubr.f32.mxu0 0.0
    %1965 = vmatmul.mubr.f32.gmra.mrb[0].mxu0 %v1878
    %v1966 = vpop.f32.mrb[0].mxu0
    %v1967 = vadd.f32 0.0, %v1966
    %v1968 = vpop.f32.mrb[0].mxu0
    %1969 = vmatprep.mubr.f32.mxu0 0.0
    %1970 = vmatmul.mubr.f32.gmra.mrb[0].mxu0 %v1881
    %v1971 = vpop.f32.mrb[0].mxu0
    %v1972 = vadd.f32 0.0, %v1971
    %v1973 = vpop.f32.mrb[0].mxu0
    %1974 = vmatprep.mubr.f32.mxu0 0.0
    %1975 = vmatmul.mubr.f32.gmra.mrb[0].mxu0 %v1884
    %v1976 = vpop.f32.mrb[0].mxu0
    %v1977 = vadd.f32 0.0, %v1976
    %v1978 = vpop.f32.mrb[0].mxu0
    %1979 = vmatprep.mubr.f32.mxu0 0.0
    %1980 = vmatmul.mubr.f32.gmra.mrb[0].mxu0 %v1887
    %v1981 = vpop.f32.mrb[0].mxu0
    %v1982 = vadd.f32 0.0, %v1981
    %v1983 = vpop.f32.mrb[0].mxu0
    %1984 = vmatprep.mubr.f32.mxu0 0.0
    %1985 = vmatmul.mubr.f32.gmra.mrb[0].mxu0 %v1890
    %v1986 = vpop.f32.mrb[0].mxu0
    %v1987 = vadd.f32 0.0, %v1986
    %v1988 = vpop.f32.mrb[0].mxu0
    %1989 = vmatprep.mubr.f32.mxu0 0.0
    %1990 = vmatmul.mubr.f32.gmra.mrb[0].mxu0 %v1893
    %v1991 = vpop.f32.mrb[0].mxu0
    %v1992 = vadd.f32 0.0, %v1991
    %v1993 = vpop.f32.mrb[0].mxu0
    %1994 = vmatprep.mubr.f32.mxu0 0.0
    %1995 = vmatmul.mubr.f32.gmra.mrb[0].mxu0 %v1896
    %v1996 = vpop.f32.mrb[0].mxu0
    %v1997 = vadd.f32 0.0, %v1996
    %v1998 = vpop.f32.mrb[0].mxu0
    %1999 = vdwg.mxu0
    %v2000 = vadd.f32 %v1573, %v1967
    %v2001 = vadd.f32 %v1578, %v1972
    %v2002 = vadd.f32 %v1583, %v1977
    %v2003 = vadd.f32 %v1588, %v1982
    %v2004 = vadd.f32 %v1593, %v1987
    %v2005 = vadd.f32 %v1598, %v1992
    %v2006 = vadd.f32 %v1603, %v1997
    %v2007 = vlaneseq
    %v2008 = vshrl.u32 %v2007, 7
    %v2009 = vsub.s32 3, %v2008
    %v2010 = vrot.slane %v520, %v2009
    %2012 = vrot.lane.b32.xlu0 %v2010, 16
    %v2013 = vpop.permute.xlu0 %2012
    %v2015 = vmul.f32 %v761, %v2013
    %v2016 = vmul.f32 %v766, %v2013
    %v2017 = vmul.f32 %v771, %v2013
    %v2018 = vmul.f32 %v776, %v2013
    %v2019 = vmul.f32 %v781, %v2013
    %v2020 = vmul.f32 %v786, %v2013
    %v2021 = vmul.f32 %v791, %v2013
    %2022 = vrot.lane.b32.xlu0 %v2010, 32
    %v2023 = vpop.permute.xlu0 %2022
    %v2025 = vmul.f32 %v761, %v2023
    %v2026 = vmul.f32 %v766, %v2023
    %v2027 = vmul.f32 %v771, %v2023
    %v2028 = vmul.f32 %v776, %v2023
    %v2029 = vmul.f32 %v781, %v2023
    %v2030 = vmul.f32 %v786, %v2023
    %v2031 = vmul.f32 %v791, %v2023
    %2039 = vrot.lane.b32.xlu0 %v2015, 112
    %v2040 = vpop.permute.xlu0 %2039
    %2041 = vrot.lane.b32.xlu0 %v2016, 112
    %v2042 = vpop.permute.xlu0 %2041
    %2043 = vrot.lane.b32.xlu0 %v2017, 112
    %v2044 = vpop.permute.xlu0 %2043
    %2045 = vrot.lane.b32.xlu0 %v2018, 112
    %v2046 = vpop.permute.xlu0 %2045
    %2047 = vrot.lane.b32.xlu0 %v2019, 112
    %v2048 = vpop.permute.xlu0 %2047
    %2049 = vrot.lane.b32.xlu0 %v2020, 112
    %v2050 = vpop.permute.xlu0 %2049
    %2051 = vrot.lane.b32.xlu0 %v2021, 112
    %v2052 = vpop.permute.xlu0 %2051
    %v2053 = vsel %vm539, %v2040, 0
    %v2055 = vsel %vm539, %v2042, 0
    %v2057 = vsel %vm539, %v2044, 0
    %v2059 = vsel %vm539, %v2046, 0
    %v2061 = vsel %vm539, %v2048, 0
    %v2063 = vsel %vm539, %v2050, 0
    %v2065 = vsel %vm539, %v2052, 0
    %2067 = vmatprep.subr.mxu0 0.0
    %2068 = vmatpush1.xpose.msra.mxu0 %v2053
    %2069 = vmatprep.subr.mxu0 0.0
    %2070 = vmatpush1.xpose.msra.mxu0 %v2055
    %2071 = vmatprep.subr.mxu0 0.0
    %2072 = vmatpush1.xpose.msra.mxu0 %v2057
    %2073 = vmatprep.subr.mxu0 0.0
    %2074 = vmatpush1.xpose.msra.mxu0 %v2059
    %2075 = vmatprep.subr.mxu0 0.0
    %2076 = vmatpush1.xpose.msra.mxu0 %v2061
    %2077 = vmatprep.subr.mxu0 0.0
    %2078 = vmatpush1.xpose.msra.mxu0 %v2063
    %2079 = vmatprep.subr.mxu0 0.0
    %2080 = vmatpush1.xpose.msra.mxu0 %v2065
    %2081 = vmatprep.subr.mxu0 0.0
    %2082 = vmatpush1.xpose.msra.mxu0 0.0
    %2083 = vmatprep.subr.mxu0 0.0
    %2084 = vmatpush1.xpose.msra.mxu0 0.0
    %2085 = vmatprep.subr.mxu0 0.0
    %2086 = vmatpush1.xpose.msra.mxu0 0.0
    %2087 = vmatprep.subr.mxu0 0.0
    %2088 = vmatpush1.xpose.msra.mxu0 0.0
    %2089 = vmatprep.subr.mxu0 0.0
    %2090 = vmatpush1.xpose.msra.mxu0 0.0
    %2091 = vmatprep.subr.mxu0 0.0
    %2092 = vmatpush1.xpose.msra.mxu0 0.0
    %2093 = vmatprep.subr.mxu0 0.0
    %2094 = vmatpush1.xpose.msra.mxu0 0.0
    %2095 = vmatprep.subr.mxu0 0.0
    %2096 = vmatpush1.xpose.msra.mxu0 0.0
    %2097 = vmatprep.subr.mxu0 0.0
    %2098 = vmatpush1.xpose.msra.mxu0 0.0
    %2099 = vmatprep.subr.mxu0 0.0
    %2100 = vmatpush1.xpose.msra.mxu0 0.0
    %2101 = vmatprep.subr.mxu0 0.0
    %2102 = vmatpush1.xpose.msra.mxu0 0.0
    %2103 = vmatprep.subr.mxu0 0.0
    %2104 = vmatpush1.xpose.msra.mxu0 0.0
    %2105 = vmatprep.subr.mxu0 0.0
    %2106 = vmatpush1.xpose.msra.mxu0 0.0
    %2107 = vmatprep.subr.mxu0 0.0
    %2108 = vmatpush1.xpose.msra.mxu0 0.0
    %2109 = vmatprep.subr.mxu0 0.0
    %2110 = vmatpush1.xpose.msra.mxu0 0.0
    %2111 = vmatprep.subr.mxu0 0.0
    %2112 = vmatpush1.xpose.msra.mxu0 0.0
    %2113 = vmatprep.subr.mxu0 0.0
    %2114 = vmatpush1.xpose.msra.mxu0 0.0
    %2115 = vmatprep.subr.mxu0 0.0
    %2116 = vmatpush1.xpose.msra.mxu0 0.0
    %2117 = vmatprep.subr.mxu0 0.0
    %2118 = vmatpush1.xpose.msra.mxu0 0.0
    %2119 = vmatprep.subr.mxu0 0.0
    %2120 = vmatpush1.xpose.msra.mxu0 0.0
    %2121 = vmatprep.subr.mxu0 0.0
    %2122 = vmatpush1.xpose.msra.mxu0 0.0
    %2123 = vmatprep.subr.mxu0 0.0
    %2124 = vmatpush1.xpose.msra.mxu0 0.0
    %2125 = vmatprep.subr.mxu0 0.0
    %2126 = vmatpush1.xpose.msra.mxu0 0.0
    %2127 = vmatprep.subr.mxu0 0.0
    %2128 = vmatpush1.xpose.msra.mxu0 0.0
    %2129 = vmatprep.subr.mxu0 0.0
    %2130 = vmatpush1.xpose.msra.mxu0 0.0
    %2131 = vmatprep.mubr.f32.mxu0 0.0
    %2132 = vmatmul.mubr.f32.gmra.mrb[0].mxu0 %v841
    %v2133 = vpop.f32.mrb[0].mxu0
    %v2134 = vadd.f32 0.0, %v2133
    %v2135 = vpop.f32.mrb[0].mxu0
    %2136 = vmatprep.mubr.f32.mxu0 0.0
    %2137 = vmatmul.mubr.f32.gmra.mrb[0].mxu0 %v844
    %v2138 = vpop.f32.mrb[0].mxu0
    %v2139 = vadd.f32 0.0, %v2138
    %v2140 = vpop.f32.mrb[0].mxu0
    %2141 = vmatprep.mubr.f32.mxu0 0.0
    %2142 = vmatmul.mubr.f32.gmra.mrb[0].mxu0 %v847
    %v2143 = vpop.f32.mrb[0].mxu0
    %v2144 = vadd.f32 0.0, %v2143
    %v2145 = vpop.f32.mrb[0].mxu0
    %2146 = vmatprep.mubr.f32.mxu0 0.0
    %2147 = vmatmul.mubr.f32.gmra.mrb[0].mxu0 %v850
    %v2148 = vpop.f32.mrb[0].mxu0
    %v2149 = vadd.f32 0.0, %v2148
    %v2150 = vpop.f32.mrb[0].mxu0
    %2151 = vmatprep.mubr.f32.mxu0 0.0
    %2152 = vmatmul.mubr.f32.gmra.mrb[0].mxu0 %v853
    %v2153 = vpop.f32.mrb[0].mxu0
    %v2154 = vadd.f32 0.0, %v2153
    %v2155 = vpop.f32.mrb[0].mxu0
    %2156 = vmatprep.mubr.f32.mxu0 0.0
    %2157 = vmatmul.mubr.f32.gmra.mrb[0].mxu0 %v856
    %v2158 = vpop.f32.mrb[0].mxu0
    %v2159 = vadd.f32 0.0, %v2158
    %v2160 = vpop.f32.mrb[0].mxu0
    %2161 = vmatprep.mubr.f32.mxu0 0.0
    %2162 = vmatmul.mubr.f32.gmra.mrb[0].mxu0 %v859
    %v2163 = vpop.f32.mrb[0].mxu0
    %v2164 = vadd.f32 0.0, %v2163
    %v2165 = vpop.f32.mrb[0].mxu0
    %2166 = vdwg.mxu0
    %v2167 = vsel %vm975, %v2134, -inf
    %2168 = vmax.xlane.f32.xlu0 %v2167
    %v2169 = vpop.xlane.xlu0 %2168
    %v2170 = vsel %vm975, %v2139, -inf
    %2171 = vmax.xlane.f32.xlu0 %v2170
    %v2172 = vpop.xlane.xlu0 %2171
    %v2173 = vsel %vm975, %v2144, -inf
    %2174 = vmax.xlane.f32.xlu0 %v2173
    %v2175 = vpop.xlane.xlu0 %2174
    %v2176 = vsel %vm975, %v2149, -inf
    %2177 = vmax.xlane.f32.xlu0 %v2176
    %v2178 = vpop.xlane.xlu0 %2177
    %v2179 = vsel %vm975, %v2154, -inf
    %2180 = vmax.xlane.f32.xlu0 %v2179
    %v2181 = vpop.xlane.xlu0 %2180
    %v2182 = vsel %vm975, %v2159, -inf
    %2183 = vmax.xlane.f32.xlu0 %v2182
    %v2184 = vpop.xlane.xlu0 %2183
    %v2185 = vsel %vm994, %v2164, -inf
    %2186 = vmax.xlane.f32.xlu0 %v2185
    %v2187 = vpop.xlane.xlu0 %2186
    %v2188 = vsub.f32 %v2134, %v2169
    %v2189 = vsub.f32 %v2139, %v2172
    %v2190 = vsub.f32 %v2144, %v2175
    %v2191 = vsub.f32 %v2149, %v2178
    %v2192 = vsub.f32 %v2154, %v2181
    %v2193 = vsub.f32 %v2159, %v2184
    %v2194 = vsub.f32 %v2164, %v2187
    %v2195 = vmul.f32 %v2188, 1.442695
    %v2196 = vpow.pop %v2195
    %v2197 = vmul.f32 %v2189, 1.442695
    %v2198 = vpow.pop %v2197
    %v2199 = vmul.f32 %v2190, 1.442695
    %v2200 = vpow.pop %v2199
    %v2201 = vmul.f32 %v2191, 1.442695
    %v2202 = vpow.pop %v2201
    %v2203 = vmul.f32 %v2192, 1.442695
    %v2204 = vpow.pop %v2203
    %v2205 = vmul.f32 %v2193, 1.442695
    %v2206 = vpow.pop %v2205
    %v2207 = vmul.f32 %v2194, 1.442695
    %v2208 = vpow.pop %v2207
    %v2209 = vmul.f32 %v2196, %v521
    %v2210 = vmul.f32 %v2198, %v522
    %v2211 = vmul.f32 %v2200, %v523
    %v2212 = vmul.f32 %v2202, %v524
    %v2213 = vmul.f32 %v2204, %v525
    %v2214 = vmul.f32 %v2206, %v526
    %v2215 = vmul.f32 %v2208, %v527
    %v2216 = vsel %vm975, %v2209, 0.0
    %2217 = vadd.xlane.f32.xlu0 %v2216
    %v2218 = vpop.xlane.xlu0 %2217
    %v2219 = vsel %vm975, %v2210, 0.0
    %2220 = vadd.xlane.f32.xlu0 %v2219
    %v2221 = vpop.xlane.xlu0 %2220
    %v2222 = vsel %vm975, %v2211, 0.0
    %2223 = vadd.xlane.f32.xlu0 %v2222
    %v2224 = vpop.xlane.xlu0 %2223
    %v2225 = vsel %vm975, %v2212, 0.0
    %2226 = vadd.xlane.f32.xlu0 %v2225
    %v2227 = vpop.xlane.xlu0 %2226
    %v2228 = vsel %vm975, %v2213, 0.0
    %2229 = vadd.xlane.f32.xlu0 %v2228
    %v2230 = vpop.xlane.xlu0 %2229
    %v2231 = vsel %vm975, %v2214, 0.0
    %2232 = vadd.xlane.f32.xlu0 %v2231
    %v2233 = vpop.xlane.xlu0 %2232
    %v2234 = vsel %vm994, %v2215, 0.0
    %2235 = vadd.xlane.f32.xlu0 %v2234
    %v2236 = vpop.xlane.xlu0 %2235
    %v2237 = vrcp.pop %v2218
    %v2238 = vrcp.pop %v2221
    %v2239 = vrcp.pop %v2224
    %v2240 = vrcp.pop %v2227
    %v2241 = vrcp.pop %v2230
    %v2242 = vrcp.pop %v2233
    %v2243 = vrcp.pop %v2236
    %v2244 = vmul.f32 %v2209, %v2237
    %v2245 = vmul.f32 %v2210, %v2238
    %v2246 = vmul.f32 %v2211, %v2239
    %v2247 = vmul.f32 %v2212, %v2240
    %v2248 = vmul.f32 %v2213, %v2241
    %v2249 = vmul.f32 %v2214, %v2242
    %v2250 = vmul.f32 %v2215, %v2243
    %2258 = vrot.lane.b32.xlu0 %v2025, 96
    %v2259 = vpop.permute.xlu0 %2258
    %2260 = vrot.lane.b32.xlu0 %v2026, 96
    %v2261 = vpop.permute.xlu0 %2260
    %2262 = vrot.lane.b32.xlu0 %v2027, 96
    %v2263 = vpop.permute.xlu0 %2262
    %2264 = vrot.lane.b32.xlu0 %v2028, 96
    %v2265 = vpop.permute.xlu0 %2264
    %2266 = vrot.lane.b32.xlu0 %v2029, 96
    %v2267 = vpop.permute.xlu0 %2266
    %2268 = vrot.lane.b32.xlu0 %v2030, 96
    %v2269 = vpop.permute.xlu0 %2268
    %2270 = vrot.lane.b32.xlu0 %v2031, 96
    %v2271 = vpop.permute.xlu0 %2270
    %v2279 = vsel %vm975, %v2244, 0
    %v2282 = vsel %vm975, %v2245, 0
    %v2285 = vsel %vm975, %v2246, 0
    %v2288 = vsel %vm975, %v2247, 0
    %v2291 = vsel %vm975, %v2248, 0
    %v2294 = vsel %vm975, %v2249, 0
    %v2297 = vsel %vm975, %v2250, 0
    %v2299 = vsel %vm1353, %v2271, 0
    %2301 = vmatprep.subr.mxu0 0.0
    %2302 = vmatpush1.msra.mxu0 %v2259
    %2303 = vmatprep.subr.mxu0 0.0
    %2304 = vmatpush1.msra.mxu0 %v2261
    %2305 = vmatprep.subr.mxu0 0.0
    %2306 = vmatpush1.msra.mxu0 %v2263
    %2307 = vmatprep.subr.mxu0 0.0
    %2308 = vmatpush1.msra.mxu0 %v2265
    %2309 = vmatprep.subr.mxu0 0.0
    %2310 = vmatpush1.msra.mxu0 %v2267
    %2311 = vmatprep.subr.mxu0 0.0
    %2312 = vmatpush1.msra.mxu0 %v2269
    %2313 = vmatprep.subr.mxu0 0.0
    %2314 = vmatpush1.msra.mxu0 %v2299
    %2315 = vmatprep.subr.mxu0 0.0
    %2316 = vmatpush1.msra.mxu0 0.0
    %2317 = vmatprep.subr.mxu0 0.0
    %2318 = vmatpush1.msra.mxu0 0.0
    %2319 = vmatprep.subr.mxu0 0.0
    %2320 = vmatpush1.msra.mxu0 0.0
    %2321 = vmatprep.subr.mxu0 0.0
    %2322 = vmatpush1.msra.mxu0 0.0
    %2323 = vmatprep.subr.mxu0 0.0
    %2324 = vmatpush1.msra.mxu0 0.0
    %2325 = vmatprep.subr.mxu0 0.0
    %2326 = vmatpush1.msra.mxu0 0.0
    %2327 = vmatprep.subr.mxu0 0.0
    %2328 = vmatpush1.msra.mxu0 0.0
    %2329 = vmatprep.subr.mxu0 0.0
    %2330 = vmatpush1.msra.mxu0 0.0
    %2331 = vmatprep.subr.mxu0 0.0
    %2332 = vmatpush1.msra.mxu0 0.0
    %2333 = vmatprep.subr.mxu0 0.0
    %2334 = vmatpush1.msra.mxu0 0.0
    %2335 = vmatprep.subr.mxu0 0.0
    %2336 = vmatpush1.msra.mxu0 0.0
    %2337 = vmatprep.subr.mxu0 0.0
    %2338 = vmatpush1.msra.mxu0 0.0
    %2339 = vmatprep.subr.mxu0 0.0
    %2340 = vmatpush1.msra.mxu0 0.0
    %2341 = vmatprep.subr.mxu0 0.0
    %2342 = vmatpush1.msra.mxu0 0.0
    %2343 = vmatprep.subr.mxu0 0.0
    %2344 = vmatpush1.msra.mxu0 0.0
    %2345 = vmatprep.subr.mxu0 0.0
    %2346 = vmatpush1.msra.mxu0 0.0
    %2347 = vmatprep.subr.mxu0 0.0
    %2348 = vmatpush1.msra.mxu0 0.0
    %2349 = vmatprep.subr.mxu0 0.0
    %2350 = vmatpush1.msra.mxu0 0.0
    %2351 = vmatprep.subr.mxu0 0.0
    %2352 = vmatpush1.msra.mxu0 0.0
    %2353 = vmatprep.subr.mxu0 0.0
    %2354 = vmatpush1.msra.mxu0 0.0
    %2355 = vmatprep.subr.mxu0 0.0
    %2356 = vmatpush1.msra.mxu0 0.0
    %2357 = vmatprep.subr.mxu0 0.0
    %2358 = vmatpush1.msra.mxu0 0.0
    %2359 = vmatprep.subr.mxu0 0.0
    %2360 = vmatpush1.msra.mxu0 0.0
    %2361 = vmatprep.subr.mxu0 0.0
    %2362 = vmatpush1.msra.mxu0 0.0
    %2363 = vmatprep.subr.mxu0 0.0
    %2364 = vmatpush1.msra.mxu0 0.0
    %2365 = vmatprep.mubr.f32.mxu0 0.0
    %2366 = vmatmul.mubr.f32.gmra.mrb[0].mxu0 %v2279
    %v2367 = vpop.f32.mrb[0].mxu0
    %v2368 = vadd.f32 0.0, %v2367
    %v2369 = vpop.f32.mrb[0].mxu0
    %2370 = vmatprep.mubr.f32.mxu0 0.0
    %2371 = vmatmul.mubr.f32.gmra.mrb[0].mxu0 %v2282
    %v2372 = vpop.f32.mrb[0].mxu0
    %v2373 = vadd.f32 0.0, %v2372
    %v2374 = vpop.f32.mrb[0].mxu0
    %2375 = vmatprep.mubr.f32.mxu0 0.0
    %2376 = vmatmul.mubr.f32.gmra.mrb[0].mxu0 %v2285
    %v2377 = vpop.f32.mrb[0].mxu0
    %v2378 = vadd.f32 0.0, %v2377
    %v2379 = vpop.f32.mrb[0].mxu0
    %2380 = vmatprep.mubr.f32.mxu0 0.0
    %2381 = vmatmul.mubr.f32.gmra.mrb[0].mxu0 %v2288
    %v2382 = vpop.f32.mrb[0].mxu0
    %v2383 = vadd.f32 0.0, %v2382
    %v2384 = vpop.f32.mrb[0].mxu0
    %2385 = vmatprep.mubr.f32.mxu0 0.0
    %2386 = vmatmul.mubr.f32.gmra.mrb[0].mxu0 %v2291
    %v2387 = vpop.f32.mrb[0].mxu0
    %v2388 = vadd.f32 0.0, %v2387
    %v2389 = vpop.f32.mrb[0].mxu0
    %2390 = vmatprep.mubr.f32.mxu0 0.0
    %2391 = vmatmul.mubr.f32.gmra.mrb[0].mxu0 %v2294
    %v2392 = vpop.f32.mrb[0].mxu0
    %v2393 = vadd.f32 0.0, %v2392
    %v2394 = vpop.f32.mrb[0].mxu0
    %2395 = vmatprep.mubr.f32.mxu0 0.0
    %2396 = vmatmul.mubr.f32.gmra.mrb[0].mxu0 %v2297
    %v2397 = vpop.f32.mrb[0].mxu0
    %v2398 = vadd.f32 0.0, %v2397
    %v2399 = vpop.f32.mrb[0].mxu0
    %2400 = vdwg.mxu0
    %v2401 = vadd.f32 %v2000, %v2368
    %v2402 = vadd.f32 %v2001, %v2373
    %v2403 = vadd.f32 %v2002, %v2378
    %v2404 = vadd.f32 %v2003, %v2383
    %v2405 = vadd.f32 %v2004, %v2388
    %v2406 = vadd.f32 %v2005, %v2393
    %v2407 = vadd.f32 %v2006, %v2398
    %v2409 = vsel %vm539, %v2401, 0
    %v2412 = vsel %vm539, %v2402, 0
    %v2415 = vsel %vm539, %v2403, 0
    %v2418 = vsel %vm539, %v2404, 0
    %v2421 = vsel %vm539, %v2405, 0
    %v2424 = vsel %vm539, %v2406, 0
    %v2427 = vsel %vm539, %v2407, 0
    %2429 = vmatprep.subr.mxu0 0.0
    %2430 = vmatpush1.msra.mxu0 %v531
    %2431 = vmatprep.subr.mxu0 0.0
    %2432 = vmatpush1.msra.mxu0 %v532
    %2433 = vmatprep.subr.mxu0 0.0
    %2434 = vmatpush1.msra.mxu0 0.0
    %2435 = vmatprep.subr.mxu0 0.0
    %2436 = vmatpush1.msra.mxu0 0.0
    %2437 = vmatprep.subr.mxu0 0.0
    %2438 = vmatpush1.msra.mxu0 0.0
    %2439 = vmatprep.subr.mxu0 0.0
    %2440 = vmatpush1.msra.mxu0 0.0
    %2441 = vmatprep.subr.mxu0 0.0
    %2442 = vmatpush1.msra.mxu0 0.0
    %2443 = vmatprep.subr.mxu0 0.0
    %2444 = vmatpush1.msra.mxu0 0.0
    %2445 = vmatprep.subr.mxu0 0.0
    %2446 = vmatpush1.msra.mxu0 0.0
    %2447 = vmatprep.subr.mxu0 0.0
    %2448 = vmatpush1.msra.mxu0 0.0
    %2449 = vmatprep.subr.mxu0 0.0
    %2450 = vmatpush1.msra.mxu0 0.0
    %2451 = vmatprep.subr.mxu0 0.0
    %2452 = vmatpush1.msra.mxu0 0.0
    %2453 = vmatprep.subr.mxu0 0.0
    %2454 = vmatpush1.msra.mxu0 0.0
    %2455 = vmatprep.subr.mxu0 0.0
    %2456 = vmatpush1.msra.mxu0 0.0
    %2457 = vmatprep.subr.mxu0 0.0
    %2458 = vmatpush1.msra.mxu0 0.0
    %2459 = vmatprep.subr.mxu0 0.0
    %2460 = vmatpush1.msra.mxu0 0.0
    %2461 = vmatprep.subr.mxu0 0.0
    %2462 = vmatpush1.msra.mxu0 0.0
    %2463 = vmatprep.subr.mxu0 0.0
    %2464 = vmatpush1.msra.mxu0 0.0
    %2465 = vmatprep.subr.mxu0 0.0
    %2466 = vmatpush1.msra.mxu0 0.0
    %2467 = vmatprep.subr.mxu0 0.0
    %2468 = vmatpush1.msra.mxu0 0.0
    %2469 = vmatprep.subr.mxu0 0.0
    %2470 = vmatpush1.msra.mxu0 0.0
    %2471 = vmatprep.subr.mxu0 0.0
    %2472 = vmatpush1.msra.mxu0 0.0
    %2473 = vmatprep.subr.mxu0 0.0
    %2474 = vmatpush1.msra.mxu0 0.0
    %2475 = vmatprep.subr.mxu0 0.0
    %2476 = vmatpush1.msra.mxu0 0.0
    %2477 = vmatprep.subr.mxu0 0.0
    %2478 = vmatpush1.msra.mxu0 0.0
    %2479 = vmatprep.subr.mxu0 0.0
    %2480 = vmatpush1.msra.mxu0 0.0
    %2481 = vmatprep.subr.mxu0 0.0
    %2482 = vmatpush1.msra.mxu0 0.0
    %2483 = vmatprep.subr.mxu0 0.0
    %2484 = vmatpush1.msra.mxu0 0.0
    %2485 = vmatprep.subr.mxu0 0.0
    %2486 = vmatpush1.msra.mxu0 0.0
    %2487 = vmatprep.subr.mxu0 0.0
    %2488 = vmatpush1.msra.mxu0 0.0
    %2489 = vmatprep.subr.mxu0 0.0
    %2490 = vmatpush1.msra.mxu0 0.0
    %2491 = vmatprep.subr.mxu0 0.0
    %2492 = vmatpush1.msra.mxu0 0.0
    %2493 = vmatprep.mubr.f32.mxu0 0.0
    %2494 = vmatmul.mubr.f32.gmra.mrb[0].mxu0 %v2409
    %v2495 = vpop.f32.mrb[0].mxu0
    %v2496 = vadd.f32 0.0, %v2495
    %v2497 = vpop.f32.mrb[0].mxu0
    %2498 = vmatprep.mubr.f32.mxu0 0.0
    %2499 = vmatmul.mubr.f32.gmra.mrb[0].mxu0 %v2412
    %v2500 = vpop.f32.mrb[0].mxu0
    %v2501 = vadd.f32 0.0, %v2500
    %v2502 = vpop.f32.mrb[0].mxu0
    %2503 = vmatprep.mubr.f32.mxu0 0.0
    %2504 = vmatmul.mubr.f32.gmra.mrb[0].mxu0 %v2415
    %v2505 = vpop.f32.mrb[0].mxu0
    %v2506 = vadd.f32 0.0, %v2505
    %v2507 = vpop.f32.mrb[0].mxu0
    %2508 = vmatprep.mubr.f32.mxu0 0.0
    %2509 = vmatmul.mubr.f32.gmra.mrb[0].mxu0 %v2418
    %v2510 = vpop.f32.mrb[0].mxu0
    %v2511 = vadd.f32 0.0, %v2510
    %v2512 = vpop.f32.mrb[0].mxu0
    %2513 = vmatprep.mubr.f32.mxu0 0.0
    %2514 = vmatmul.mubr.f32.gmra.mrb[0].mxu0 %v2421
    %v2515 = vpop.f32.mrb[0].mxu0
    %v2516 = vadd.f32 0.0, %v2515
    %v2517 = vpop.f32.mrb[0].mxu0
    %2518 = vmatprep.mubr.f32.mxu0 0.0
    %2519 = vmatmul.mubr.f32.gmra.mrb[0].mxu0 %v2424
    %v2520 = vpop.f32.mrb[0].mxu0
    %v2521 = vadd.f32 0.0, %v2520
    %v2522 = vpop.f32.mrb[0].mxu0
    %2523 = vmatprep.mubr.f32.mxu0 0.0
    %2524 = vmatmul.mubr.f32.gmra.mrb[0].mxu0 %v2427
    %v2525 = vpop.f32.mrb[0].mxu0
    %v2526 = vadd.f32 0.0, %v2525
    %v2527 = vpop.f32.mrb[0].mxu0
    %2528 = vdwg.mxu0
    %v2529 = vadd.f32 %v278, %v2496
    %v2530 = vadd.f32 %v283, %v2501
    %v2531 = vadd.f32 %v288, %v2506
    %v2532 = vadd.f32 %v519, %v2511
    %v2533 = vadd.f32 %v510, %v2516
    %v2534 = vadd.f32 %v512, %v2521
    %v2535 = vadd.f32 %v514, %v2526
    %v2536 = vlaneseq
    %v2537 = vshrl.u32 %v2536, 7
    %v2538 = vsub.s32 3, %v2537
    %v2539 = vrot.slane %v528, %v2538
    %v2540 = vadd.f32 %v2529, %v2539
    %v2541 = vadd.f32 %v2530, %v2539
    %v2542 = vadd.f32 %v2531, %v2539
    %v2543 = vadd.f32 %v2532, %v2539
    %v2544 = vadd.f32 %v2533, %v2539
    %v2545 = vadd.f32 %v2534, %v2539
    %v2546 = vadd.f32 %v2535, %v2539
    %v2547 = vsel %vm539, %v2540, 0.0
    %2548 = vadd.xlane.f32.xlu0 %v2547
    %v2549 = vpop.xlane.xlu0 %2548
    %v2550 = vsel %vm539, %v2541, 0.0
    %2551 = vadd.xlane.f32.xlu0 %v2550
    %v2552 = vpop.xlane.xlu0 %2551
    %v2553 = vsel %vm539, %v2542, 0.0
    %2554 = vadd.xlane.f32.xlu0 %v2553
    %v2555 = vpop.xlane.xlu0 %2554
    %v2556 = vsel %vm539, %v2543, 0.0
    %2557 = vadd.xlane.f32.xlu0 %v2556
    %v2558 = vpop.xlane.xlu0 %2557
    %v2559 = vsel %vm539, %v2544, 0.0
    %2560 = vadd.xlane.f32.xlu0 %v2559
    %v2561 = vpop.xlane.xlu0 %2560
    %v2562 = vsel %vm539, %v2545, 0.0
    %2563 = vadd.xlane.f32.xlu0 %v2562
    %v2564 = vpop.xlane.xlu0 %2563
    %v2565 = vsel %vm558, %v2546, 0.0
    %2566 = vadd.xlane.f32.xlu0 %v2565
    %v2567 = vpop.xlane.xlu0 %2566
    %v2568 = vmul.f32 %v2549, %v562
    %v2569 = vmul.f32 %v2552, %v562
    %v2570 = vmul.f32 %v2555, %v562
    %v2571 = vmul.f32 %v2558, %v562
    %v2572 = vmul.f32 %v2561, %v562
    %v2573 = vmul.f32 %v2564, %v562
    %v2574 = vmul.f32 %v2567, %v562
    %v2575 = vmul.f32 %v2540, %v2540
    %v2576 = vmul.f32 %v2541, %v2541
    %v2577 = vmul.f32 %v2542, %v2542
    %v2578 = vmul.f32 %v2543, %v2543
    %v2579 = vmul.f32 %v2544, %v2544
    %v2580 = vmul.f32 %v2545, %v2545
    %v2581 = vmul.f32 %v2546, %v2546
    %v2582 = vsel %vm539, %v2575, 0.0
    %2583 = vadd.xlane.f32.xlu0 %v2582
    %v2584 = vpop.xlane.xlu0 %2583
    %v2585 = vsel %vm539, %v2576, 0.0
    %2586 = vadd.xlane.f32.xlu0 %v2585
    %v2587 = vpop.xlane.xlu0 %2586
    %v2588 = vsel %vm539, %v2577, 0.0
    %2589 = vadd.xlane.f32.xlu0 %v2588
    %v2590 = vpop.xlane.xlu0 %2589
    %v2591 = vsel %vm539, %v2578, 0.0
    %2592 = vadd.xlane.f32.xlu0 %v2591
    %v2593 = vpop.xlane.xlu0 %2592
    %v2594 = vsel %vm539, %v2579, 0.0
    %2595 = vadd.xlane.f32.xlu0 %v2594
    %v2596 = vpop.xlane.xlu0 %2595
    %v2597 = vsel %vm539, %v2580, 0.0
    %2598 = vadd.xlane.f32.xlu0 %v2597
    %v2599 = vpop.xlane.xlu0 %2598
    %v2600 = vsel %vm558, %v2581, 0.0
    %2601 = vadd.xlane.f32.xlu0 %v2600
    %v2602 = vpop.xlane.xlu0 %2601
    %v2603 = vmul.f32 %v2584, %v562
    %v2604 = vmul.f32 %v2587, %v562
    %v2605 = vmul.f32 %v2590, %v562
    %v2606 = vmul.f32 %v2593, %v562
    %v2607 = vmul.f32 %v2596, %v562
    %v2608 = vmul.f32 %v2599, %v562
    %v2609 = vmul.f32 %v2602, %v562
    %v2610 = vsub.f32 %v2540, %v2568
    %v2611 = vsub.f32 %v2541, %v2569
    %v2612 = vsub.f32 %v2542, %v2570
    %v2613 = vsub.f32 %v2543, %v2571
    %v2614 = vsub.f32 %v2544, %v2572
    %v2615 = vsub.f32 %v2545, %v2573
    %v2616 = vsub.f32 %v2546, %v2574
    %v2617 = vmul.f32 %v2568, %v2568
    %v2618 = vmul.f32 %v2569, %v2569
    %v2619 = vmul.f32 %v2570, %v2570
    %v2620 = vmul.f32 %v2571, %v2571
    %v2621 = vmul.f32 %v2572, %v2572
    %v2622 = vmul.f32 %v2573, %v2573
    %v2623 = vmul.f32 %v2574, %v2574
    %v2624 = vsub.f32 %v2603, %v2617
    %v2625 = vsub.f32 %v2604, %v2618
    %v2626 = vsub.f32 %v2605, %v2619
    %v2627 = vsub.f32 %v2606, %v2620
    %v2628 = vsub.f32 %v2607, %v2621
    %v2629 = vsub.f32 %v2608, %v2622
    %v2630 = vsub.f32 %v2609, %v2623
    %v2631 = vadd.f32 %v2624, 1e-05
    %v2632 = vadd.f32 %v2625, 1e-05
    %v2633 = vadd.f32 %v2626, 1e-05
    %v2634 = vadd.f32 %v2627, 1e-05
    %v2635 = vadd.f32 %v2628, 1e-05
    %v2636 = vadd.f32 %v2629, 1e-05
    %v2637 = vadd.f32 %v2630, 1e-05
    %v2638 = vrsqrt.pop %v2631
    %v2639 = vrsqrt.pop %v2632
    %v2640 = vrsqrt.pop %v2633
    %v2641 = vrsqrt.pop %v2634
    %v2642 = vrsqrt.pop %v2635
    %v2643 = vrsqrt.pop %v2636
    %v2644 = vrsqrt.pop %v2637
    %v2645 = vmul.f32 %v2610, %v2638
    %v2646 = vmul.f32 %v2611, %v2639
    %v2647 = vmul.f32 %v2612, %v2640
    %v2648 = vmul.f32 %v2613, %v2641
    %v2649 = vmul.f32 %v2614, %v2642
    %v2650 = vmul.f32 %v2615, %v2643
    %v2651 = vmul.f32 %v2616, %v2644
    %v2652 = vlaneseq
    %v2653 = vshrl.u32 %v2652, 7
    %v2654 = vsub.s32 4, %v2653
    %v2655 = vrot.slane %v528, %v2654
    %v2656 = vmul.f32 %v2645, %v2655
    %v2657 = vmul.f32 %v2646, %v2655
    %v2658 = vmul.f32 %v2647, %v2655
    %v2659 = vmul.f32 %v2648, %v2655
    %v2660 = vmul.f32 %v2649, %v2655
    %v2661 = vmul.f32 %v2650, %v2655
    %v2662 = vmul.f32 %v2651, %v2655
    %v2663 = vlaneseq
    %v2664 = vshrl.u32 %v2663, 7
    %v2665 = vsub.s32 5, %v2664
    %v2666 = vrot.slane %v528, %v2665
    %v2667 = vadd.f32 %v2656, %v2666
    %v2668 = vadd.f32 %v2657, %v2666
    %v2669 = vadd.f32 %v2658, %v2666
    %v2670 = vadd.f32 %v2659, %v2666
    %v2671 = vadd.f32 %v2660, %v2666
    %v2672 = vadd.f32 %v2661, %v2666
    %v2673 = vadd.f32 %v2662, %v2666
    %v2674 = vlaneseq
    %v2675 = vshrl.u32 %v2674, 7
    %v2676 = vsub.s32 6, %v2675
    %v2677 = vrot.slane %v528, %v2676
    %v2679 = vsel %vm539, %v2667, 0
    %v2682 = vsel %vm539, %v2668, 0
    %v2685 = vsel %vm539, %v2669, 0
    %v2688 = vsel %vm539, %v2670, 0
    %v2691 = vsel %vm539, %v2671, 0
    %v2694 = vsel %vm539, %v2672, 0
    %v2697 = vsel %vm539, %v2673, 0
    %2699 = vmatprep.subr.mxu0 0.0
    %2700 = vmatpush1.msra.mxu0 %v533
    %2701 = vmatprep.subr.mxu0 0.0
    %2702 = vmatpush1.msra.mxu0 %v534
    %2703 = vmatprep.subr.mxu0 0.0
    %2704 = vmatpush1.msra.mxu0 0.0
    %2705 = vmatprep.subr.mxu0 0.0
    %2706 = vmatpush1.msra.mxu0 0.0
    %2707 = vmatprep.subr.mxu0 0.0
    %2708 = vmatpush1.msra.mxu0 0.0
    %2709 = vmatprep.subr.mxu0 0.0
    %2710 = vmatpush1.msra.mxu0 0.0
    %2711 = vmatprep.subr.mxu0 0.0
    %2712 = vmatpush1.msra.mxu0 0.0
    %2713 = vmatprep.subr.mxu0 0.0
    %2714 = vmatpush1.msra.mxu0 0.0
    %2715 = vmatprep.subr.mxu0 0.0
    %2716 = vmatpush1.msra.mxu0 0.0
    %2717 = vmatprep.subr.mxu0 0.0
    %2718 = vmatpush1.msra.mxu0 0.0
    %2719 = vmatprep.subr.mxu0 0.0
    %2720 = vmatpush1.msra.mxu0 0.0
    %2721 = vmatprep.subr.mxu0 0.0
    %2722 = vmatpush1.msra.mxu0 0.0
    %2723 = vmatprep.subr.mxu0 0.0
    %2724 = vmatpush1.msra.mxu0 0.0
    %2725 = vmatprep.subr.mxu0 0.0
    %2726 = vmatpush1.msra.mxu0 0.0
    %2727 = vmatprep.subr.mxu0 0.0
    %2728 = vmatpush1.msra.mxu0 0.0
    %2729 = vmatprep.subr.mxu0 0.0
    %2730 = vmatpush1.msra.mxu0 0.0
    %2731 = vmatprep.subr.mxu0 0.0
    %2732 = vmatpush1.msra.mxu0 0.0
    %2733 = vmatprep.subr.mxu0 0.0
    %2734 = vmatpush1.msra.mxu0 0.0
    %2735 = vmatprep.subr.mxu0 0.0
    %2736 = vmatpush1.msra.mxu0 0.0
    %2737 = vmatprep.subr.mxu0 0.0
    %2738 = vmatpush1.msra.mxu0 0.0
    %2739 = vmatprep.subr.mxu0 0.0
    %2740 = vmatpush1.msra.mxu0 0.0
    %2741 = vmatprep.subr.mxu0 0.0
    %2742 = vmatpush1.msra.mxu0 0.0
    %2743 = vmatprep.subr.mxu0 0.0
    %2744 = vmatpush1.msra.mxu0 0.0
    %2745 = vmatprep.subr.mxu0 0.0
    %2746 = vmatpush1.msra.mxu0 0.0
    %2747 = vmatprep.subr.mxu0 0.0
    %2748 = vmatpush1.msra.mxu0 0.0
    %2749 = vmatprep.subr.mxu0 0.0
    %2750 = vmatpush1.msra.mxu0 0.0
    %2751 = vmatprep.subr.mxu0 0.0
    %2752 = vmatpush1.msra.mxu0 0.0
    %2753 = vmatprep.subr.mxu0 0.0
    %2754 = vmatpush1.msra.mxu0 0.0
    %2755 = vmatprep.subr.mxu0 0.0
    %2756 = vmatpush1.msra.mxu0 0.0
    %2757 = vmatprep.subr.mxu0 0.0
    %2758 = vmatpush1.msra.mxu0 0.0
    %2759 = vmatprep.subr.mxu0 0.0
    %2760 = vmatpush1.msra.mxu0 0.0
    %2761 = vmatprep.subr.mxu0 0.0
    %2762 = vmatpush1.msra.mxu0 0.0
    %2763 = vmatprep.mubr.f32.mxu0 0.0
    %2764 = vmatmul.mubr.f32.gmra.mrb[0].mxu0 %v2679
    %v2765 = vpop.f32.mrb[0].mxu0
    %v2766 = vadd.f32 %v2677, %v2765
    %v2767 = vpop.f32.mrb[0].mxu0
    %2768 = vmatprep.mubr.f32.mxu0 0.0
    %2769 = vmatmul.mubr.f32.gmra.mrb[0].mxu0 %v2682
    %v2770 = vpop.f32.mrb[0].mxu0
    %v2771 = vadd.f32 %v2677, %v2770
    %v2772 = vpop.f32.mrb[0].mxu0
    %2773 = vmatprep.mubr.f32.mxu0 0.0
    %2774 = vmatmul.mubr.f32.gmra.mrb[0].mxu0 %v2685
    %v2775 = vpop.f32.mrb[0].mxu0
    %v2776 = vadd.f32 %v2677, %v2775
    %v2777 = vpop.f32.mrb[0].mxu0
    %2778 = vmatprep.mubr.f32.mxu0 0.0
    %2779 = vmatmul.mubr.f32.gmra.mrb[0].mxu0 %v2688
    %v2780 = vpop.f32.mrb[0].mxu0
    %v2781 = vadd.f32 %v2677, %v2780
    %v2782 = vpop.f32.mrb[0].mxu0
    %2783 = vmatprep.mubr.f32.mxu0 0.0
    %2784 = vmatmul.mubr.f32.gmra.mrb[0].mxu0 %v2691
    %v2785 = vpop.f32.mrb[0].mxu0
    %v2786 = vadd.f32 %v2677, %v2785
    %v2787 = vpop.f32.mrb[0].mxu0
    %2788 = vmatprep.mubr.f32.mxu0 0.0
    %2789 = vmatmul.mubr.f32.gmra.mrb[0].mxu0 %v2694
    %v2790 = vpop.f32.mrb[0].mxu0
    %v2791 = vadd.f32 %v2677, %v2790
    %v2792 = vpop.f32.mrb[0].mxu0
    %2793 = vmatprep.mubr.f32.mxu0 0.0
    %2794 = vmatmul.mubr.f32.gmra.mrb[0].mxu0 %v2697
    %v2795 = vpop.f32.mrb[0].mxu0
    %v2796 = vadd.f32 %v2677, %v2795
    %v2797 = vpop.f32.mrb[0].mxu0
    %2798 = vdwg.mxu0
    %v2799 = vmax.f32 %v2766, 0.0
    %v2800 = vmax.f32 %v2771, 0.0
    %v2801 = vmax.f32 %v2776, 0.0
    %v2802 = vmax.f32 %v2781, 0.0
    %v2803 = vmax.f32 %v2786, 0.0
    %v2804 = vmax.f32 %v2791, 0.0
    %v2805 = vmax.f32 %v2796, 0.0
    %v2807 = vsel %vm100, %v2799, 0
    %v2810 = vsel %vm100, %v2800, 0
    %v2813 = vsel %vm100, %v2801, 0
    %v2816 = vsel %vm100, %v2802, 0
    %v2819 = vsel %vm100, %v2803, 0
    %v2822 = vsel %vm100, %v2804, 0
    %v2825 = vsel %vm100, %v2805, 0
    %2827 = vmatprep.subr.mxu0 0.0
    %2828 = vmatpush1.msra.mxu0 %v535
    %2829 = vmatprep.subr.mxu0 0.0
    %2830 = vmatpush1.msra.mxu0 %v536
    %2831 = vmatprep.subr.mxu0 0.0
    %2832 = vmatpush1.msra.mxu0 %v537
    %2833 = vmatprep.subr.mxu0 0.0
    %2834 = vmatpush1.msra.mxu0 %v538
    %2835 = vmatprep.subr.mxu0 0.0
    %2836 = vmatpush1.msra.mxu0 0.0
    %2837 = vmatprep.subr.mxu0 0.0
    %2838 = vmatpush1.msra.mxu0 0.0
    %2839 = vmatprep.subr.mxu0 0.0
    %2840 = vmatpush1.msra.mxu0 0.0
    %2841 = vmatprep.subr.mxu0 0.0
    %2842 = vmatpush1.msra.mxu0 0.0
    %2843 = vmatprep.subr.mxu0 0.0
    %2844 = vmatpush1.msra.mxu0 0.0
    %2845 = vmatprep.subr.mxu0 0.0
    %2846 = vmatpush1.msra.mxu0 0.0
    %2847 = vmatprep.subr.mxu0 0.0
    %2848 = vmatpush1.msra.mxu0 0.0
    %2849 = vmatprep.subr.mxu0 0.0
    %2850 = vmatpush1.msra.mxu0 0.0
    %2851 = vmatprep.subr.mxu0 0.0
    %2852 = vmatpush1.msra.mxu0 0.0
    %2853 = vmatprep.subr.mxu0 0.0
    %2854 = vmatpush1.msra.mxu0 0.0
    %2855 = vmatprep.subr.mxu0 0.0
    %2856 = vmatpush1.msra.mxu0 0.0
    %2857 = vmatprep.subr.mxu0 0.0
    %2858 = vmatpush1.msra.mxu0 0.0
    %2859 = vmatprep.subr.mxu0 0.0
    %2860 = vmatpush1.msra.mxu0 0.0
    %2861 = vmatprep.subr.mxu0 0.0
    %2862 = vmatpush1.msra.mxu0 0.0
    %2863 = vmatprep.subr.mxu0 0.0
    %2864 = vmatpush1.msra.mxu0 0.0
    %2865 = vmatprep.subr.mxu0 0.0
    %2866 = vmatpush1.msra.mxu0 0.0
    %2867 = vmatprep.subr.mxu0 0.0
    %2868 = vmatpush1.msra.mxu0 0.0
    %2869 = vmatprep.subr.mxu0 0.0
    %2870 = vmatpush1.msra.mxu0 0.0
    %2871 = vmatprep.subr.mxu0 0.0
    %2872 = vmatpush1.msra.mxu0 0.0
    %2873 = vmatprep.subr.mxu0 0.0
    %2874 = vmatpush1.msra.mxu0 0.0
    %2875 = vmatprep.subr.mxu0 0.0
    %2876 = vmatpush1.msra.mxu0 0.0
    %2877 = vmatprep.subr.mxu0 0.0
    %2878 = vmatpush1.msra.mxu0 0.0
    %2879 = vmatprep.subr.mxu0 0.0
    %2880 = vmatpush1.msra.mxu0 0.0
    %2881 = vmatprep.subr.mxu0 0.0
    %2882 = vmatpush1.msra.mxu0 0.0
    %2883 = vmatprep.subr.mxu0 0.0
    %2884 = vmatpush1.msra.mxu0 0.0
    %2885 = vmatprep.subr.mxu0 0.0
    %2886 = vmatpush1.msra.mxu0 0.0
    %2887 = vmatprep.subr.mxu0 0.0
    %2888 = vmatpush1.msra.mxu0 0.0
    %2889 = vmatprep.subr.mxu0 0.0
    %2890 = vmatpush1.msra.mxu0 0.0
    %2891 = vmatprep.mubr.f32.mxu0 0.0
    %2892 = vmatmul.mubr.f32.gmra.mrb[0].mxu0 %v2807
    %v2893 = vpop.f32.mrb[0].mxu0
    %v2894 = vadd.f32 0.0, %v2893
    %v2895 = vpop.f32.mrb[0].mxu0
    %2896 = vmatprep.mubr.f32.mxu0 0.0
    %2897 = vmatmul.mubr.f32.gmra.mrb[0].mxu0 %v2810
    %v2898 = vpop.f32.mrb[0].mxu0
    %v2899 = vadd.f32 0.0, %v2898
    %v2900 = vpop.f32.mrb[0].mxu0
    %2901 = vmatprep.mubr.f32.mxu0 0.0
    %2902 = vmatmul.mubr.f32.gmra.mrb[0].mxu0 %v2813
    %v2903 = vpop.f32.mrb[0].mxu0
    %v2904 = vadd.f32 0.0, %v2903
    %v2905 = vpop.f32.mrb[0].mxu0
    %2906 = vmatprep.mubr.f32.mxu0 0.0
    %2907 = vmatmul.mubr.f32.gmra.mrb[0].mxu0 %v2816
    %v2908 = vpop.f32.mrb[0].mxu0
    %v2909 = vadd.f32 0.0, %v2908
    %v2910 = vpop.f32.mrb[0].mxu0
    %2911 = vmatprep.mubr.f32.mxu0 0.0
    %2912 = vmatmul.mubr.f32.gmra.mrb[0].mxu0 %v2819
    %v2913 = vpop.f32.mrb[0].mxu0
    %v2914 = vadd.f32 0.0, %v2913
    %v2915 = vpop.f32.mrb[0].mxu0
    %2916 = vmatprep.mubr.f32.mxu0 0.0
    %2917 = vmatmul.mubr.f32.gmra.mrb[0].mxu0 %v2822
    %v2918 = vpop.f32.mrb[0].mxu0
    %v2919 = vadd.f32 0.0, %v2918
    %v2920 = vpop.f32.mrb[0].mxu0
    %2921 = vmatprep.mubr.f32.mxu0 0.0
    %2922 = vmatmul.mubr.f32.gmra.mrb[0].mxu0 %v2825
    %v2923 = vpop.f32.mrb[0].mxu0
    %v2924 = vadd.f32 0.0, %v2923
    %v2925 = vpop.f32.mrb[0].mxu0
    %2926 = vdwg.mxu0
    %v2927 = vadd.f32 %v2540, %v2894
    %v2928 = vadd.f32 %v2541, %v2899
    %v2929 = vadd.f32 %v2542, %v2904
    %v2930 = vadd.f32 %v2543, %v2909
    %v2931 = vadd.f32 %v2544, %v2914
    %v2932 = vadd.f32 %v2545, %v2919
    %v2933 = vadd.f32 %v2546, %v2924
    %v2934 = vlaneseq
    %v2935 = vshrl.u32 %v2934, 7
    %v2936 = vsub.s32 7, %v2935
    %v2937 = vrot.slane %v528, %v2936
    %v2938 = vadd.f32 %v2927, %v2937
    %v2939 = vadd.f32 %v2928, %v2937
    %v2940 = vadd.f32 %v2929, %v2937
    %v2941 = vadd.f32 %v2930, %v2937
    %v2942 = vadd.f32 %v2931, %v2937
    %v2943 = vadd.f32 %v2932, %v2937
    %v2944 = vadd.f32 %v2933, %v2937
    %v2945 = vld [vmem:[#allocation6 + $0xf8] sm:$0xff]
    %v2946 = vld [vmem:[#allocation6 + $0x100] sm:$0xff]
    %v2947 = vld [vmem:[#allocation6 + $0x108] sm:$0xff]
    %v2948 = vld [vmem:[#allocation6 + $0x110] sm:$0xff]
    %v2949 = vld [vmem:[#allocation6 + $0x118] sm:$0xff]
    %v2950 = vld [vmem:[#allocation6 + $0x120] sm:$0xff]
    %v2951 = vld [vmem:[#allocation6 + $0x128] sm:$0xff]
    %v2952 = vld [vmem:[#allocation6 + $0x130] sm:$0xff]
    %v2953 = vld [vmem:[#allocation6 + $0x138] sm:$0xff]
    %v2954 = vld [vmem:[#allocation6 + $0x140] sm:$0xff]
    %v2955 = vld [vmem:[#allocation6 + $0x148] sm:$0xff]
    %v2956 = vsel %vm539, %v2938, 0.0
    %2957 = vadd.xlane.f32.xlu0 %v2956
    %v2958 = vpop.xlane.xlu0 %2957
    %v2959 = vsel %vm539, %v2939, 0.0
    %2960 = vadd.xlane.f32.xlu0 %v2959
    %v2961 = vpop.xlane.xlu0 %2960
    %v2962 = vsel %vm539, %v2940, 0.0
    %2963 = vadd.xlane.f32.xlu0 %v2962
    %v2964 = vpop.xlane.xlu0 %2963
    %v2965 = vsel %vm539, %v2941, 0.0
    %2966 = vadd.xlane.f32.xlu0 %v2965
    %v2967 = vpop.xlane.xlu0 %2966
    %v2968 = vsel %vm539, %v2942, 0.0
    %2969 = vadd.xlane.f32.xlu0 %v2968
    %v2970 = vpop.xlane.xlu0 %2969
    %v2971 = vsel %vm539, %v2943, 0.0
    %2972 = vadd.xlane.f32.xlu0 %v2971
    %v2973 = vpop.xlane.xlu0 %2972
    %v2974 = vsel %vm558, %v2944, 0.0
    %2975 = vadd.xlane.f32.xlu0 %v2974
    %v2976 = vpop.xlane.xlu0 %2975
    %v2977 = vmul.f32 %v2958, %v562
    %v2978 = vmul.f32 %v2961, %v562
    %v2979 = vmul.f32 %v2964, %v562
    %v2980 = vmul.f32 %v2967, %v562
    %v2981 = vmul.f32 %v2970, %v562
    %v2982 = vmul.f32 %v2973, %v562
    %v2983 = vmul.f32 %v2976, %v562
    %v2984 = vmul.f32 %v2938, %v2938
    %v2985 = vmul.f32 %v2939, %v2939
    %v2986 = vmul.f32 %v2940, %v2940
    %v2987 = vmul.f32 %v2941, %v2941
    %v2988 = vmul.f32 %v2942, %v2942
    %v2989 = vmul.f32 %v2943, %v2943
    %v2990 = vmul.f32 %v2944, %v2944
    %v2991 = vsel %vm539, %v2984, 0.0
    %2992 = vadd.xlane.f32.xlu0 %v2991
    %v2993 = vpop.xlane.xlu0 %2992
    %v2994 = vsel %vm539, %v2985, 0.0
    %2995 = vadd.xlane.f32.xlu0 %v2994
    %v2996 = vpop.xlane.xlu0 %2995
    %v2997 = vsel %vm539, %v2986, 0.0
    %2998 = vadd.xlane.f32.xlu0 %v2997
    %v2999 = vpop.xlane.xlu0 %2998
    %v3000 = vsel %vm539, %v2987, 0.0
    %3001 = vadd.xlane.f32.xlu0 %v3000
    %v3002 = vpop.xlane.xlu0 %3001
    %v3003 = vsel %vm539, %v2988, 0.0
    %3004 = vadd.xlane.f32.xlu0 %v3003
    %v3005 = vpop.xlane.xlu0 %3004
    %v3006 = vsel %vm539, %v2989, 0.0
    %3007 = vadd.xlane.f32.xlu0 %v3006
    %v3008 = vpop.xlane.xlu0 %3007
    %v3009 = vsel %vm558, %v2990, 0.0
    %3010 = vadd.xlane.f32.xlu0 %v3009
    %v3011 = vpop.xlane.xlu0 %3010
    %v3012 = vmul.f32 %v2993, %v562
    %v3013 = vmul.f32 %v2996, %v562
    %v3014 = vmul.f32 %v2999, %v562
    %v3015 = vmul.f32 %v3002, %v562
    %v3016 = vmul.f32 %v3005, %v562
    %v3017 = vmul.f32 %v3008, %v562
    %v3018 = vmul.f32 %v3011, %v562
    %v3019 = vsub.f32 %v2938, %v2977
    %v3020 = vsub.f32 %v2939, %v2978
    %v3021 = vsub.f32 %v2940, %v2979
    %v3022 = vsub.f32 %v2941, %v2980
    %v3023 = vsub.f32 %v2942, %v2981
    %v3024 = vsub.f32 %v2943, %v2982
    %v3025 = vsub.f32 %v2944, %v2983
    %v3026 = vmul.f32 %v2977, %v2977
    %v3027 = vmul.f32 %v2978, %v2978
    %v3028 = vmul.f32 %v2979, %v2979
    %v3029 = vmul.f32 %v2980, %v2980
    %v3030 = vmul.f32 %v2981, %v2981
    %v3031 = vmul.f32 %v2982, %v2982
    %v3032 = vmul.f32 %v2983, %v2983
    %v3033 = vsub.f32 %v3012, %v3026
    %v3034 = vsub.f32 %v3013, %v3027
    %v3035 = vsub.f32 %v3014, %v3028
    %v3036 = vsub.f32 %v3015, %v3029
    %v3037 = vsub.f32 %v3016, %v3030
    %v3038 = vsub.f32 %v3017, %v3031
    %v3039 = vsub.f32 %v3018, %v3032
    %v3040 = vadd.f32 %v3033, 1e-05
    %v3041 = vadd.f32 %v3034, 1e-05
    %v3042 = vadd.f32 %v3035, 1e-05
    %v3043 = vadd.f32 %v3036, 1e-05
    %v3044 = vadd.f32 %v3037, 1e-05
    %v3045 = vadd.f32 %v3038, 1e-05
    %v3046 = vadd.f32 %v3039, 1e-05
    %v3047 = vrsqrt.pop %v3040
    %v3048 = vrsqrt.pop %v3041
    %v3049 = vrsqrt.pop %v3042
    %v3050 = vrsqrt.pop %v3043
    %v3051 = vrsqrt.pop %v3044
    %v3052 = vrsqrt.pop %v3045
    %v3053 = vrsqrt.pop %v3046
    %v3054 = vmul.f32 %v3019, %v3047
    %v3055 = vmul.f32 %v3020, %v3048
    %v3056 = vmul.f32 %v3021, %v3049
    %v3057 = vmul.f32 %v3022, %v3050
    %v3058 = vmul.f32 %v3023, %v3051
    %v3059 = vmul.f32 %v3024, %v3052
    %v3060 = vmul.f32 %v3025, %v3053
    %v3061 = vlaneseq
    %v3062 = vshrl.u32 %v3061, 7
    %v3063 = vsub.s32 0, %v3062
    %v3064 = vrot.slane %v2945, %v3063
    %v3065 = vmul.f32 %v3054, %v3064
    %v3066 = vmul.f32 %v3055, %v3064
    %v3067 = vmul.f32 %v3056, %v3064
    %v3068 = vmul.f32 %v3057, %v3064
    %v3069 = vmul.f32 %v3058, %v3064
    %v3070 = vmul.f32 %v3059, %v3064
    %v3071 = vmul.f32 %v3060, %v3064
    %v3072 = vlaneseq
    %v3073 = vshrl.u32 %v3072, 7
    %v3074 = vsub.s32 1, %v3073
    %v3075 = vrot.slane %v2945, %v3074
    %v3076 = vadd.f32 %v3065, %v3075
    %v3077 = vadd.f32 %v3066, %v3075
    %v3078 = vadd.f32 %v3067, %v3075
    %v3079 = vadd.f32 %v3068, %v3075
    %v3080 = vadd.f32 %v3069, %v3075
    %v3081 = vadd.f32 %v3070, %v3075
    %v3082 = vadd.f32 %v3071, %v3075
    %v3083 = vlaneseq
    %v3084 = vshrl.u32 %v3083, 7
    %v3085 = vsub.s32 2, %v3084
    %v3086 = vrot.slane %v2945, %v3085
    %v3088 = vsel %vm539, %v3076, 0
    %v3091 = vsel %vm539, %v3077, 0
    %v3094 = vsel %vm539, %v3078, 0
    %v3097 = vsel %vm539, %v3079, 0
    %v3100 = vsel %vm539, %v3080, 0
    %v3103 = vsel %vm539, %v3081, 0
    %v3106 = vsel %vm539, %v3082, 0
    %3108 = vmatprep.subr.mxu0 0.0
    %3109 = vmatpush1.msra.mxu0 %v2946
    %3110 = vmatprep.subr.mxu0 0.0
    %3111 = vmatpush1.msra.mxu0 %v2947
    %3112 = vmatprep.subr.mxu0 0.0
    %3113 = vmatpush1.msra.mxu0 0.0
    %3114 = vmatprep.subr.mxu0 0.0
    %3115 = vmatpush1.msra.mxu0 0.0
    %3116 = vmatprep.subr.mxu0 0.0
    %3117 = vmatpush1.msra.mxu0 0.0
    %3118 = vmatprep.subr.mxu0 0.0
    %3119 = vmatpush1.msra.mxu0 0.0
    %3120 = vmatprep.subr.mxu0 0.0
    %3121 = vmatpush1.msra.mxu0 0.0
    %3122 = vmatprep.subr.mxu0 0.0
    %3123 = vmatpush1.msra.mxu0 0.0
    %3124 = vmatprep.subr.mxu0 0.0
    %3125 = vmatpush1.msra.mxu0 0.0
    %3126 = vmatprep.subr.mxu0 0.0
    %3127 = vmatpush1.msra.mxu0 0.0
    %3128 = vmatprep.subr.mxu0 0.0
    %3129 = vmatpush1.msra.mxu0 0.0
    %3130 = vmatprep.subr.mxu0 0.0
    %3131 = vmatpush1.msra.mxu0 0.0
    %3132 = vmatprep.subr.mxu0 0.0
    %3133 = vmatpush1.msra.mxu0 0.0
    %3134 = vmatprep.subr.mxu0 0.0
    %3135 = vmatpush1.msra.mxu0 0.0
    %3136 = vmatprep.subr.mxu0 0.0
    %3137 = vmatpush1.msra.mxu0 0.0
    %3138 = vmatprep.subr.mxu0 0.0
    %3139 = vmatpush1.msra.mxu0 0.0
    %3140 = vmatprep.subr.mxu0 0.0
    %3141 = vmatpush1.msra.mxu0 0.0
    %3142 = vmatprep.subr.mxu0 0.0
    %3143 = vmatpush1.msra.mxu0 0.0
    %3144 = vmatprep.subr.mxu0 0.0
    %3145 = vmatpush1.msra.mxu0 0.0
    %3146 = vmatprep.subr.mxu0 0.0
    %3147 = vmatpush1.msra.mxu0 0.0
    %3148 = vmatprep.subr.mxu0 0.0
    %3149 = vmatpush1.msra.mxu0 0.0
    %3150 = vmatprep.subr.mxu0 0.0
    %3151 = vmatpush1.msra.mxu0 0.0
    %3152 = vmatprep.subr.mxu0 0.0
    %3153 = vmatpush1.msra.mxu0 0.0
    %3154 = vmatprep.subr.mxu0 0.0
    %3155 = vmatpush1.msra.mxu0 0.0
    %3156 = vmatprep.subr.mxu0 0.0
    %3157 = vmatpush1.msra.mxu0 0.0
    %3158 = vmatprep.subr.mxu0 0.0
    %3159 = vmatpush1.msra.mxu0 0.0
    %3160 = vmatprep.subr.mxu0 0.0
    %3161 = vmatpush1.msra.mxu0 0.0
    %3162 = vmatprep.subr.mxu0 0.0
    %3163 = vmatpush1.msra.mxu0 0.0
    %3164 = vmatprep.subr.mxu0 0.0
    %3165 = vmatpush1.msra.mxu0 0.0
    %3166 = vmatprep.subr.mxu0 0.0
    %3167 = vmatpush1.msra.mxu0 0.0
    %3168 = vmatprep.subr.mxu0 0.0
    %3169 = vmatpush1.msra.mxu0 0.0
    %3170 = vmatprep.subr.mxu0 0.0
    %3171 = vmatpush1.msra.mxu0 0.0
    %3172 = vmatprep.mubr.f32.mxu0 0.0
    %3173 = vmatmul.mubr.f32.gmra.mrb[0].mxu0 %v3088
    %v3174 = vpop.f32.mrb[0].mxu0
    %v3175 = vadd.f32 %v3086, %v3174
    %v3176 = vpop.f32.mrb[0].mxu0
    %3177 = vmatprep.mubr.f32.mxu0 0.0
    %3178 = vmatmul.mubr.f32.gmra.mrb[0].mxu0 %v3091
    %v3179 = vpop.f32.mrb[0].mxu0
    %v3180 = vadd.f32 %v3086, %v3179
    %v3181 = vpop.f32.mrb[0].mxu0
    %3182 = vmatprep.mubr.f32.mxu0 0.0
    %3183 = vmatmul.mubr.f32.gmra.mrb[0].mxu0 %v3094
    %v3184 = vpop.f32.mrb[0].mxu0
    %v3185 = vadd.f32 %v3086, %v3184
    %v3186 = vpop.f32.mrb[0].mxu0
    %3187 = vmatprep.mubr.f32.mxu0 0.0
    %3188 = vmatmul.mubr.f32.gmra.mrb[0].mxu0 %v3097
    %v3189 = vpop.f32.mrb[0].mxu0
    %v3190 = vadd.f32 %v3086, %v3189
    %v3191 = vpop.f32.mrb[0].mxu0
    %3192 = vmatprep.mubr.f32.mxu0 0.0
    %3193 = vmatmul.mubr.f32.gmra.mrb[0].mxu0 %v3100
    %v3194 = vpop.f32.mrb[0].mxu0
    %v3195 = vadd.f32 %v3086, %v3194
    %v3196 = vpop.f32.mrb[0].mxu0
    %3197 = vmatprep.mubr.f32.mxu0 0.0
    %3198 = vmatmul.mubr.f32.gmra.mrb[0].mxu0 %v3103
    %v3199 = vpop.f32.mrb[0].mxu0
    %v3200 = vadd.f32 %v3086, %v3199
    %v3201 = vpop.f32.mrb[0].mxu0
    %3202 = vmatprep.mubr.f32.mxu0 0.0
    %3203 = vmatmul.mubr.f32.gmra.mrb[0].mxu0 %v3106
    %v3204 = vpop.f32.mrb[0].mxu0
    %v3205 = vadd.f32 %v3086, %v3204
    %v3206 = vpop.f32.mrb[0].mxu0
    %3207 = vdwg.mxu0
    %v3208 = vmul.f32 %v3175, %v800
    %v3209 = vmul.f32 %v3180, %v800
    %v3210 = vmul.f32 %v3185, %v800
    %v3211 = vmul.f32 %v3190, %v800
    %v3212 = vmul.f32 %v3195, %v800
    %v3213 = vmul.f32 %v3200, %v800
    %v3214 = vmul.f32 %v3205, %v800
    %v3215 = vmul.f32 %v3175, %v810
    %v3216 = vmul.f32 %v3180, %v810
    %v3217 = vmul.f32 %v3185, %v810
    %v3218 = vmul.f32 %v3190, %v810
    %v3219 = vmul.f32 %v3195, %v810
    %v3220 = vmul.f32 %v3200, %v810
    %v3221 = vmul.f32 %v3205, %v810
    %3229 = vrot.lane.b32.xlu0 %v3208, 112
    %v3230 = vpop.permute.xlu0 %3229
    %3231 = vrot.lane.b32.xlu0 %v3209, 112
    %v3232 = vpop.permute.xlu0 %3231
    %3233 = vrot.lane.b32.xlu0 %v3210, 112
    %v3234 = vpop.permute.xlu0 %3233
    %3235 = vrot.lane.b32.xlu0 %v3211, 112
    %v3236 = vpop.permute.xlu0 %3235
    %3237 = vrot.lane.b32.xlu0 %v3212, 112
    %v3238 = vpop.permute.xlu0 %3237
    %3239 = vrot.lane.b32.xlu0 %v3213, 112
    %v3240 = vpop.permute.xlu0 %3239
    %3241 = vrot.lane.b32.xlu0 %v3214, 112
    %v3242 = vpop.permute.xlu0 %3241
    %v3244 = vsel %vm539, %v3175, 0
    %v3247 = vsel %vm539, %v3180, 0
    %v3250 = vsel %vm539, %v3185, 0
    %v3253 = vsel %vm539, %v3190, 0
    %v3256 = vsel %vm539, %v3195, 0
    %v3259 = vsel %vm539, %v3200, 0
    %v3262 = vsel %vm539, %v3205, 0
    %v3264 = vsel %vm539, %v3230, 0
    %v3266 = vsel %vm539, %v3232, 0
    %v3268 = vsel %vm539, %v3234, 0
    %v3270 = vsel %vm539, %v3236, 0
    %v3272 = vsel %vm539, %v3238, 0
    %v3274 = vsel %vm539, %v3240, 0
    %v3276 = vsel %vm539, %v3242, 0
    %3278 = vmatprep.subr.mxu0 0.0
    %3279 = vmatpush1.xpose.msra.mxu0 %v3264
    %3280 = vmatprep.subr.mxu0 0.0
    %3281 = vmatpush1.xpose.msra.mxu0 %v3266
    %3282 = vmatprep.subr.mxu0 0.0
    %3283 = vmatpush1.xpose.msra.mxu0 %v3268
    %3284 = vmatprep.subr.mxu0 0.0
    %3285 = vmatpush1.xpose.msra.mxu0 %v3270
    %3286 = vmatprep.subr.mxu0 0.0
    %3287 = vmatpush1.xpose.msra.mxu0 %v3272
    %3288 = vmatprep.subr.mxu0 0.0
    %3289 = vmatpush1.xpose.msra.mxu0 %v3274
    %3290 = vmatprep.subr.mxu0 0.0
    %3291 = vmatpush1.xpose.msra.mxu0 %v3276
    %3292 = vmatprep.subr.mxu0 0.0
    %3293 = vmatpush1.xpose.msra.mxu0 0.0
    %3294 = vmatprep.subr.mxu0 0.0
    %3295 = vmatpush1.xpose.msra.mxu0 0.0
    %3296 = vmatprep.subr.mxu0 0.0
    %3297 = vmatpush1.xpose.msra.mxu0 0.0
    %3298 = vmatprep.subr.mxu0 0.0
    %3299 = vmatpush1.xpose.msra.mxu0 0.0
    %3300 = vmatprep.subr.mxu0 0.0
    %3301 = vmatpush1.xpose.msra.mxu0 0.0
    %3302 = vmatprep.subr.mxu0 0.0
    %3303 = vmatpush1.xpose.msra.mxu0 0.0
    %3304 = vmatprep.subr.mxu0 0.0
    %3305 = vmatpush1.xpose.msra.mxu0 0.0
    %3306 = vmatprep.subr.mxu0 0.0
    %3307 = vmatpush1.xpose.msra.mxu0 0.0
    %3308 = vmatprep.subr.mxu0 0.0
    %3309 = vmatpush1.xpose.msra.mxu0 0.0
    %3310 = vmatprep.subr.mxu0 0.0
    %3311 = vmatpush1.xpose.msra.mxu0 0.0
    %3312 = vmatprep.subr.mxu0 0.0
    %3313 = vmatpush1.xpose.msra.mxu0 0.0
    %3314 = vmatprep.subr.mxu0 0.0
    %3315 = vmatpush1.xpose.msra.mxu0 0.0
    %3316 = vmatprep.subr.mxu0 0.0
    %3317 = vmatpush1.xpose.msra.mxu0 0.0
    %3318 = vmatprep.subr.mxu0 0.0
    %3319 = vmatpush1.xpose.msra.mxu0 0.0
    %3320 = vmatprep.subr.mxu0 0.0
    %3321 = vmatpush1.xpose.msra.mxu0 0.0
    %3322 = vmatprep.subr.mxu0 0.0
    %3323 = vmatpush1.xpose.msra.mxu0 0.0
    %3324 = vmatprep.subr.mxu0 0.0
    %3325 = vmatpush1.xpose.msra.mxu0 0.0
    %3326 = vmatprep.subr.mxu0 0.0
    %3327 = vmatpush1.xpose.msra.mxu0 0.0
    %3328 = vmatprep.subr.mxu0 0.0
    %3329 = vmatpush1.xpose.msra.mxu0 0.0
    %3330 = vmatprep.subr.mxu0 0.0
    %3331 = vmatpush1.xpose.msra.mxu0 0.0
    %3332 = vmatprep.subr.mxu0 0.0
    %3333 = vmatpush1.xpose.msra.mxu0 0.0
    %3334 = vmatprep.subr.mxu0 0.0
    %3335 = vmatpush1.xpose.msra.mxu0 0.0
    %3336 = vmatprep.subr.mxu0 0.0
    %3337 = vmatpush1.xpose.msra.mxu0 0.0
    %3338 = vmatprep.subr.mxu0 0.0
    %3339 = vmatpush1.xpose.msra.mxu0 0.0
    %3340 = vmatprep.subr.mxu0 0.0
    %3341 = vmatpush1.xpose.msra.mxu0 0.0
    %3342 = vmatprep.mubr.f32.mxu0 0.0
    %3343 = vmatmul.mubr.f32.gmra.mrb[0].mxu0 %v3244
    %v3344 = vpop.f32.mrb[0].mxu0
    %v3345 = vadd.f32 0.0, %v3344
    %v3346 = vpop.f32.mrb[0].mxu0
    %3347 = vmatprep.mubr.f32.mxu0 0.0
    %3348 = vmatmul.mubr.f32.gmra.mrb[0].mxu0 %v3247
    %v3349 = vpop.f32.mrb[0].mxu0
    %v3350 = vadd.f32 0.0, %v3349
    %v3351 = vpop.f32.mrb[0].mxu0
    %3352 = vmatprep.mubr.f32.mxu0 0.0
    %3353 = vmatmul.mubr.f32.gmra.mrb[0].mxu0 %v3250
    %v3354 = vpop.f32.mrb[0].mxu0
    %v3355 = vadd.f32 0.0, %v3354
    %v3356 = vpop.f32.mrb[0].mxu0
    %3357 = vmatprep.mubr.f32.mxu0 0.0
    %3358 = vmatmul.mubr.f32.gmra.mrb[0].mxu0 %v3253
    %v3359 = vpop.f32.mrb[0].mxu0
    %v3360 = vadd.f32 0.0, %v3359
    %v3361 = vpop.f32.mrb[0].mxu0
    %3362 = vmatprep.mubr.f32.mxu0 0.0
    %3363 = vmatmul.mubr.f32.gmra.mrb[0].mxu0 %v3256
    %v3364 = vpop.f32.mrb[0].mxu0
    %v3365 = vadd.f32 0.0, %v3364
    %v3366 = vpop.f32.mrb[0].mxu0
    %3367 = vmatprep.mubr.f32.mxu0 0.0
    %3368 = vmatmul.mubr.f32.gmra.mrb[0].mxu0 %v3259
    %v3369 = vpop.f32.mrb[0].mxu0
    %v3370 = vadd.f32 0.0, %v3369
    %v3371 = vpop.f32.mrb[0].mxu0
    %3372 = vmatprep.mubr.f32.mxu0 0.0
    %3373 = vmatmul.mubr.f32.gmra.mrb[0].mxu0 %v3262
    %v3374 = vpop.f32.mrb[0].mxu0
    %v3375 = vadd.f32 0.0, %v3374
    %v3376 = vpop.f32.mrb[0].mxu0
    %3377 = vdwg.mxu0
    %v3378 = vsel %vm975, %v3345, -inf
    %3379 = vmax.xlane.f32.xlu0 %v3378
    %v3380 = vpop.xlane.xlu0 %3379
    %v3381 = vsel %vm975, %v3350, -inf
    %3382 = vmax.xlane.f32.xlu0 %v3381
    %v3383 = vpop.xlane.xlu0 %3382
    %v3384 = vsel %vm975, %v3355, -inf
    %3385 = vmax.xlane.f32.xlu0 %v3384
    %v3386 = vpop.xlane.xlu0 %3385
    %v3387 = vsel %vm975, %v3360, -inf
    %3388 = vmax.xlane.f32.xlu0 %v3387
    %v3389 = vpop.xlane.xlu0 %3388
    %v3390 = vsel %vm975, %v3365, -inf
    %3391 = vmax.xlane.f32.xlu0 %v3390
    %v3392 = vpop.xlane.xlu0 %3391
    %v3393 = vsel %vm975, %v3370, -inf
    %3394 = vmax.xlane.f32.xlu0 %v3393
    %v3395 = vpop.xlane.xlu0 %3394
    %v3396 = vsel %vm994, %v3375, -inf
    %3397 = vmax.xlane.f32.xlu0 %v3396
    %v3398 = vpop.xlane.xlu0 %3397
    %v3399 = vsub.f32 %v3345, %v3380
    %v3400 = vsub.f32 %v3350, %v3383
    %v3401 = vsub.f32 %v3355, %v3386
    %v3402 = vsub.f32 %v3360, %v3389
    %v3403 = vsub.f32 %v3365, %v3392
    %v3404 = vsub.f32 %v3370, %v3395
    %v3405 = vsub.f32 %v3375, %v3398
    %v3406 = vmul.f32 %v3399, 1.442695
    %v3407 = vpow.pop %v3406
    %v3408 = vmul.f32 %v3400, 1.442695
    %v3409 = vpow.pop %v3408
    %v3410 = vmul.f32 %v3401, 1.442695
    %v3411 = vpow.pop %v3410
    %v3412 = vmul.f32 %v3402, 1.442695
    %v3413 = vpow.pop %v3412
    %v3414 = vmul.f32 %v3403, 1.442695
    %v3415 = vpow.pop %v3414
    %v3416 = vmul.f32 %v3404, 1.442695
    %v3417 = vpow.pop %v3416
    %v3418 = vmul.f32 %v3405, 1.442695
    %v3419 = vpow.pop %v3418
    %v3420 = vmul.f32 %v3407, %v521
    %v3421 = vmul.f32 %v3409, %v522
    %v3422 = vmul.f32 %v3411, %v523
    %v3423 = vmul.f32 %v3413, %v524
    %v3424 = vmul.f32 %v3415, %v525
    %v3425 = vmul.f32 %v3417, %v526
    %v3426 = vmul.f32 %v3419, %v527
    %v3427 = vsel %vm975, %v3420, 0.0
    %3428 = vadd.xlane.f32.xlu0 %v3427
    %v3429 = vpop.xlane.xlu0 %3428
    %v3430 = vsel %vm975, %v3421, 0.0
    %3431 = vadd.xlane.f32.xlu0 %v3430
    %v3432 = vpop.xlane.xlu0 %3431
    %v3433 = vsel %vm975, %v3422, 0.0
    %3434 = vadd.xlane.f32.xlu0 %v3433
    %v3435 = vpop.xlane.xlu0 %3434
    %v3436 = vsel %vm975, %v3423, 0.0
    %3437 = vadd.xlane.f32.xlu0 %v3436
    %v3438 = vpop.xlane.xlu0 %3437
    %v3439 = vsel %vm975, %v3424, 0.0
    %3440 = vadd.xlane.f32.xlu0 %v3439
    %v3441 = vpop.xlane.xlu0 %3440
    %v3442 = vsel %vm975, %v3425, 0.0
    %3443 = vadd.xlane.f32.xlu0 %v3442
    %v3444 = vpop.xlane.xlu0 %3443
    %v3445 = vsel %vm994, %v3426, 0.0
    %3446 = vadd.xlane.f32.xlu0 %v3445
    %v3447 = vpop.xlane.xlu0 %3446
    %v3448 = vrcp.pop %v3429
    %v3449 = vrcp.pop %v3432
    %v3450 = vrcp.pop %v3435
    %v3451 = vrcp.pop %v3438
    %v3452 = vrcp.pop %v3441
    %v3453 = vrcp.pop %v3444
    %v3454 = vrcp.pop %v3447
    %v3455 = vmul.f32 %v3420, %v3448
    %v3456 = vmul.f32 %v3421, %v3449
    %v3457 = vmul.f32 %v3422, %v3450
    %v3458 = vmul.f32 %v3423, %v3451
    %v3459 = vmul.f32 %v3424, %v3452
    %v3460 = vmul.f32 %v3425, %v3453
    %v3461 = vmul.f32 %v3426, %v3454
    %v3462 = vmul.f32 %v3175, %v1067
    %v3463 = vmul.f32 %v3180, %v1067
    %v3464 = vmul.f32 %v3185, %v1067
    %v3465 = vmul.f32 %v3190, %v1067
    %v3466 = vmul.f32 %v3195, %v1067
    %v3467 = vmul.f32 %v3200, %v1067
    %v3468 = vmul.f32 %v3205, %v1067
    %v3469 = vmul.f32 %v3175, %v1077
    %v3470 = vmul.f32 %v3180, %v1077
    %v3471 = vmul.f32 %v3185, %v1077
    %v3472 = vmul.f32 %v3190, %v1077
    %v3473 = vmul.f32 %v3195, %v1077
    %v3474 = vmul.f32 %v3200, %v1077
    %v3475 = vmul.f32 %v3205, %v1077
    %3483 = vrot.lane.b32.xlu0 %v3462, 112
    %v3484 = vpop.permute.xlu0 %3483
    %3485 = vrot.lane.b32.xlu0 %v3463, 112
    %v3486 = vpop.permute.xlu0 %3485
    %3487 = vrot.lane.b32.xlu0 %v3464, 112
    %v3488 = vpop.permute.xlu0 %3487
    %3489 = vrot.lane.b32.xlu0 %v3465, 112
    %v3490 = vpop.permute.xlu0 %3489
    %3491 = vrot.lane.b32.xlu0 %v3466, 112
    %v3492 = vpop.permute.xlu0 %3491
    %3493 = vrot.lane.b32.xlu0 %v3467, 112
    %v3494 = vpop.permute.xlu0 %3493
    %3495 = vrot.lane.b32.xlu0 %v3468, 112
    %v3496 = vpop.permute.xlu0 %3495
    %v3497 = vsel %vm539, %v3484, 0
    %v3499 = vsel %vm539, %v3486, 0
    %v3501 = vsel %vm539, %v3488, 0
    %v3503 = vsel %vm539, %v3490, 0
    %v3505 = vsel %vm539, %v3492, 0
    %v3507 = vsel %vm539, %v3494, 0
    %v3509 = vsel %vm539, %v3496, 0
    %3511 = vmatprep.subr.mxu0 0.0
    %3512 = vmatpush1.xpose.msra.mxu0 %v3497
    %3513 = vmatprep.subr.mxu0 0.0
    %3514 = vmatpush1.xpose.msra.mxu0 %v3499
    %3515 = vmatprep.subr.mxu0 0.0
    %3516 = vmatpush1.xpose.msra.mxu0 %v3501
    %3517 = vmatprep.subr.mxu0 0.0
    %3518 = vmatpush1.xpose.msra.mxu0 %v3503
    %3519 = vmatprep.subr.mxu0 0.0
    %3520 = vmatpush1.xpose.msra.mxu0 %v3505
    %3521 = vmatprep.subr.mxu0 0.0
    %3522 = vmatpush1.xpose.msra.mxu0 %v3507
    %3523 = vmatprep.subr.mxu0 0.0
    %3524 = vmatpush1.xpose.msra.mxu0 %v3509
    %3525 = vmatprep.subr.mxu0 0.0
    %3526 = vmatpush1.xpose.msra.mxu0 0.0
    %3527 = vmatprep.subr.mxu0 0.0
    %3528 = vmatpush1.xpose.msra.mxu0 0.0
    %3529 = vmatprep.subr.mxu0 0.0
    %3530 = vmatpush1.xpose.msra.mxu0 0.0
    %3531 = vmatprep.subr.mxu0 0.0
    %3532 = vmatpush1.xpose.msra.mxu0 0.0
    %3533 = vmatprep.subr.mxu0 0.0
    %3534 = vmatpush1.xpose.msra.mxu0 0.0
    %3535 = vmatprep.subr.mxu0 0.0
    %3536 = vmatpush1.xpose.msra.mxu0 0.0
    %3537 = vmatprep.subr.mxu0 0.0
    %3538 = vmatpush1.xpose.msra.mxu0 0.0
    %3539 = vmatprep.subr.mxu0 0.0
    %3540 = vmatpush1.xpose.msra.mxu0 0.0
    %3541 = vmatprep.subr.mxu0 0.0
    %3542 = vmatpush1.xpose.msra.mxu0 0.0
    %3543 = vmatprep.subr.mxu0 0.0
    %3544 = vmatpush1.xpose.msra.mxu0 0.0
    %3545 = vmatprep.subr.mxu0 0.0
    %3546 = vmatpush1.xpose.msra.mxu0 0.0
    %3547 = vmatprep.subr.mxu0 0.0
    %3548 = vmatpush1.xpose.msra.mxu0 0.0
    %3549 = vmatprep.subr.mxu0 0.0
    %3550 = vmatpush1.xpose.msra.mxu0 0.0
    %3551 = vmatprep.subr.mxu0 0.0
    %3552 = vmatpush1.xpose.msra.mxu0 0.0
    %3553 = vmatprep.subr.mxu0 0.0
    %3554 = vmatpush1.xpose.msra.mxu0 0.0
    %3555 = vmatprep.subr.mxu0 0.0
    %3556 = vmatpush1.xpose.msra.mxu0 0.0
    %3557 = vmatprep.subr.mxu0 0.0
    %3558 = vmatpush1.xpose.msra.mxu0 0.0
    %3559 = vmatprep.subr.mxu0 0.0
    %3560 = vmatpush1.xpose.msra.mxu0 0.0
    %3561 = vmatprep.subr.mxu0 0.0
    %3562 = vmatpush1.xpose.msra.mxu0 0.0
    %3563 = vmatprep.subr.mxu0 0.0
    %3564 = vmatpush1.xpose.msra.mxu0 0.0
    %3565 = vmatprep.subr.mxu0 0.0
    %3566 = vmatpush1.xpose.msra.mxu0 0.0
    %3567 = vmatprep.subr.mxu0 0.0
    %3568 = vmatpush1.xpose.msra.mxu0 0.0
    %3569 = vmatprep.subr.mxu0 0.0
    %3570 = vmatpush1.xpose.msra.mxu0 0.0
    %3571 = vmatprep.subr.mxu0 0.0
    %3572 = vmatpush1.xpose.msra.mxu0 0.0
    %3573 = vmatprep.subr.mxu0 0.0
    %3574 = vmatpush1.xpose.msra.mxu0 0.0
    %3575 = vmatprep.mubr.f32.mxu0 0.0
    %3576 = vmatmul.mubr.f32.gmra.mrb[0].mxu0 %v3244
    %v3577 = vpop.f32.mrb[0].mxu0
    %v3578 = vadd.f32 0.0, %v3577
    %v3579 = vpop.f32.mrb[0].mxu0
    %3580 = vmatprep.mubr.f32.mxu0 0.0
    %3581 = vmatmul.mubr.f32.gmra.mrb[0].mxu0 %v3247
    %v3582 = vpop.f32.mrb[0].mxu0
    %v3583 = vadd.f32 0.0, %v3582
    %v3584 = vpop.f32.mrb[0].mxu0
    %3585 = vmatprep.mubr.f32.mxu0 0.0
    %3586 = vmatmul.mubr.f32.gmra.mrb[0].mxu0 %v3250
    %v3587 = vpop.f32.mrb[0].mxu0
    %v3588 = vadd.f32 0.0, %v3587
    %v3589 = vpop.f32.mrb[0].mxu0
    %3590 = vmatprep.mubr.f32.mxu0 0.0
    %3591 = vmatmul.mubr.f32.gmra.mrb[0].mxu0 %v3253
    %v3592 = vpop.f32.mrb[0].mxu0
    %v3593 = vadd.f32 0.0, %v3592
    %v3594 = vpop.f32.mrb[0].mxu0
    %3595 = vmatprep.mubr.f32.mxu0 0.0
    %3596 = vmatmul.mubr.f32.gmra.mrb[0].mxu0 %v3256
    %v3597 = vpop.f32.mrb[0].mxu0
    %v3598 = vadd.f32 0.0, %v3597
    %v3599 = vpop.f32.mrb[0].mxu0
    %3600 = vmatprep.mubr.f32.mxu0 0.0
    %3601 = vmatmul.mubr.f32.gmra.mrb[0].mxu0 %v3259
    %v3602 = vpop.f32.mrb[0].mxu0
    %v3603 = vadd.f32 0.0, %v3602
    %v3604 = vpop.f32.mrb[0].mxu0
    %3605 = vmatprep.mubr.f32.mxu0 0.0
    %3606 = vmatmul.mubr.f32.gmra.mrb[0].mxu0 %v3262
    %v3607 = vpop.f32.mrb[0].mxu0
    %v3608 = vadd.f32 0.0, %v3607
    %v3609 = vpop.f32.mrb[0].mxu0
    %3610 = vdwg.mxu0
    %v3611 = vsel %vm975, %v3578, -inf
    %3612 = vmax.xlane.f32.xlu0 %v3611
    %v3613 = vpop.xlane.xlu0 %3612
    %v3614 = vsel %vm975, %v3583, -inf
    %3615 = vmax.xlane.f32.xlu0 %v3614
    %v3616 = vpop.xlane.xlu0 %3615
    %v3617 = vsel %vm975, %v3588, -inf
    %3618 = vmax.xlane.f32.xlu0 %v3617
    %v3619 = vpop.xlane.xlu0 %3618
    %v3620 = vsel %vm975, %v3593, -inf
    %3621 = vmax.xlane.f32.xlu0 %v3620
    %v3622 = vpop.xlane.xlu0 %3621
    %v3623 = vsel %vm975, %v3598, -inf
    %3624 = vmax.xlane.f32.xlu0 %v3623
    %v3625 = vpop.xlane.xlu0 %3624
    %v3626 = vsel %vm975, %v3603, -inf
    %3627 = vmax.xlane.f32.xlu0 %v3626
    %v3628 = vpop.xlane.xlu0 %3627
    %v3629 = vsel %vm994, %v3608, -inf
    %3630 = vmax.xlane.f32.xlu0 %v3629
    %v3631 = vpop.xlane.xlu0 %3630
    %v3632 = vsub.f32 %v3578, %v3613
    %v3633 = vsub.f32 %v3583, %v3616
    %v3634 = vsub.f32 %v3588, %v3619
    %v3635 = vsub.f32 %v3593, %v3622
    %v3636 = vsub.f32 %v3598, %v3625
    %v3637 = vsub.f32 %v3603, %v3628
    %v3638 = vsub.f32 %v3608, %v3631
    %v3639 = vmul.f32 %v3632, 1.442695
    %v3640 = vpow.pop %v3639
    %v3641 = vmul.f32 %v3633, 1.442695
    %v3642 = vpow.pop %v3641
    %v3643 = vmul.f32 %v3634, 1.442695
    %v3644 = vpow.pop %v3643
    %v3645 = vmul.f32 %v3635, 1.442695
    %v3646 = vpow.pop %v3645
    %v3647 = vmul.f32 %v3636, 1.442695
    %v3648 = vpow.pop %v3647
    %v3649 = vmul.f32 %v3637, 1.442695
    %v3650 = vpow.pop %v3649
    %v3651 = vmul.f32 %v3638, 1.442695
    %v3652 = vpow.pop %v3651
    %v3653 = vmul.f32 %v3640, %v521
    %v3654 = vmul.f32 %v3642, %v522
    %v3655 = vmul.f32 %v3644, %v523
    %v3656 = vmul.f32 %v3646, %v524
    %v3657 = vmul.f32 %v3648, %v525
    %v3658 = vmul.f32 %v3650, %v526
    %v3659 = vmul.f32 %v3652, %v527
    %v3660 = vsel %vm975, %v3653, 0.0
    %3661 = vadd.xlane.f32.xlu0 %v3660
    %v3662 = vpop.xlane.xlu0 %3661
    %v3663 = vsel %vm975, %v3654, 0.0
    %3664 = vadd.xlane.f32.xlu0 %v3663
    %v3665 = vpop.xlane.xlu0 %3664
    %v3666 = vsel %vm975, %v3655, 0.0
    %3667 = vadd.xlane.f32.xlu0 %v3666
    %v3668 = vpop.xlane.xlu0 %3667
    %v3669 = vsel %vm975, %v3656, 0.0
    %3670 = vadd.xlane.f32.xlu0 %v3669
    %v3671 = vpop.xlane.xlu0 %3670
    %v3672 = vsel %vm975, %v3657, 0.0
    %3673 = vadd.xlane.f32.xlu0 %v3672
    %v3674 = vpop.xlane.xlu0 %3673
    %v3675 = vsel %vm975, %v3658, 0.0
    %3676 = vadd.xlane.f32.xlu0 %v3675
    %v3677 = vpop.xlane.xlu0 %3676
    %v3678 = vsel %vm994, %v3659, 0.0
    %3679 = vadd.xlane.f32.xlu0 %v3678
    %v3680 = vpop.xlane.xlu0 %3679
    %v3681 = vrcp.pop %v3662
    %v3682 = vrcp.pop %v3665
    %v3683 = vrcp.pop %v3668
    %v3684 = vrcp.pop %v3671
    %v3685 = vrcp.pop %v3674
    %v3686 = vrcp.pop %v3677
    %v3687 = vrcp.pop %v3680
    %v3688 = vmul.f32 %v3653, %v3681
    %v3689 = vmul.f32 %v3654, %v3682
    %v3690 = vmul.f32 %v3655, %v3683
    %v3691 = vmul.f32 %v3656, %v3684
    %v3692 = vmul.f32 %v3657, %v3685
    %v3693 = vmul.f32 %v3658, %v3686
    %v3694 = vmul.f32 %v3659, %v3687
    %3702 = vrot.lane.b32.xlu0 %v3469, 96
    %v3703 = vpop.permute.xlu0 %3702
    %3704 = vrot.lane.b32.xlu0 %v3470, 96
    %v3705 = vpop.permute.xlu0 %3704
    %3706 = vrot.lane.b32.xlu0 %v3471, 96
    %v3707 = vpop.permute.xlu0 %3706
    %3708 = vrot.lane.b32.xlu0 %v3472, 96
    %v3709 = vpop.permute.xlu0 %3708
    %3710 = vrot.lane.b32.xlu0 %v3473, 96
    %v3711 = vpop.permute.xlu0 %3710
    %3712 = vrot.lane.b32.xlu0 %v3474, 96
    %v3713 = vpop.permute.xlu0 %3712
    %3714 = vrot.lane.b32.xlu0 %v3475, 96
    %v3715 = vpop.permute.xlu0 %3714
    %v3723 = vsel %vm975, %v3688, 0
    %v3726 = vsel %vm975, %v3689, 0
    %v3729 = vsel %vm975, %v3690, 0
    %v3732 = vsel %vm975, %v3691, 0
    %v3735 = vsel %vm975, %v3692, 0
    %v3738 = vsel %vm975, %v3693, 0
    %v3741 = vsel %vm975, %v3694, 0
    %v3743 = vsel %vm1353, %v3715, 0
    %3745 = vmatprep.subr.mxu0 0.0
    %3746 = vmatpush1.msra.mxu0 %v3703
    %3747 = vmatprep.subr.mxu0 0.0
    %3748 = vmatpush1.msra.mxu0 %v3705
    %3749 = vmatprep.subr.mxu0 0.0
    %3750 = vmatpush1.msra.mxu0 %v3707
    %3751 = vmatprep.subr.mxu0 0.0
    %3752 = vmatpush1.msra.mxu0 %v3709
    %3753 = vmatprep.subr.mxu0 0.0
    %3754 = vmatpush1.msra.mxu0 %v3711
    %3755 = vmatprep.subr.mxu0 0.0
    %3756 = vmatpush1.msra.mxu0 %v3713
    %3757 = vmatprep.subr.mxu0 0.0
    %3758 = vmatpush1.msra.mxu0 %v3743
    %3759 = vmatprep.subr.mxu0 0.0
    %3760 = vmatpush1.msra.mxu0 0.0
    %3761 = vmatprep.subr.mxu0 0.0
    %3762 = vmatpush1.msra.mxu0 0.0
    %3763 = vmatprep.subr.mxu0 0.0
    %3764 = vmatpush1.msra.mxu0 0.0
    %3765 = vmatprep.subr.mxu0 0.0
    %3766 = vmatpush1.msra.mxu0 0.0
    %3767 = vmatprep.subr.mxu0 0.0
    %3768 = vmatpush1.msra.mxu0 0.0
    %3769 = vmatprep.subr.mxu0 0.0
    %3770 = vmatpush1.msra.mxu0 0.0
    %3771 = vmatprep.subr.mxu0 0.0
    %3772 = vmatpush1.msra.mxu0 0.0
    %3773 = vmatprep.subr.mxu0 0.0
    %3774 = vmatpush1.msra.mxu0 0.0
    %3775 = vmatprep.subr.mxu0 0.0
    %3776 = vmatpush1.msra.mxu0 0.0
    %3777 = vmatprep.subr.mxu0 0.0
    %3778 = vmatpush1.msra.mxu0 0.0
    %3779 = vmatprep.subr.mxu0 0.0
    %3780 = vmatpush1.msra.mxu0 0.0
    %3781 = vmatprep.subr.mxu0 0.0
    %3782 = vmatpush1.msra.mxu0 0.0
    %3783 = vmatprep.subr.mxu0 0.0
    %3784 = vmatpush1.msra.mxu0 0.0
    %3785 = vmatprep.subr.mxu0 0.0
    %3786 = vmatpush1.msra.mxu0 0.0
    %3787 = vmatprep.subr.mxu0 0.0
    %3788 = vmatpush1.msra.mxu0 0.0
    %3789 = vmatprep.subr.mxu0 0.0
    %3790 = vmatpush1.msra.mxu0 0.0
    %3791 = vmatprep.subr.mxu0 0.0
    %3792 = vmatpush1.msra.mxu0 0.0
    %3793 = vmatprep.subr.mxu0 0.0
    %3794 = vmatpush1.msra.mxu0 0.0
    %3795 = vmatprep.subr.mxu0 0.0
    %3796 = vmatpush1.msra.mxu0 0.0
    %3797 = vmatprep.subr.mxu0 0.0
    %3798 = vmatpush1.msra.mxu0 0.0
    %3799 = vmatprep.subr.mxu0 0.0
    %3800 = vmatpush1.msra.mxu0 0.0
    %3801 = vmatprep.subr.mxu0 0.0
    %3802 = vmatpush1.msra.mxu0 0.0
    %3803 = vmatprep.subr.mxu0 0.0
    %3804 = vmatpush1.msra.mxu0 0.0
    %3805 = vmatprep.subr.mxu0 0.0
    %3806 = vmatpush1.msra.mxu0 0.0
    %3807 = vmatprep.subr.mxu0 0.0
    %3808 = vmatpush1.msra.mxu0 0.0
    %3809 = vmatprep.mubr.f32.mxu0 0.0
    %3810 = vmatmul.mubr.f32.gmra.mrb[0].mxu0 %v3723
    %v3811 = vpop.f32.mrb[0].mxu0
    %v3812 = vadd.f32 0.0, %v3811
    %v3813 = vpop.f32.mrb[0].mxu0
    %3814 = vmatprep.mubr.f32.mxu0 0.0
    %3815 = vmatmul.mubr.f32.gmra.mrb[0].mxu0 %v3726
    %v3816 = vpop.f32.mrb[0].mxu0
    %v3817 = vadd.f32 0.0, %v3816
    %v3818 = vpop.f32.mrb[0].mxu0
    %3819 = vmatprep.mubr.f32.mxu0 0.0
    %3820 = vmatmul.mubr.f32.gmra.mrb[0].mxu0 %v3729
    %v3821 = vpop.f32.mrb[0].mxu0
    %v3822 = vadd.f32 0.0, %v3821
    %v3823 = vpop.f32.mrb[0].mxu0
    %3824 = vmatprep.mubr.f32.mxu0 0.0
    %3825 = vmatmul.mubr.f32.gmra.mrb[0].mxu0 %v3732
    %v3826 = vpop.f32.mrb[0].mxu0
    %v3827 = vadd.f32 0.0, %v3826
    %v3828 = vpop.f32.mrb[0].mxu0
    %3829 = vmatprep.mubr.f32.mxu0 0.0
    %3830 = vmatmul.mubr.f32.gmra.mrb[0].mxu0 %v3735
    %v3831 = vpop.f32.mrb[0].mxu0
    %v3832 = vadd.f32 0.0, %v3831
    %v3833 = vpop.f32.mrb[0].mxu0
    %3834 = vmatprep.mubr.f32.mxu0 0.0
    %3835 = vmatmul.mubr.f32.gmra.mrb[0].mxu0 %v3738
    %v3836 = vpop.f32.mrb[0].mxu0
    %v3837 = vadd.f32 0.0, %v3836
    %v3838 = vpop.f32.mrb[0].mxu0
    %3839 = vmatprep.mubr.f32.mxu0 0.0
    %3840 = vmatmul.mubr.f32.gmra.mrb[0].mxu0 %v3741
    %v3841 = vpop.f32.mrb[0].mxu0
    %v3842 = vadd.f32 0.0, %v3841
    %v3843 = vpop.f32.mrb[0].mxu0
    %3844 = vdwg.mxu0
    %3852 = vrot.lane.b32.xlu0 %v3215, 96
    %v3853 = vpop.permute.xlu0 %3852
    %3854 = vrot.lane.b32.xlu0 %v3216, 96
    %v3855 = vpop.permute.xlu0 %3854
    %3856 = vrot.lane.b32.xlu0 %v3217, 96
    %v3857 = vpop.permute.xlu0 %3856
    %3858 = vrot.lane.b32.xlu0 %v3218, 96
    %v3859 = vpop.permute.xlu0 %3858
    %3860 = vrot.lane.b32.xlu0 %v3219, 96
    %v3861 = vpop.permute.xlu0 %3860
    %3862 = vrot.lane.b32.xlu0 %v3220, 96
    %v3863 = vpop.permute.xlu0 %3862
    %3864 = vrot.lane.b32.xlu0 %v3221, 96
    %v3865 = vpop.permute.xlu0 %3864
    %v3873 = vsel %vm975, %v3455, 0
    %v3876 = vsel %vm975, %v3456, 0
    %v3879 = vsel %vm975, %v3457, 0
    %v3882 = vsel %vm975, %v3458, 0
    %v3885 = vsel %vm975, %v3459, 0
    %v3888 = vsel %vm975, %v3460, 0
    %v3891 = vsel %vm975, %v3461, 0
    %v3893 = vsel %vm1353, %v3865, 0
    %3895 = vmatprep.subr.mxu0 0.0
    %3896 = vmatpush1.msra.mxu0 %v3853
    %3897 = vmatprep.subr.mxu0 0.0
    %3898 = vmatpush1.msra.mxu0 %v3855
    %3899 = vmatprep.subr.mxu0 0.0
    %3900 = vmatpush1.msra.mxu0 %v3857
    %3901 = vmatprep.subr.mxu0 0.0
    %3902 = vmatpush1.msra.mxu0 %v3859
    %3903 = vmatprep.subr.mxu0 0.0
    %3904 = vmatpush1.msra.mxu0 %v3861
    %3905 = vmatprep.subr.mxu0 0.0
    %3906 = vmatpush1.msra.mxu0 %v3863
    %3907 = vmatprep.subr.mxu0 0.0
    %3908 = vmatpush1.msra.mxu0 %v3893
    %3909 = vmatprep.subr.mxu0 0.0
    %3910 = vmatpush1.msra.mxu0 0.0
    %3911 = vmatprep.subr.mxu0 0.0
    %3912 = vmatpush1.msra.mxu0 0.0
    %3913 = vmatprep.subr.mxu0 0.0
    %3914 = vmatpush1.msra.mxu0 0.0
    %3915 = vmatprep.subr.mxu0 0.0
    %3916 = vmatpush1.msra.mxu0 0.0
    %3917 = vmatprep.subr.mxu0 0.0
    %3918 = vmatpush1.msra.mxu0 0.0
    %3919 = vmatprep.subr.mxu0 0.0
    %3920 = vmatpush1.msra.mxu0 0.0
    %3921 = vmatprep.subr.mxu0 0.0
    %3922 = vmatpush1.msra.mxu0 0.0
    %3923 = vmatprep.subr.mxu0 0.0
    %3924 = vmatpush1.msra.mxu0 0.0
    %3925 = vmatprep.subr.mxu0 0.0
    %3926 = vmatpush1.msra.mxu0 0.0
    %3927 = vmatprep.subr.mxu0 0.0
    %3928 = vmatpush1.msra.mxu0 0.0
    %3929 = vmatprep.subr.mxu0 0.0
    %3930 = vmatpush1.msra.mxu0 0.0
    %3931 = vmatprep.subr.mxu0 0.0
    %3932 = vmatpush1.msra.mxu0 0.0
    %3933 = vmatprep.subr.mxu0 0.0
    %3934 = vmatpush1.msra.mxu0 0.0
    %3935 = vmatprep.subr.mxu0 0.0
    %3936 = vmatpush1.msra.mxu0 0.0
    %3937 = vmatprep.subr.mxu0 0.0
    %3938 = vmatpush1.msra.mxu0 0.0
    %3939 = vmatprep.subr.mxu0 0.0
    %3940 = vmatpush1.msra.mxu0 0.0
    %3941 = vmatprep.subr.mxu0 0.0
    %3942 = vmatpush1.msra.mxu0 0.0
    %3943 = vmatprep.subr.mxu0 0.0
    %3944 = vmatpush1.msra.mxu0 0.0
    %3945 = vmatprep.subr.mxu0 0.0
    %3946 = vmatpush1.msra.mxu0 0.0
    %3947 = vmatprep.subr.mxu0 0.0
    %3948 = vmatpush1.msra.mxu0 0.0
    %3949 = vmatprep.subr.mxu0 0.0
    %3950 = vmatpush1.msra.mxu0 0.0
    %3951 = vmatprep.subr.mxu0 0.0
    %3952 = vmatpush1.msra.mxu0 0.0
    %3953 = vmatprep.subr.mxu0 0.0
    %3954 = vmatpush1.msra.mxu0 0.0
    %3955 = vmatprep.subr.mxu0 0.0
    %3956 = vmatpush1.msra.mxu0 0.0
    %3957 = vmatprep.subr.mxu0 0.0
    %3958 = vmatpush1.msra.mxu0 0.0
    %3959 = vmatprep.mubr.f32.mxu0 0.0
    %3960 = vmatmul.mubr.f32.gmra.mrb[0].mxu0 %v3873
    %v3961 = vpop.f32.mrb[0].mxu0
    %v3962 = vadd.f32 %v3812, %v3961
    %v3963 = vpop.f32.mrb[0].mxu0
    %3964 = vmatprep.mubr.f32.mxu0 0.0
    %3965 = vmatmul.mubr.f32.gmra.mrb[0].mxu0 %v3876
    %v3966 = vpop.f32.mrb[0].mxu0
    %v3967 = vadd.f32 %v3817, %v3966
    %v3968 = vpop.f32.mrb[0].mxu0
    %3969 = vmatprep.mubr.f32.mxu0 0.0
    %3970 = vmatmul.mubr.f32.gmra.mrb[0].mxu0 %v3879
    %v3971 = vpop.f32.mrb[0].mxu0
    %v3972 = vadd.f32 %v3822, %v3971
    %v3973 = vpop.f32.mrb[0].mxu0
    %3974 = vmatprep.mubr.f32.mxu0 0.0
    %3975 = vmatmul.mubr.f32.gmra.mrb[0].mxu0 %v3882
    %v3976 = vpop.f32.mrb[0].mxu0
    %v3977 = vadd.f32 %v3827, %v3976
    %v3978 = vpop.f32.mrb[0].mxu0
    %3979 = vmatprep.mubr.f32.mxu0 0.0
    %3980 = vmatmul.mubr.f32.gmra.mrb[0].mxu0 %v3885
    %v3981 = vpop.f32.mrb[0].mxu0
    %v3982 = vadd.f32 %v3832, %v3981
    %v3983 = vpop.f32.mrb[0].mxu0
    %3984 = vmatprep.mubr.f32.mxu0 0.0
    %3985 = vmatmul.mubr.f32.gmra.mrb[0].mxu0 %v3888
    %v3986 = vpop.f32.mrb[0].mxu0
    %v3987 = vadd.f32 %v3837, %v3986
    %v3988 = vpop.f32.mrb[0].mxu0
    %3989 = vmatprep.mubr.f32.mxu0 0.0
    %3990 = vmatmul.mubr.f32.gmra.mrb[0].mxu0 %v3891
    %v3991 = vpop.f32.mrb[0].mxu0
    %v3992 = vadd.f32 %v3842, %v3991
    %v3993 = vpop.f32.mrb[0].mxu0
    %3994 = vdwg.mxu0
    %v3995 = vmul.f32 %v3175, %v1612
    %v3996 = vmul.f32 %v3180, %v1612
    %v3997 = vmul.f32 %v3185, %v1612
    %v3998 = vmul.f32 %v3190, %v1612
    %v3999 = vmul.f32 %v3195, %v1612
    %v4000 = vmul.f32 %v3200, %v1612
    %v4001 = vmul.f32 %v3205, %v1612
    %v4002 = vmul.f32 %v3175, %v1622
    %v4003 = vmul.f32 %v3180, %v1622
    %v4004 = vmul.f32 %v3185, %v1622
    %v4005 = vmul.f32 %v3190, %v1622
    %v4006 = vmul.f32 %v3195, %v1622
    %v4007 = vmul.f32 %v3200, %v1622
    %v4008 = vmul.f32 %v3205, %v1622
    %4016 = vrot.lane.b32.xlu0 %v3995, 112
    %v4017 = vpop.permute.xlu0 %4016
    %4018 = vrot.lane.b32.xlu0 %v3996, 112
    %v4019 = vpop.permute.xlu0 %4018
    %4020 = vrot.lane.b32.xlu0 %v3997, 112
    %v4021 = vpop.permute.xlu0 %4020
    %4022 = vrot.lane.b32.xlu0 %v3998, 112
    %v4023 = vpop.permute.xlu0 %4022
    %4024 = vrot.lane.b32.xlu0 %v3999, 112
    %v4025 = vpop.permute.xlu0 %4024
    %4026 = vrot.lane.b32.xlu0 %v4000, 112
    %v4027 = vpop.permute.xlu0 %4026
    %4028 = vrot.lane.b32.xlu0 %v4001, 112
    %v4029 = vpop.permute.xlu0 %4028
    %v4030 = vsel %vm539, %v4017, 0
    %v4032 = vsel %vm539, %v4019, 0
    %v4034 = vsel %vm539, %v4021, 0
    %v4036 = vsel %vm539, %v4023, 0
    %v4038 = vsel %vm539, %v4025, 0
    %v4040 = vsel %vm539, %v4027, 0
    %v4042 = vsel %vm539, %v4029, 0
    %4044 = vmatprep.subr.mxu0 0.0
    %4045 = vmatpush1.xpose.msra.mxu0 %v4030
    %4046 = vmatprep.subr.mxu0 0.0
    %4047 = vmatpush1.xpose.msra.mxu0 %v4032
    %4048 = vmatprep.subr.mxu0 0.0
    %4049 = vmatpush1.xpose.msra.mxu0 %v4034
    %4050 = vmatprep.subr.mxu0 0.0
    %4051 = vmatpush1.xpose.msra.mxu0 %v4036
    %4052 = vmatprep.subr.mxu0 0.0
    %4053 = vmatpush1.xpose.msra.mxu0 %v4038
    %4054 = vmatprep.subr.mxu0 0.0
    %4055 = vmatpush1.xpose.msra.mxu0 %v4040
    %4056 = vmatprep.subr.mxu0 0.0
    %4057 = vmatpush1.xpose.msra.mxu0 %v4042
    %4058 = vmatprep.subr.mxu0 0.0
    %4059 = vmatpush1.xpose.msra.mxu0 0.0
    %4060 = vmatprep.subr.mxu0 0.0
    %4061 = vmatpush1.xpose.msra.mxu0 0.0
    %4062 = vmatprep.subr.mxu0 0.0
    %4063 = vmatpush1.xpose.msra.mxu0 0.0
    %4064 = vmatprep.subr.mxu0 0.0
    %4065 = vmatpush1.xpose.msra.mxu0 0.0
    %4066 = vmatprep.subr.mxu0 0.0
    %4067 = vmatpush1.xpose.msra.mxu0 0.0
    %4068 = vmatprep.subr.mxu0 0.0
    %4069 = vmatpush1.xpose.msra.mxu0 0.0
    %4070 = vmatprep.subr.mxu0 0.0
    %4071 = vmatpush1.xpose.msra.mxu0 0.0
    %4072 = vmatprep.subr.mxu0 0.0
    %4073 = vmatpush1.xpose.msra.mxu0 0.0
    %4074 = vmatprep.subr.mxu0 0.0
    %4075 = vmatpush1.xpose.msra.mxu0 0.0
    %4076 = vmatprep.subr.mxu0 0.0
    %4077 = vmatpush1.xpose.msra.mxu0 0.0
    %4078 = vmatprep.subr.mxu0 0.0
    %4079 = vmatpush1.xpose.msra.mxu0 0.0
    %4080 = vmatprep.subr.mxu0 0.0
    %4081 = vmatpush1.xpose.msra.mxu0 0.0
    %4082 = vmatprep.subr.mxu0 0.0
    %4083 = vmatpush1.xpose.msra.mxu0 0.0
    %4084 = vmatprep.subr.mxu0 0.0
    %4085 = vmatpush1.xpose.msra.mxu0 0.0
    %4086 = vmatprep.subr.mxu0 0.0
    %4087 = vmatpush1.xpose.msra.mxu0 0.0
    %4088 = vmatprep.subr.mxu0 0.0
    %4089 = vmatpush1.xpose.msra.mxu0 0.0
    %4090 = vmatprep.subr.mxu0 0.0
    %4091 = vmatpush1.xpose.msra.mxu0 0.0
    %4092 = vmatprep.subr.mxu0 0.0
    %4093 = vmatpush1.xpose.msra.mxu0 0.0
    %4094 = vmatprep.subr.mxu0 0.0
    %4095 = vmatpush1.xpose.msra.mxu0 0.0
    %4096 = vmatprep.subr.mxu0 0.0
    %4097 = vmatpush1.xpose.msra.mxu0 0.0
    %4098 = vmatprep.subr.mxu0 0.0
    %4099 = vmatpush1.xpose.msra.mxu0 0.0
    %4100 = vmatprep.subr.mxu0 0.0
    %4101 = vmatpush1.xpose.msra.mxu0 0.0
    %4102 = vmatprep.subr.mxu0 0.0
    %4103 = vmatpush1.xpose.msra.mxu0 0.0
    %4104 = vmatprep.subr.mxu0 0.0
    %4105 = vmatpush1.xpose.msra.mxu0 0.0
    %4106 = vmatprep.subr.mxu0 0.0
    %4107 = vmatpush1.xpose.msra.mxu0 0.0
    %4108 = vmatprep.mubr.f32.mxu0 0.0
    %4109 = vmatmul.mubr.f32.gmra.mrb[0].mxu0 %v3244
    %v4110 = vpop.f32.mrb[0].mxu0
    %v4111 = vadd.f32 0.0, %v4110
    %v4112 = vpop.f32.mrb[0].mxu0
    %4113 = vmatprep.mubr.f32.mxu0 0.0
    %4114 = vmatmul.mubr.f32.gmra.mrb[0].mxu0 %v3247
    %v4115 = vpop.f32.mrb[0].mxu0
    %v4116 = vadd.f32 0.0, %v4115
    %v4117 = vpop.f32.mrb[0].mxu0
    %4118 = vmatprep.mubr.f32.mxu0 0.0
    %4119 = vmatmul.mubr.f32.gmra.mrb[0].mxu0 %v3250
    %v4120 = vpop.f32.mrb[0].mxu0
    %v4121 = vadd.f32 0.0, %v4120
    %v4122 = vpop.f32.mrb[0].mxu0
    %4123 = vmatprep.mubr.f32.mxu0 0.0
    %4124 = vmatmul.mubr.f32.gmra.mrb[0].mxu0 %v3253
    %v4125 = vpop.f32.mrb[0].mxu0
    %v4126 = vadd.f32 0.0, %v4125
    %v4127 = vpop.f32.mrb[0].mxu0
    %4128 = vmatprep.mubr.f32.mxu0 0.0
    %4129 = vmatmul.mubr.f32.gmra.mrb[0].mxu0 %v3256
    %v4130 = vpop.f32.mrb[0].mxu0
    %v4131 = vadd.f32 0.0, %v4130
    %v4132 = vpop.f32.mrb[0].mxu0
    %4133 = vmatprep.mubr.f32.mxu0 0.0
    %4134 = vmatmul.mubr.f32.gmra.mrb[0].mxu0 %v3259
    %v4135 = vpop.f32.mrb[0].mxu0
    %v4136 = vadd.f32 0.0, %v4135
    %v4137 = vpop.f32.mrb[0].mxu0
    %4138 = vmatprep.mubr.f32.mxu0 0.0
    %4139 = vmatmul.mubr.f32.gmra.mrb[0].mxu0 %v3262
    %v4140 = vpop.f32.mrb[0].mxu0
    %v4141 = vadd.f32 0.0, %v4140
    %v4142 = vpop.f32.mrb[0].mxu0
    %4143 = vdwg.mxu0
    %v4144 = vsel %vm975, %v4111, -inf
    %4145 = vmax.xlane.f32.xlu0 %v4144
    %v4146 = vpop.xlane.xlu0 %4145
    %v4147 = vsel %vm975, %v4116, -inf
    %4148 = vmax.xlane.f32.xlu0 %v4147
    %v4149 = vpop.xlane.xlu0 %4148
    %v4150 = vsel %vm975, %v4121, -inf
    %4151 = vmax.xlane.f32.xlu0 %v4150
    %v4152 = vpop.xlane.xlu0 %4151
    %v4153 = vsel %vm975, %v4126, -inf
    %4154 = vmax.xlane.f32.xlu0 %v4153
    %v4155 = vpop.xlane.xlu0 %4154
    %v4156 = vsel %vm975, %v4131, -inf
    %4157 = vmax.xlane.f32.xlu0 %v4156
    %v4158 = vpop.xlane.xlu0 %4157
    %v4159 = vsel %vm975, %v4136, -inf
    %4160 = vmax.xlane.f32.xlu0 %v4159
    %v4161 = vpop.xlane.xlu0 %4160
    %v4162 = vsel %vm994, %v4141, -inf
    %4163 = vmax.xlane.f32.xlu0 %v4162
    %v4164 = vpop.xlane.xlu0 %4163
    %v4165 = vsub.f32 %v4111, %v4146
    %v4166 = vsub.f32 %v4116, %v4149
    %v4167 = vsub.f32 %v4121, %v4152
    %v4168 = vsub.f32 %v4126, %v4155
    %v4169 = vsub.f32 %v4131, %v4158
    %v4170 = vsub.f32 %v4136, %v4161
    %v4171 = vsub.f32 %v4141, %v4164
    %v4172 = vmul.f32 %v4165, 1.442695
    %v4173 = vpow.pop %v4172
    %v4174 = vmul.f32 %v4166, 1.442695
    %v4175 = vpow.pop %v4174
    %v4176 = vmul.f32 %v4167, 1.442695
    %v4177 = vpow.pop %v4176
    %v4178 = vmul.f32 %v4168, 1.442695
    %v4179 = vpow.pop %v4178
    %v4180 = vmul.f32 %v4169, 1.442695
    %v4181 = vpow.pop %v4180
    %v4182 = vmul.f32 %v4170, 1.442695
    %v4183 = vpow.pop %v4182
    %v4184 = vmul.f32 %v4171, 1.442695
    %v4185 = vpow.pop %v4184
    %v4186 = vmul.f32 %v4173, %v521
    %v4187 = vmul.f32 %v4175, %v522
    %v4188 = vmul.f32 %v4177, %v523
    %v4189 = vmul.f32 %v4179, %v524
    %v4190 = vmul.f32 %v4181, %v525
    %v4191 = vmul.f32 %v4183, %v526
    %v4192 = vmul.f32 %v4185, %v527
    %v4193 = vsel %vm975, %v4186, 0.0
    %4194 = vadd.xlane.f32.xlu0 %v4193
    %v4195 = vpop.xlane.xlu0 %4194
    %v4196 = vsel %vm975, %v4187, 0.0
    %4197 = vadd.xlane.f32.xlu0 %v4196
    %v4198 = vpop.xlane.xlu0 %4197
    %v4199 = vsel %vm975, %v4188, 0.0
    %4200 = vadd.xlane.f32.xlu0 %v4199
    %v4201 = vpop.xlane.xlu0 %4200
    %v4202 = vsel %vm975, %v4189, 0.0
    %4203 = vadd.xlane.f32.xlu0 %v4202
    %v4204 = vpop.xlane.xlu0 %4203
    %v4205 = vsel %vm975, %v4190, 0.0
    %4206 = vadd.xlane.f32.xlu0 %v4205
    %v4207 = vpop.xlane.xlu0 %4206
    %v4208 = vsel %vm975, %v4191, 0.0
    %4209 = vadd.xlane.f32.xlu0 %v4208
    %v4210 = vpop.xlane.xlu0 %4209
    %v4211 = vsel %vm994, %v4192, 0.0
    %4212 = vadd.xlane.f32.xlu0 %v4211
    %v4213 = vpop.xlane.xlu0 %4212
    %v4214 = vrcp.pop %v4195
    %v4215 = vrcp.pop %v4198
    %v4216 = vrcp.pop %v4201
    %v4217 = vrcp.pop %v4204
    %v4218 = vrcp.pop %v4207
    %v4219 = vrcp.pop %v4210
    %v4220 = vrcp.pop %v4213
    %v4221 = vmul.f32 %v4186, %v4214
    %v4222 = vmul.f32 %v4187, %v4215
    %v4223 = vmul.f32 %v4188, %v4216
    %v4224 = vmul.f32 %v4189, %v4217
    %v4225 = vmul.f32 %v4190, %v4218
    %v4226 = vmul.f32 %v4191, %v4219
    %v4227 = vmul.f32 %v4192, %v4220
    %4235 = vrot.lane.b32.xlu0 %v4002, 96
    %v4236 = vpop.permute.xlu0 %4235
    %4237 = vrot.lane.b32.xlu0 %v4003, 96
    %v4238 = vpop.permute.xlu0 %4237
    %4239 = vrot.lane.b32.xlu0 %v4004, 96
    %v4240 = vpop.permute.xlu0 %4239
    %4241 = vrot.lane.b32.xlu0 %v4005, 96
    %v4242 = vpop.permute.xlu0 %4241
    %4243 = vrot.lane.b32.xlu0 %v4006, 96
    %v4244 = vpop.permute.xlu0 %4243
    %4245 = vrot.lane.b32.xlu0 %v4007, 96
    %v4246 = vpop.permute.xlu0 %4245
    %4247 = vrot.lane.b32.xlu0 %v4008, 96
    %v4248 = vpop.permute.xlu0 %4247
    %v4256 = vsel %vm975, %v4221, 0
    %v4259 = vsel %vm975, %v4222, 0
    %v4262 = vsel %vm975, %v4223, 0
    %v4265 = vsel %vm975, %v4224, 0
    %v4268 = vsel %vm975, %v4225, 0
    %v4271 = vsel %vm975, %v4226, 0
    %v4274 = vsel %vm975, %v4227, 0
    %v4276 = vsel %vm1353, %v4248, 0
    %4278 = vmatprep.subr.mxu0 0.0
    %4279 = vmatpush1.msra.mxu0 %v4236
    %4280 = vmatprep.subr.mxu0 0.0
    %4281 = vmatpush1.msra.mxu0 %v4238
    %4282 = vmatprep.subr.mxu0 0.0
    %4283 = vmatpush1.msra.mxu0 %v4240
    %4284 = vmatprep.subr.mxu0 0.0
    %4285 = vmatpush1.msra.mxu0 %v4242
    %4286 = vmatprep.subr.mxu0 0.0
    %4287 = vmatpush1.msra.mxu0 %v4244
    %4288 = vmatprep.subr.mxu0 0.0
    %4289 = vmatpush1.msra.mxu0 %v4246
    %4290 = vmatprep.subr.mxu0 0.0
    %4291 = vmatpush1.msra.mxu0 %v4276
    %4292 = vmatprep.subr.mxu0 0.0
    %4293 = vmatpush1.msra.mxu0 0.0
    %4294 = vmatprep.subr.mxu0 0.0
    %4295 = vmatpush1.msra.mxu0 0.0
    %4296 = vmatprep.subr.mxu0 0.0
    %4297 = vmatpush1.msra.mxu0 0.0
    %4298 = vmatprep.subr.mxu0 0.0
    %4299 = vmatpush1.msra.mxu0 0.0
    %4300 = vmatprep.subr.mxu0 0.0
    %4301 = vmatpush1.msra.mxu0 0.0
    %4302 = vmatprep.subr.mxu0 0.0
    %4303 = vmatpush1.msra.mxu0 0.0
    %4304 = vmatprep.subr.mxu0 0.0
    %4305 = vmatpush1.msra.mxu0 0.0
    %4306 = vmatprep.subr.mxu0 0.0
    %4307 = vmatpush1.msra.mxu0 0.0
    %4308 = vmatprep.subr.mxu0 0.0
    %4309 = vmatpush1.msra.mxu0 0.0
    %4310 = vmatprep.subr.mxu0 0.0
    %4311 = vmatpush1.msra.mxu0 0.0
    %4312 = vmatprep.subr.mxu0 0.0
    %4313 = vmatpush1.msra.mxu0 0.0
    %4314 = vmatprep.subr.mxu0 0.0
    %4315 = vmatpush1.msra.mxu0 0.0
    %4316 = vmatprep.subr.mxu0 0.0
    %4317 = vmatpush1.msra.mxu0 0.0
    %4318 = vmatprep.subr.mxu0 0.0
    %4319 = vmatpush1.msra.mxu0 0.0
    %4320 = vmatprep.subr.mxu0 0.0
    %4321 = vmatpush1.msra.mxu0 0.0
    %4322 = vmatprep.subr.mxu0 0.0
    %4323 = vmatpush1.msra.mxu0 0.0
    %4324 = vmatprep.subr.mxu0 0.0
    %4325 = vmatpush1.msra.mxu0 0.0
    %4326 = vmatprep.subr.mxu0 0.0
    %4327 = vmatpush1.msra.mxu0 0.0
    %4328 = vmatprep.subr.mxu0 0.0
    %4329 = vmatpush1.msra.mxu0 0.0
    %4330 = vmatprep.subr.mxu0 0.0
    %4331 = vmatpush1.msra.mxu0 0.0
    %4332 = vmatprep.subr.mxu0 0.0
    %4333 = vmatpush1.msra.mxu0 0.0
    %4334 = vmatprep.subr.mxu0 0.0
    %4335 = vmatpush1.msra.mxu0 0.0
    %4336 = vmatprep.subr.mxu0 0.0
    %4337 = vmatpush1.msra.mxu0 0.0
    %4338 = vmatprep.subr.mxu0 0.0
    %4339 = vmatpush1.msra.mxu0 0.0
    %4340 = vmatprep.subr.mxu0 0.0
    %4341 = vmatpush1.msra.mxu0 0.0
    %4342 = vmatprep.mubr.f32.mxu0 0.0
    %4343 = vmatmul.mubr.f32.gmra.mrb[0].mxu0 %v4256
    %v4344 = vpop.f32.mrb[0].mxu0
    %v4345 = vadd.f32 0.0, %v4344
    %v4346 = vpop.f32.mrb[0].mxu0
    %4347 = vmatprep.mubr.f32.mxu0 0.0
    %4348 = vmatmul.mubr.f32.gmra.mrb[0].mxu0 %v4259
    %v4349 = vpop.f32.mrb[0].mxu0
    %v4350 = vadd.f32 0.0, %v4349
    %v4351 = vpop.f32.mrb[0].mxu0
    %4352 = vmatprep.mubr.f32.mxu0 0.0
    %4353 = vmatmul.mubr.f32.gmra.mrb[0].mxu0 %v4262
    %v4354 = vpop.f32.mrb[0].mxu0
    %v4355 = vadd.f32 0.0, %v4354
    %v4356 = vpop.f32.mrb[0].mxu0
    %4357 = vmatprep.mubr.f32.mxu0 0.0
    %4358 = vmatmul.mubr.f32.gmra.mrb[0].mxu0 %v4265
    %v4359 = vpop.f32.mrb[0].mxu0
    %v4360 = vadd.f32 0.0, %v4359
    %v4361 = vpop.f32.mrb[0].mxu0
    %4362 = vmatprep.mubr.f32.mxu0 0.0
    %4363 = vmatmul.mubr.f32.gmra.mrb[0].mxu0 %v4268
    %v4364 = vpop.f32.mrb[0].mxu0
    %v4365 = vadd.f32 0.0, %v4364
    %v4366 = vpop.f32.mrb[0].mxu0
    %4367 = vmatprep.mubr.f32.mxu0 0.0
    %4368 = vmatmul.mubr.f32.gmra.mrb[0].mxu0 %v4271
    %v4369 = vpop.f32.mrb[0].mxu0
    %v4370 = vadd.f32 0.0, %v4369
    %v4371 = vpop.f32.mrb[0].mxu0
    %4372 = vmatprep.mubr.f32.mxu0 0.0
    %4373 = vmatmul.mubr.f32.gmra.mrb[0].mxu0 %v4274
    %v4374 = vpop.f32.mrb[0].mxu0
    %v4375 = vadd.f32 0.0, %v4374
    %v4376 = vpop.f32.mrb[0].mxu0
    %4377 = vdwg.mxu0
    %v4378 = vadd.f32 %v3962, %v4345
    %v4379 = vadd.f32 %v3967, %v4350
    %v4380 = vadd.f32 %v3972, %v4355
    %v4381 = vadd.f32 %v3977, %v4360
    %v4382 = vadd.f32 %v3982, %v4365
    %v4383 = vadd.f32 %v3987, %v4370
    %v4384 = vadd.f32 %v3992, %v4375
    %v4385 = vmul.f32 %v3175, %v2013
    %v4386 = vmul.f32 %v3180, %v2013
    %v4387 = vmul.f32 %v3185, %v2013
    %v4388 = vmul.f32 %v3190, %v2013
    %v4389 = vmul.f32 %v3195, %v2013
    %v4390 = vmul.f32 %v3200, %v2013
    %v4391 = vmul.f32 %v3205, %v2013
    %v4392 = vmul.f32 %v3175, %v2023
    %v4393 = vmul.f32 %v3180, %v2023
    %v4394 = vmul.f32 %v3185, %v2023
    %v4395 = vmul.f32 %v3190, %v2023
    %v4396 = vmul.f32 %v3195, %v2023
    %v4397 = vmul.f32 %v3200, %v2023
    %v4398 = vmul.f32 %v3205, %v2023
    %4406 = vrot.lane.b32.xlu0 %v4385, 112
    %v4407 = vpop.permute.xlu0 %4406
    %4408 = vrot.lane.b32.xlu0 %v4386, 112
    %v4409 = vpop.permute.xlu0 %4408
    %4410 = vrot.lane.b32.xlu0 %v4387, 112
    %v4411 = vpop.permute.xlu0 %4410
    %4412 = vrot.lane.b32.xlu0 %v4388, 112
    %v4413 = vpop.permute.xlu0 %4412
    %4414 = vrot.lane.b32.xlu0 %v4389, 112
    %v4415 = vpop.permute.xlu0 %4414
    %4416 = vrot.lane.b32.xlu0 %v4390, 112
    %v4417 = vpop.permute.xlu0 %4416
    %4418 = vrot.lane.b32.xlu0 %v4391, 112
    %v4419 = vpop.permute.xlu0 %4418
    %v4420 = vsel %vm539, %v4407, 0
    %v4422 = vsel %vm539, %v4409, 0
    %v4424 = vsel %vm539, %v4411, 0
    %v4426 = vsel %vm539, %v4413, 0
    %v4428 = vsel %vm539, %v4415, 0
    %v4430 = vsel %vm539, %v4417, 0
    %v4432 = vsel %vm539, %v4419, 0
    %4434 = vmatprep.subr.mxu0 0.0
    %4435 = vmatpush1.xpose.msra.mxu0 %v4420
    %4436 = vmatprep.subr.mxu0 0.0
    %4437 = vmatpush1.xpose.msra.mxu0 %v4422
    %4438 = vmatprep.subr.mxu0 0.0
    %4439 = vmatpush1.xpose.msra.mxu0 %v4424
    %4440 = vmatprep.subr.mxu0 0.0
    %4441 = vmatpush1.xpose.msra.mxu0 %v4426
    %4442 = vmatprep.subr.mxu0 0.0
    %4443 = vmatpush1.xpose.msra.mxu0 %v4428
    %4444 = vmatprep.subr.mxu0 0.0
    %4445 = vmatpush1.xpose.msra.mxu0 %v4430
    %4446 = vmatprep.subr.mxu0 0.0
    %4447 = vmatpush1.xpose.msra.mxu0 %v4432
    %4448 = vmatprep.subr.mxu0 0.0
    %4449 = vmatpush1.xpose.msra.mxu0 0.0
    %4450 = vmatprep.subr.mxu0 0.0
    %4451 = vmatpush1.xpose.msra.mxu0 0.0
    %4452 = vmatprep.subr.mxu0 0.0
    %4453 = vmatpush1.xpose.msra.mxu0 0.0
    %4454 = vmatprep.subr.mxu0 0.0
    %4455 = vmatpush1.xpose.msra.mxu0 0.0
    %4456 = vmatprep.subr.mxu0 0.0
    %4457 = vmatpush1.xpose.msra.mxu0 0.0
    %4458 = vmatprep.subr.mxu0 0.0
    %4459 = vmatpush1.xpose.msra.mxu0 0.0
    %4460 = vmatprep.subr.mxu0 0.0
    %4461 = vmatpush1.xpose.msra.mxu0 0.0
    %4462 = vmatprep.subr.mxu0 0.0
    %4463 = vmatpush1.xpose.msra.mxu0 0.0
    %4464 = vmatprep.subr.mxu0 0.0
    %4465 = vmatpush1.xpose.msra.mxu0 0.0
    %4466 = vmatprep.subr.mxu0 0.0
    %4467 = vmatpush1.xpose.msra.mxu0 0.0
    %4468 = vmatprep.subr.mxu0 0.0
    %4469 = vmatpush1.xpose.msra.mxu0 0.0
    %4470 = vmatprep.subr.mxu0 0.0
    %4471 = vmatpush1.xpose.msra.mxu0 0.0
    %4472 = vmatprep.subr.mxu0 0.0
    %4473 = vmatpush1.xpose.msra.mxu0 0.0
    %4474 = vmatprep.subr.mxu0 0.0
    %4475 = vmatpush1.xpose.msra.mxu0 0.0
    %4476 = vmatprep.subr.mxu0 0.0
    %4477 = vmatpush1.xpose.msra.mxu0 0.0
    %4478 = vmatprep.subr.mxu0 0.0
    %4479 = vmatpush1.xpose.msra.mxu0 0.0
    %4480 = vmatprep.subr.mxu0 0.0
    %4481 = vmatpush1.xpose.msra.mxu0 0.0
    %4482 = vmatprep.subr.mxu0 0.0
    %4483 = vmatpush1.xpose.msra.mxu0 0.0
    %4484 = vmatprep.subr.mxu0 0.0
    %4485 = vmatpush1.xpose.msra.mxu0 0.0
    %4486 = vmatprep.subr.mxu0 0.0
    %4487 = vmatpush1.xpose.msra.mxu0 0.0
    %4488 = vmatprep.subr.mxu0 0.0
    %4489 = vmatpush1.xpose.msra.mxu0 0.0
    %4490 = vmatprep.subr.mxu0 0.0
    %4491 = vmatpush1.xpose.msra.mxu0 0.0
    %4492 = vmatprep.subr.mxu0 0.0
    %4493 = vmatpush1.xpose.msra.mxu0 0.0
    %4494 = vmatprep.subr.mxu0 0.0
    %4495 = vmatpush1.xpose.msra.mxu0 0.0
    %4496 = vmatprep.subr.mxu0 0.0
    %4497 = vmatpush1.xpose.msra.mxu0 0.0
    %4498 = vmatprep.mubr.f32.mxu0 0.0
    %4499 = vmatmul.mubr.f32.gmra.mrb[0].mxu0 %v3244
    %v4500 = vpop.f32.mrb[0].mxu0
    %v4501 = vadd.f32 0.0, %v4500
    %v4502 = vpop.f32.mrb[0].mxu0
    %4503 = vmatprep.mubr.f32.mxu0 0.0
    %4504 = vmatmul.mubr.f32.gmra.mrb[0].mxu0 %v3247
    %v4505 = vpop.f32.mrb[0].mxu0
    %v4506 = vadd.f32 0.0, %v4505
    %v4507 = vpop.f32.mrb[0].mxu0
    %4508 = vmatprep.mubr.f32.mxu0 0.0
    %4509 = vmatmul.mubr.f32.gmra.mrb[0].mxu0 %v3250
    %v4510 = vpop.f32.mrb[0].mxu0
    %v4511 = vadd.f32 0.0, %v4510
    %v4512 = vpop.f32.mrb[0].mxu0
    %4513 = vmatprep.mubr.f32.mxu0 0.0
    %4514 = vmatmul.mubr.f32.gmra.mrb[0].mxu0 %v3253
    %v4515 = vpop.f32.mrb[0].mxu0
    %v4516 = vadd.f32 0.0, %v4515
    %v4517 = vpop.f32.mrb[0].mxu0
    %4518 = vmatprep.mubr.f32.mxu0 0.0
    %4519 = vmatmul.mubr.f32.gmra.mrb[0].mxu0 %v3256
    %v4520 = vpop.f32.mrb[0].mxu0
    %v4521 = vadd.f32 0.0, %v4520
    %v4522 = vpop.f32.mrb[0].mxu0
    %4523 = vmatprep.mubr.f32.mxu0 0.0
    %4524 = vmatmul.mubr.f32.gmra.mrb[0].mxu0 %v3259
    %v4525 = vpop.f32.mrb[0].mxu0
    %v4526 = vadd.f32 0.0, %v4525
    %v4527 = vpop.f32.mrb[0].mxu0
    %4528 = vmatprep.mubr.f32.mxu0 0.0
    %4529 = vmatmul.mubr.f32.gmra.mrb[0].mxu0 %v3262
    %v4530 = vpop.f32.mrb[0].mxu0
    %v4531 = vadd.f32 0.0, %v4530
    %v4532 = vpop.f32.mrb[0].mxu0
    %4533 = vdwg.mxu0
    %v4534 = vsel %vm975, %v4501, -inf
    %4535 = vmax.xlane.f32.xlu0 %v4534
    %v4536 = vpop.xlane.xlu0 %4535
    %v4537 = vsel %vm975, %v4506, -inf
    %4538 = vmax.xlane.f32.xlu0 %v4537
    %v4539 = vpop.xlane.xlu0 %4538
    %v4540 = vsel %vm975, %v4511, -inf
    %4541 = vmax.xlane.f32.xlu0 %v4540
    %v4542 = vpop.xlane.xlu0 %4541
    %v4543 = vsel %vm975, %v4516, -inf
    %4544 = vmax.xlane.f32.xlu0 %v4543
    %v4545 = vpop.xlane.xlu0 %4544
    %v4546 = vsel %vm975, %v4521, -inf
    %4547 = vmax.xlane.f32.xlu0 %v4546
    %v4548 = vpop.xlane.xlu0 %4547
    %v4549 = vsel %vm975, %v4526, -inf
    %4550 = vmax.xlane.f32.xlu0 %v4549
    %v4551 = vpop.xlane.xlu0 %4550
    %v4552 = vsel %vm994, %v4531, -inf
    %4553 = vmax.xlane.f32.xlu0 %v4552
    %v4554 = vpop.xlane.xlu0 %4553
    %v4555 = vsub.f32 %v4501, %v4536
    %v4556 = vsub.f32 %v4506, %v4539
    %v4557 = vsub.f32 %v4511, %v4542
    %v4558 = vsub.f32 %v4516, %v4545
    %v4559 = vsub.f32 %v4521, %v4548
    %v4560 = vsub.f32 %v4526, %v4551
    %v4561 = vsub.f32 %v4531, %v4554
    %v4562 = vmul.f32 %v4555, 1.442695
    %v4563 = vpow.pop %v4562
    %v4564 = vmul.f32 %v4556, 1.442695
    %v4565 = vpow.pop %v4564
    %v4566 = vmul.f32 %v4557, 1.442695
    %v4567 = vpow.pop %v4566
    %v4568 = vmul.f32 %v4558, 1.442695
    %v4569 = vpow.pop %v4568
    %v4570 = vmul.f32 %v4559, 1.442695
    %v4571 = vpow.pop %v4570
    %v4572 = vmul.f32 %v4560, 1.442695
    %v4573 = vpow.pop %v4572
    %v4574 = vmul.f32 %v4561, 1.442695
    %v4575 = vpow.pop %v4574
    %v4576 = vmul.f32 %v4563, %v521
    %v4577 = vmul.f32 %v4565, %v522
    %v4578 = vmul.f32 %v4567, %v523
    %v4579 = vmul.f32 %v4569, %v524
    %v4580 = vmul.f32 %v4571, %v525
    %v4581 = vmul.f32 %v4573, %v526
    %v4582 = vmul.f32 %v4575, %v527
    %v4583 = vsel %vm975, %v4576, 0.0
    %4584 = vadd.xlane.f32.xlu0 %v4583
    %v4585 = vpop.xlane.xlu0 %4584
    %v4586 = vsel %vm975, %v4577, 0.0
    %4587 = vadd.xlane.f32.xlu0 %v4586
    %v4588 = vpop.xlane.xlu0 %4587
    %v4589 = vsel %vm975, %v4578, 0.0
    %4590 = vadd.xlane.f32.xlu0 %v4589
    %v4591 = vpop.xlane.xlu0 %4590
    %v4592 = vsel %vm975, %v4579, 0.0
    %4593 = vadd.xlane.f32.xlu0 %v4592
    %v4594 = vpop.xlane.xlu0 %4593
    %v4595 = vsel %vm975, %v4580, 0.0
    %4596 = vadd.xlane.f32.xlu0 %v4595
    %v4597 = vpop.xlane.xlu0 %4596
    %v4598 = vsel %vm975, %v4581, 0.0
    %4599 = vadd.xlane.f32.xlu0 %v4598
    %v4600 = vpop.xlane.xlu0 %4599
    %v4601 = vsel %vm994, %v4582, 0.0
    %4602 = vadd.xlane.f32.xlu0 %v4601
    %v4603 = vpop.xlane.xlu0 %4602
    %v4604 = vrcp.pop %v4585
    %v4605 = vrcp.pop %v4588
    %v4606 = vrcp.pop %v4591
    %v4607 = vrcp.pop %v4594
    %v4608 = vrcp.pop %v4597
    %v4609 = vrcp.pop %v4600
    %v4610 = vrcp.pop %v4603
    %v4611 = vmul.f32 %v4576, %v4604
    %v4612 = vmul.f32 %v4577, %v4605
    %v4613 = vmul.f32 %v4578, %v4606
    %v4614 = vmul.f32 %v4579, %v4607
    %v4615 = vmul.f32 %v4580, %v4608
    %v4616 = vmul.f32 %v4581, %v4609
    %v4617 = vmul.f32 %v4582, %v4610
    %4625 = vrot.lane.b32.xlu0 %v4392, 96
    %v4626 = vpop.permute.xlu0 %4625
    %4627 = vrot.lane.b32.xlu0 %v4393, 96
    %v4628 = vpop.permute.xlu0 %4627
    %4629 = vrot.lane.b32.xlu0 %v4394, 96
    %v4630 = vpop.permute.xlu0 %4629
    %4631 = vrot.lane.b32.xlu0 %v4395, 96
    %v4632 = vpop.permute.xlu0 %4631
    %4633 = vrot.lane.b32.xlu0 %v4396, 96
    %v4634 = vpop.permute.xlu0 %4633
    %4635 = vrot.lane.b32.xlu0 %v4397, 96
    %v4636 = vpop.permute.xlu0 %4635
    %4637 = vrot.lane.b32.xlu0 %v4398, 96
    %v4638 = vpop.permute.xlu0 %4637
    %v4646 = vsel %vm975, %v4611, 0
    %v4649 = vsel %vm975, %v4612, 0
    %v4652 = vsel %vm975, %v4613, 0
    %v4655 = vsel %vm975, %v4614, 0
    %v4658 = vsel %vm975, %v4615, 0
    %v4661 = vsel %vm975, %v4616, 0
    %v4664 = vsel %vm975, %v4617, 0
    %v4666 = vsel %vm1353, %v4638, 0
    %4668 = vmatprep.subr.mxu0 0.0
    %4669 = vmatpush1.msra.mxu0 %v4626
    %4670 = vmatprep.subr.mxu0 0.0
    %4671 = vmatpush1.msra.mxu0 %v4628
    %4672 = vmatprep.subr.mxu0 0.0
    %4673 = vmatpush1.msra.mxu0 %v4630
    %4674 = vmatprep.subr.mxu0 0.0
    %4675 = vmatpush1.msra.mxu0 %v4632
    %4676 = vmatprep.subr.mxu0 0.0
    %4677 = vmatpush1.msra.mxu0 %v4634
    %4678 = vmatprep.subr.mxu0 0.0
    %4679 = vmatpush1.msra.mxu0 %v4636
    %4680 = vmatprep.subr.mxu0 0.0
    %4681 = vmatpush1.msra.mxu0 %v4666
    %4682 = vmatprep.subr.mxu0 0.0
    %4683 = vmatpush1.msra.mxu0 0.0
    %4684 = vmatprep.subr.mxu0 0.0
    %4685 = vmatpush1.msra.mxu0 0.0
    %4686 = vmatprep.subr.mxu0 0.0
    %4687 = vmatpush1.msra.mxu0 0.0
    %4688 = vmatprep.subr.mxu0 0.0
    %4689 = vmatpush1.msra.mxu0 0.0
    %4690 = vmatprep.subr.mxu0 0.0
    %4691 = vmatpush1.msra.mxu0 0.0
    %4692 = vmatprep.subr.mxu0 0.0
    %4693 = vmatpush1.msra.mxu0 0.0
    %4694 = vmatprep.subr.mxu0 0.0
    %4695 = vmatpush1.msra.mxu0 0.0
    %4696 = vmatprep.subr.mxu0 0.0
    %4697 = vmatpush1.msra.mxu0 0.0
    %4698 = vmatprep.subr.mxu0 0.0
    %4699 = vmatpush1.msra.mxu0 0.0
    %4700 = vmatprep.subr.mxu0 0.0
    %4701 = vmatpush1.msra.mxu0 0.0
    %4702 = vmatprep.subr.mxu0 0.0
    %4703 = vmatpush1.msra.mxu0 0.0
    %4704 = vmatprep.subr.mxu0 0.0
    %4705 = vmatpush1.msra.mxu0 0.0
    %4706 = vmatprep.subr.mxu0 0.0
    %4707 = vmatpush1.msra.mxu0 0.0
    %4708 = vmatprep.subr.mxu0 0.0
    %4709 = vmatpush1.msra.mxu0 0.0
    %4710 = vmatprep.subr.mxu0 0.0
    %4711 = vmatpush1.msra.mxu0 0.0
    %4712 = vmatprep.subr.mxu0 0.0
    %4713 = vmatpush1.msra.mxu0 0.0
    %4714 = vmatprep.subr.mxu0 0.0
    %4715 = vmatpush1.msra.mxu0 0.0
    %4716 = vmatprep.subr.mxu0 0.0
    %4717 = vmatpush1.msra.mxu0 0.0
    %4718 = vmatprep.subr.mxu0 0.0
    %4719 = vmatpush1.msra.mxu0 0.0
    %4720 = vmatprep.subr.mxu0 0.0
    %4721 = vmatpush1.msra.mxu0 0.0
    %4722 = vmatprep.subr.mxu0 0.0
    %4723 = vmatpush1.msra.mxu0 0.0
    %4724 = vmatprep.subr.mxu0 0.0
    %4725 = vmatpush1.msra.mxu0 0.0
    %4726 = vmatprep.subr.mxu0 0.0
    %4727 = vmatpush1.msra.mxu0 0.0
    %4728 = vmatprep.subr.mxu0 0.0
    %4729 = vmatpush1.msra.mxu0 0.0
    %4730 = vmatprep.subr.mxu0 0.0
    %4731 = vmatpush1.msra.mxu0 0.0
    %4732 = vmatprep.mubr.f32.mxu0 0.0
    %4733 = vmatmul.mubr.f32.gmra.mrb[0].mxu0 %v4646
    %v4734 = vpop.f32.mrb[0].mxu0
    %v4735 = vadd.f32 0.0, %v4734
    %v4736 = vpop.f32.mrb[0].mxu0
    %4737 = vmatprep.mubr.f32.mxu0 0.0
    %4738 = vmatmul.mubr.f32.gmra.mrb[0].mxu0 %v4649
    %v4739 = vpop.f32.mrb[0].mxu0
    %v4740 = vadd.f32 0.0, %v4739
    %v4741 = vpop.f32.mrb[0].mxu0
    %4742 = vmatprep.mubr.f32.mxu0 0.0
    %4743 = vmatmul.mubr.f32.gmra.mrb[0].mxu0 %v4652
    %v4744 = vpop.f32.mrb[0].mxu0
    %v4745 = vadd.f32 0.0, %v4744
    %v4746 = vpop.f32.mrb[0].mxu0
    %4747 = vmatprep.mubr.f32.mxu0 0.0
    %4748 = vmatmul.mubr.f32.gmra.mrb[0].mxu0 %v4655
    %v4749 = vpop.f32.mrb[0].mxu0
    %v4750 = vadd.f32 0.0, %v4749
    %v4751 = vpop.f32.mrb[0].mxu0
    %4752 = vmatprep.mubr.f32.mxu0 0.0
    %4753 = vmatmul.mubr.f32.gmra.mrb[0].mxu0 %v4658
    %v4754 = vpop.f32.mrb[0].mxu0
    %v4755 = vadd.f32 0.0, %v4754
    %v4756 = vpop.f32.mrb[0].mxu0
    %4757 = vmatprep.mubr.f32.mxu0 0.0
    %4758 = vmatmul.mubr.f32.gmra.mrb[0].mxu0 %v4661
    %v4759 = vpop.f32.mrb[0].mxu0
    %v4760 = vadd.f32 0.0, %v4759
    %v4761 = vpop.f32.mrb[0].mxu0
    %4762 = vmatprep.mubr.f32.mxu0 0.0
    %4763 = vmatmul.mubr.f32.gmra.mrb[0].mxu0 %v4664
    %v4764 = vpop.f32.mrb[0].mxu0
    %v4765 = vadd.f32 0.0, %v4764
    %v4766 = vpop.f32.mrb[0].mxu0
    %4767 = vdwg.mxu0
    %v4768 = vadd.f32 %v4378, %v4735
    %v4769 = vadd.f32 %v4379, %v4740
    %v4770 = vadd.f32 %v4380, %v4745
    %v4771 = vadd.f32 %v4381, %v4750
    %v4772 = vadd.f32 %v4382, %v4755
    %v4773 = vadd.f32 %v4383, %v4760
    %v4774 = vadd.f32 %v4384, %v4765
    %v4776 = vsel %vm539, %v4768, 0
    %v4779 = vsel %vm539, %v4769, 0
    %v4782 = vsel %vm539, %v4770, 0
    %v4785 = vsel %vm539, %v4771, 0
    %v4788 = vsel %vm539, %v4772, 0
    %v4791 = vsel %vm539, %v4773, 0
    %v4794 = vsel %vm539, %v4774, 0
    %4796 = vmatprep.subr.mxu0 0.0
    %4797 = vmatpush1.msra.mxu0 %v2948
    %4798 = vmatprep.subr.mxu0 0.0
    %4799 = vmatpush1.msra.mxu0 %v2949
    %4800 = vmatprep.subr.mxu0 0.0
    %4801 = vmatpush1.msra.mxu0 0.0
    %4802 = vmatprep.subr.mxu0 0.0
    %4803 = vmatpush1.msra.mxu0 0.0
    %4804 = vmatprep.subr.mxu0 0.0
    %4805 = vmatpush1.msra.mxu0 0.0
    %4806 = vmatprep.subr.mxu0 0.0
    %4807 = vmatpush1.msra.mxu0 0.0
    %4808 = vmatprep.subr.mxu0 0.0
    %4809 = vmatpush1.msra.mxu0 0.0
    %4810 = vmatprep.subr.mxu0 0.0
    %4811 = vmatpush1.msra.mxu0 0.0
    %4812 = vmatprep.subr.mxu0 0.0
    %4813 = vmatpush1.msra.mxu0 0.0
    %4814 = vmatprep.subr.mxu0 0.0
    %4815 = vmatpush1.msra.mxu0 0.0
    %4816 = vmatprep.subr.mxu0 0.0
    %4817 = vmatpush1.msra.mxu0 0.0
    %4818 = vmatprep.subr.mxu0 0.0
    %4819 = vmatpush1.msra.mxu0 0.0
    %4820 = vmatprep.subr.mxu0 0.0
    %4821 = vmatpush1.msra.mxu0 0.0
    %4822 = vmatprep.subr.mxu0 0.0
    %4823 = vmatpush1.msra.mxu0 0.0
    %4824 = vmatprep.subr.mxu0 0.0
    %4825 = vmatpush1.msra.mxu0 0.0
    %4826 = vmatprep.subr.mxu0 0.0
    %4827 = vmatpush1.msra.mxu0 0.0
    %4828 = vmatprep.subr.mxu0 0.0
    %4829 = vmatpush1.msra.mxu0 0.0
    %4830 = vmatprep.subr.mxu0 0.0
    %4831 = vmatpush1.msra.mxu0 0.0
    %4832 = vmatprep.subr.mxu0 0.0
    %4833 = vmatpush1.msra.mxu0 0.0
    %4834 = vmatprep.subr.mxu0 0.0
    %4835 = vmatpush1.msra.mxu0 0.0
    %4836 = vmatprep.subr.mxu0 0.0
    %4837 = vmatpush1.msra.mxu0 0.0
    %4838 = vmatprep.subr.mxu0 0.0
    %4839 = vmatpush1.msra.mxu0 0.0
    %4840 = vmatprep.subr.mxu0 0.0
    %4841 = vmatpush1.msra.mxu0 0.0
    %4842 = vmatprep.subr.mxu0 0.0
    %4843 = vmatpush1.msra.mxu0 0.0
    %4844 = vmatprep.subr.mxu0 0.0
    %4845 = vmatpush1.msra.mxu0 0.0
    %4846 = vmatprep.subr.mxu0 0.0
    %4847 = vmatpush1.msra.mxu0 0.0
    %4848 = vmatprep.subr.mxu0 0.0
    %4849 = vmatpush1.msra.mxu0 0.0
    %4850 = vmatprep.subr.mxu0 0.0
    %4851 = vmatpush1.msra.mxu0 0.0
    %4852 = vmatprep.subr.mxu0 0.0
    %4853 = vmatpush1.msra.mxu0 0.0
    %4854 = vmatprep.subr.mxu0 0.0
    %4855 = vmatpush1.msra.mxu0 0.0
    %4856 = vmatprep.subr.mxu0 0.0
    %4857 = vmatpush1.msra.mxu0 0.0
    %4858 = vmatprep.subr.mxu0 0.0
    %4859 = vmatpush1.msra.mxu0 0.0
    %4860 = vmatprep.mubr.f32.mxu0 0.0
    %4861 = vmatmul.mubr.f32.gmra.mrb[0].mxu0 %v4776
    %v4862 = vpop.f32.mrb[0].mxu0
    %v4863 = vadd.f32 0.0, %v4862
    %v4864 = vpop.f32.mrb[0].mxu0
    %4865 = vmatprep.mubr.f32.mxu0 0.0
    %4866 = vmatmul.mubr.f32.gmra.mrb[0].mxu0 %v4779
    %v4867 = vpop.f32.mrb[0].mxu0
    %v4868 = vadd.f32 0.0, %v4867
    %v4869 = vpop.f32.mrb[0].mxu0
    %4870 = vmatprep.mubr.f32.mxu0 0.0
    %4871 = vmatmul.mubr.f32.gmra.mrb[0].mxu0 %v4782
    %v4872 = vpop.f32.mrb[0].mxu0
    %v4873 = vadd.f32 0.0, %v4872
    %v4874 = vpop.f32.mrb[0].mxu0
    %4875 = vmatprep.mubr.f32.mxu0 0.0
    %4876 = vmatmul.mubr.f32.gmra.mrb[0].mxu0 %v4785
    %v4877 = vpop.f32.mrb[0].mxu0
    %v4878 = vadd.f32 0.0, %v4877
    %v4879 = vpop.f32.mrb[0].mxu0
    %4880 = vmatprep.mubr.f32.mxu0 0.0
    %4881 = vmatmul.mubr.f32.gmra.mrb[0].mxu0 %v4788
    %v4882 = vpop.f32.mrb[0].mxu0
    %v4883 = vadd.f32 0.0, %v4882
    %v4884 = vpop.f32.mrb[0].mxu0
    %4885 = vmatprep.mubr.f32.mxu0 0.0
    %4886 = vmatmul.mubr.f32.gmra.mrb[0].mxu0 %v4791
    %v4887 = vpop.f32.mrb[0].mxu0
    %v4888 = vadd.f32 0.0, %v4887
    %v4889 = vpop.f32.mrb[0].mxu0
    %4890 = vmatprep.mubr.f32.mxu0 0.0
    %4891 = vmatmul.mubr.f32.gmra.mrb[0].mxu0 %v4794
    %v4892 = vpop.f32.mrb[0].mxu0
    %v4893 = vadd.f32 0.0, %v4892
    %v4894 = vpop.f32.mrb[0].mxu0
    %4895 = vdwg.mxu0
    %v4896 = vadd.f32 %v2938, %v4863
    %v4897 = vadd.f32 %v2939, %v4868
    %v4898 = vadd.f32 %v2940, %v4873
    %v4899 = vadd.f32 %v2941, %v4878
    %v4900 = vadd.f32 %v2942, %v4883
    %v4901 = vadd.f32 %v2943, %v4888
    %v4902 = vadd.f32 %v2944, %v4893
    %v4903 = vlaneseq
    %v4904 = vshrl.u32 %v4903, 7
    %v4905 = vsub.s32 3, %v4904
    %v4906 = vrot.slane %v2945, %v4905
    %v4907 = vadd.f32 %v4896, %v4906
    %v4908 = vadd.f32 %v4897, %v4906
    %v4909 = vadd.f32 %v4898, %v4906
    %v4910 = vadd.f32 %v4899, %v4906
    %v4911 = vadd.f32 %v4900, %v4906
    %v4912 = vadd.f32 %v4901, %v4906
    %v4913 = vadd.f32 %v4902, %v4906
    %v4914 = vsel %vm539, %v4907, 0.0
    %4915 = vadd.xlane.f32.xlu0 %v4914
    %v4916 = vpop.xlane.xlu0 %4915
    %v4917 = vsel %vm539, %v4908, 0.0
    %4918 = vadd.xlane.f32.xlu0 %v4917
    %v4919 = vpop.xlane.xlu0 %4918
    %v4920 = vsel %vm539, %v4909, 0.0
    %4921 = vadd.xlane.f32.xlu0 %v4920
    %v4922 = vpop.xlane.xlu0 %4921
    %v4923 = vsel %vm539, %v4910, 0.0
    %4924 = vadd.xlane.f32.xlu0 %v4923
    %v4925 = vpop.xlane.xlu0 %4924
    %v4926 = vsel %vm539, %v4911, 0.0
    %4927 = vadd.xlane.f32.xlu0 %v4926
    %v4928 = vpop.xlane.xlu0 %4927
    %v4929 = vsel %vm539, %v4912, 0.0
    %4930 = vadd.xlane.f32.xlu0 %v4929
    %v4931 = vpop.xlane.xlu0 %4930
    %v4932 = vsel %vm558, %v4913, 0.0
    %4933 = vadd.xlane.f32.xlu0 %v4932
    %v4934 = vpop.xlane.xlu0 %4933
    %v4935 = vmul.f32 %v4916, %v562
    %v4936 = vmul.f32 %v4919, %v562
    %v4937 = vmul.f32 %v4922, %v562
    %v4938 = vmul.f32 %v4925, %v562
    %v4939 = vmul.f32 %v4928, %v562
    %v4940 = vmul.f32 %v4931, %v562
    %v4941 = vmul.f32 %v4934, %v562
    %v4942 = vmul.f32 %v4907, %v4907
    %v4943 = vmul.f32 %v4908, %v4908
    %v4944 = vmul.f32 %v4909, %v4909
    %v4945 = vmul.f32 %v4910, %v4910
    %v4946 = vmul.f32 %v4911, %v4911
    %v4947 = vmul.f32 %v4912, %v4912
    %v4948 = vmul.f32 %v4913, %v4913
    %v4949 = vsel %vm539, %v4942, 0.0
    %4950 = vadd.xlane.f32.xlu0 %v4949
    %v4951 = vpop.xlane.xlu0 %4950
    %v4952 = vsel %vm539, %v4943, 0.0
    %4953 = vadd.xlane.f32.xlu0 %v4952
    %v4954 = vpop.xlane.xlu0 %4953
    %v4955 = vsel %vm539, %v4944, 0.0
    %4956 = vadd.xlane.f32.xlu0 %v4955
    %v4957 = vpop.xlane.xlu0 %4956
    %v4958 = vsel %vm539, %v4945, 0.0
    %4959 = vadd.xlane.f32.xlu0 %v4958
    %v4960 = vpop.xlane.xlu0 %4959
    %v4961 = vsel %vm539, %v4946, 0.0
    %4962 = vadd.xlane.f32.xlu0 %v4961
    %v4963 = vpop.xlane.xlu0 %4962
    %v4964 = vsel %vm539, %v4947, 0.0
    %4965 = vadd.xlane.f32.xlu0 %v4964
    %v4966 = vpop.xlane.xlu0 %4965
    %v4967 = vsel %vm558, %v4948, 0.0
    %4968 = vadd.xlane.f32.xlu0 %v4967
    %v4969 = vpop.xlane.xlu0 %4968
    %v4970 = vmul.f32 %v4951, %v562
    %v4971 = vmul.f32 %v4954, %v562
    %v4972 = vmul.f32 %v4957, %v562
    %v4973 = vmul.f32 %v4960, %v562
    %v4974 = vmul.f32 %v4963, %v562
    %v4975 = vmul.f32 %v4966, %v562
    %v4976 = vmul.f32 %v4969, %v562
    %v4977 = vsub.f32 %v4907, %v4935
    %v4978 = vsub.f32 %v4908, %v4936
    %v4979 = vsub.f32 %v4909, %v4937
    %v4980 = vsub.f32 %v4910, %v4938
    %v4981 = vsub.f32 %v4911, %v4939
    %v4982 = vsub.f32 %v4912, %v4940
    %v4983 = vsub.f32 %v4913, %v4941
    %v4984 = vmul.f32 %v4935, %v4935
    %v4985 = vmul.f32 %v4936, %v4936
    %v4986 = vmul.f32 %v4937, %v4937
    %v4987 = vmul.f32 %v4938, %v4938
    %v4988 = vmul.f32 %v4939, %v4939
    %v4989 = vmul.f32 %v4940, %v4940
    %v4990 = vmul.f32 %v4941, %v4941
    %v4991 = vsub.f32 %v4970, %v4984
    %v4992 = vsub.f32 %v4971, %v4985
    %v4993 = vsub.f32 %v4972, %v4986
    %v4994 = vsub.f32 %v4973, %v4987
    %v4995 = vsub.f32 %v4974, %v4988
    %v4996 = vsub.f32 %v4975, %v4989
    %v4997 = vsub.f32 %v4976, %v4990
    %v4998 = vadd.f32 %v4991, 1e-05
    %v4999 = vadd.f32 %v4992, 1e-05
    %v5000 = vadd.f32 %v4993, 1e-05
    %v5001 = vadd.f32 %v4994, 1e-05
    %v5002 = vadd.f32 %v4995, 1e-05
    %v5003 = vadd.f32 %v4996, 1e-05
    %v5004 = vadd.f32 %v4997, 1e-05
    %v5005 = vrsqrt.pop %v4998
    %v5006 = vrsqrt.pop %v4999
    %v5007 = vrsqrt.pop %v5000
    %v5008 = vrsqrt.pop %v5001
    %v5009 = vrsqrt.pop %v5002
    %v5010 = vrsqrt.pop %v5003
    %v5011 = vrsqrt.pop %v5004
    %v5012 = vmul.f32 %v4977, %v5005
    %v5013 = vmul.f32 %v4978, %v5006
    %v5014 = vmul.f32 %v4979, %v5007
    %v5015 = vmul.f32 %v4980, %v5008
    %v5016 = vmul.f32 %v4981, %v5009
    %v5017 = vmul.f32 %v4982, %v5010
    %v5018 = vmul.f32 %v4983, %v5011
    %v5019 = vlaneseq
    %v5020 = vshrl.u32 %v5019, 7
    %v5021 = vsub.s32 4, %v5020
    %v5022 = vrot.slane %v2945, %v5021
    %v5023 = vmul.f32 %v5012, %v5022
    %v5024 = vmul.f32 %v5013, %v5022
    %v5025 = vmul.f32 %v5014, %v5022
    %v5026 = vmul.f32 %v5015, %v5022
    %v5027 = vmul.f32 %v5016, %v5022
    %v5028 = vmul.f32 %v5017, %v5022
    %v5029 = vmul.f32 %v5018, %v5022
    %v5030 = vlaneseq
    %v5031 = vshrl.u32 %v5030, 7
    %v5032 = vsub.s32 5, %v5031
    %v5033 = vrot.slane %v2945, %v5032
    %v5034 = vadd.f32 %v5023, %v5033
    %v5035 = vadd.f32 %v5024, %v5033
    %v5036 = vadd.f32 %v5025, %v5033
    %v5037 = vadd.f32 %v5026, %v5033
    %v5038 = vadd.f32 %v5027, %v5033
    %v5039 = vadd.f32 %v5028, %v5033
    %v5040 = vadd.f32 %v5029, %v5033
    %v5041 = vlaneseq
    %v5042 = vshrl.u32 %v5041, 7
    %v5043 = vsub.s32 6, %v5042
    %v5044 = vrot.slane %v2945, %v5043
    %v5046 = vsel %vm539, %v5034, 0
    %v5049 = vsel %vm539, %v5035, 0
    %v5052 = vsel %vm539, %v5036, 0
    %v5055 = vsel %vm539, %v5037, 0
    %v5058 = vsel %vm539, %v5038, 0
    %v5061 = vsel %vm539, %v5039, 0
    %v5064 = vsel %vm539, %v5040, 0
    %5066 = vmatprep.subr.mxu0 0.0
    %5067 = vmatpush1.msra.mxu0 %v2950
    %5068 = vmatprep.subr.mxu0 0.0
    %5069 = vmatpush1.msra.mxu0 %v2951
    %5070 = vmatprep.subr.mxu0 0.0
    %5071 = vmatpush1.msra.mxu0 0.0
    %5072 = vmatprep.subr.mxu0 0.0
    %5073 = vmatpush1.msra.mxu0 0.0
    %5074 = vmatprep.subr.mxu0 0.0
    %5075 = vmatpush1.msra.mxu0 0.0
    %5076 = vmatprep.subr.mxu0 0.0
    %5077 = vmatpush1.msra.mxu0 0.0
    %5078 = vmatprep.subr.mxu0 0.0
    %5079 = vmatpush1.msra.mxu0 0.0
    %5080 = vmatprep.subr.mxu0 0.0
    %5081 = vmatpush1.msra.mxu0 0.0
    %5082 = vmatprep.subr.mxu0 0.0
    %5083 = vmatpush1.msra.mxu0 0.0
    %5084 = vmatprep.subr.mxu0 0.0
    %5085 = vmatpush1.msra.mxu0 0.0
    %5086 = vmatprep.subr.mxu0 0.0
    %5087 = vmatpush1.msra.mxu0 0.0
    %5088 = vmatprep.subr.mxu0 0.0
    %5089 = vmatpush1.msra.mxu0 0.0
    %5090 = vmatprep.subr.mxu0 0.0
    %5091 = vmatpush1.msra.mxu0 0.0
    %5092 = vmatprep.subr.mxu0 0.0
    %5093 = vmatpush1.msra.mxu0 0.0
    %5094 = vmatprep.subr.mxu0 0.0
    %5095 = vmatpush1.msra.mxu0 0.0
    %5096 = vmatprep.subr.mxu0 0.0
    %5097 = vmatpush1.msra.mxu0 0.0
    %5098 = vmatprep.subr.mxu0 0.0
    %5099 = vmatpush1.msra.mxu0 0.0
    %5100 = vmatprep.subr.mxu0 0.0
    %5101 = vmatpush1.msra.mxu0 0.0
    %5102 = vmatprep.subr.mxu0 0.0
    %5103 = vmatpush1.msra.mxu0 0.0
    %5104 = vmatprep.subr.mxu0 0.0
    %5105 = vmatpush1.msra.mxu0 0.0
    %5106 = vmatprep.subr.mxu0 0.0
    %5107 = vmatpush1.msra.mxu0 0.0
    %5108 = vmatprep.subr.mxu0 0.0
    %5109 = vmatpush1.msra.mxu0 0.0
    %5110 = vmatprep.subr.mxu0 0.0
    %5111 = vmatpush1.msra.mxu0 0.0
    %5112 = vmatprep.subr.mxu0 0.0
    %5113 = vmatpush1.msra.mxu0 0.0
    %5114 = vmatprep.subr.mxu0 0.0
    %5115 = vmatpush1.msra.mxu0 0.0
    %5116 = vmatprep.subr.mxu0 0.0
    %5117 = vmatpush1.msra.mxu0 0.0
    %5118 = vmatprep.subr.mxu0 0.0
    %5119 = vmatpush1.msra.mxu0 0.0
    %5120 = vmatprep.subr.mxu0 0.0
    %5121 = vmatpush1.msra.mxu0 0.0
    %5122 = vmatprep.subr.mxu0 0.0
    %5123 = vmatpush1.msra.mxu0 0.0
    %5124 = vmatprep.subr.mxu0 0.0
    %5125 = vmatpush1.msra.mxu0 0.0
    %5126 = vmatprep.subr.mxu0 0.0
    %5127 = vmatpush1.msra.mxu0 0.0
    %5128 = vmatprep.subr.mxu0 0.0
    %5129 = vmatpush1.msra.mxu0 0.0
    %5130 = vmatprep.mubr.f32.mxu0 0.0
    %5131 = vmatmul.mubr.f32.gmra.mrb[0].mxu0 %v5046
    %v5132 = vpop.f32.mrb[0].mxu0
    %v5133 = vadd.f32 %v5044, %v5132
    %v5134 = vpop.f32.mrb[0].mxu0
    %5135 = vmatprep.mubr.f32.mxu0 0.0
    %5136 = vmatmul.mubr.f32.gmra.mrb[0].mxu0 %v5049
    %v5137 = vpop.f32.mrb[0].mxu0
    %v5138 = vadd.f32 %v5044, %v5137
    %v5139 = vpop.f32.mrb[0].mxu0
    %5140 = vmatprep.mubr.f32.mxu0 0.0
    %5141 = vmatmul.mubr.f32.gmra.mrb[0].mxu0 %v5052
    %v5142 = vpop.f32.mrb[0].mxu0
    %v5143 = vadd.f32 %v5044, %v5142
    %v5144 = vpop.f32.mrb[0].mxu0
    %5145 = vmatprep.mubr.f32.mxu0 0.0
    %5146 = vmatmul.mubr.f32.gmra.mrb[0].mxu0 %v5055
    %v5147 = vpop.f32.mrb[0].mxu0
    %v5148 = vadd.f32 %v5044, %v5147
    %v5149 = vpop.f32.mrb[0].mxu0
    %5150 = vmatprep.mubr.f32.mxu0 0.0
    %5151 = vmatmul.mubr.f32.gmra.mrb[0].mxu0 %v5058
    %v5152 = vpop.f32.mrb[0].mxu0
    %v5153 = vadd.f32 %v5044, %v5152
    %v5154 = vpop.f32.mrb[0].mxu0
    %5155 = vmatprep.mubr.f32.mxu0 0.0
    %5156 = vmatmul.mubr.f32.gmra.mrb[0].mxu0 %v5061
    %v5157 = vpop.f32.mrb[0].mxu0
    %v5158 = vadd.f32 %v5044, %v5157
    %v5159 = vpop.f32.mrb[0].mxu0
    %5160 = vmatprep.mubr.f32.mxu0 0.0
    %5161 = vmatmul.mubr.f32.gmra.mrb[0].mxu0 %v5064
    %v5162 = vpop.f32.mrb[0].mxu0
    %v5163 = vadd.f32 %v5044, %v5162
    %v5164 = vpop.f32.mrb[0].mxu0
    %5165 = vdwg.mxu0
    %v5166 = vmax.f32 %v5133, 0.0
    %v5167 = vmax.f32 %v5138, 0.0
    %v5168 = vmax.f32 %v5143, 0.0
    %v5169 = vmax.f32 %v5148, 0.0
    %v5170 = vmax.f32 %v5153, 0.0
    %v5171 = vmax.f32 %v5158, 0.0
    %v5172 = vmax.f32 %v5163, 0.0
    %v5174 = vsel %vm100, %v5166, 0
    %v5177 = vsel %vm100, %v5167, 0
    %v5180 = vsel %vm100, %v5168, 0
    %v5183 = vsel %vm100, %v5169, 0
    %v5186 = vsel %vm100, %v5170, 0
    %v5189 = vsel %vm100, %v5171, 0
    %v5192 = vsel %vm100, %v5172, 0
    %5194 = vmatprep.subr.mxu0 0.0
    %5195 = vmatpush1.msra.mxu0 %v2952
    %5196 = vmatprep.subr.mxu0 0.0
    %5197 = vmatpush1.msra.mxu0 %v2953
    %5198 = vmatprep.subr.mxu0 0.0
    %5199 = vmatpush1.msra.mxu0 %v2954
    %5200 = vmatprep.subr.mxu0 0.0
    %5201 = vmatpush1.msra.mxu0 %v2955
    %5202 = vmatprep.subr.mxu0 0.0
    %5203 = vmatpush1.msra.mxu0 0.0
    %5204 = vmatprep.subr.mxu0 0.0
    %5205 = vmatpush1.msra.mxu0 0.0
    %5206 = vmatprep.subr.mxu0 0.0
    %5207 = vmatpush1.msra.mxu0 0.0
    %5208 = vmatprep.subr.mxu0 0.0
    %5209 = vmatpush1.msra.mxu0 0.0
    %5210 = vmatprep.subr.mxu0 0.0
    %5211 = vmatpush1.msra.mxu0 0.0
    %5212 = vmatprep.subr.mxu0 0.0
    %5213 = vmatpush1.msra.mxu0 0.0
    %5214 = vmatprep.subr.mxu0 0.0
    %5215 = vmatpush1.msra.mxu0 0.0
    %5216 = vmatprep.subr.mxu0 0.0
    %5217 = vmatpush1.msra.mxu0 0.0
    %5218 = vmatprep.subr.mxu0 0.0
    %5219 = vmatpush1.msra.mxu0 0.0
    %5220 = vmatprep.subr.mxu0 0.0
    %5221 = vmatpush1.msra.mxu0 0.0
    %5222 = vmatprep.subr.mxu0 0.0
    %5223 = vmatpush1.msra.mxu0 0.0
    %5224 = vmatprep.subr.mxu0 0.0
    %5225 = vmatpush1.msra.mxu0 0.0
    %5226 = vmatprep.subr.mxu0 0.0
    %5227 = vmatpush1.msra.mxu0 0.0
    %5228 = vmatprep.subr.mxu0 0.0
    %5229 = vmatpush1.msra.mxu0 0.0
    %5230 = vmatprep.subr.mxu0 0.0
    %5231 = vmatpush1.msra.mxu0 0.0
    %5232 = vmatprep.subr.mxu0 0.0
    %5233 = vmatpush1.msra.mxu0 0.0
    %5234 = vmatprep.subr.mxu0 0.0
    %5235 = vmatpush1.msra.mxu0 0.0
    %5236 = vmatprep.subr.mxu0 0.0
    %5237 = vmatpush1.msra.mxu0 0.0
    %5238 = vmatprep.subr.mxu0 0.0
    %5239 = vmatpush1.msra.mxu0 0.0
    %5240 = vmatprep.subr.mxu0 0.0
    %5241 = vmatpush1.msra.mxu0 0.0
    %5242 = vmatprep.subr.mxu0 0.0
    %5243 = vmatpush1.msra.mxu0 0.0
    %5244 = vmatprep.subr.mxu0 0.0
    %5245 = vmatpush1.msra.mxu0 0.0
    %5246 = vmatprep.subr.mxu0 0.0
    %5247 = vmatpush1.msra.mxu0 0.0
    %5248 = vmatprep.subr.mxu0 0.0
    %5249 = vmatpush1.msra.mxu0 0.0
    %5250 = vmatprep.subr.mxu0 0.0
    %5251 = vmatpush1.msra.mxu0 0.0
    %5252 = vmatprep.subr.mxu0 0.0
    %5253 = vmatpush1.msra.mxu0 0.0
    %5254 = vmatprep.subr.mxu0 0.0
    %5255 = vmatpush1.msra.mxu0 0.0
    %5256 = vmatprep.subr.mxu0 0.0
    %5257 = vmatpush1.msra.mxu0 0.0
    %5258 = vmatprep.mubr.f32.mxu0 0.0
    %5259 = vmatmul.mubr.f32.gmra.mrb[0].mxu0 %v5174
    %v5260 = vpop.f32.mrb[0].mxu0
    %v5261 = vadd.f32 0.0, %v5260
    %v5262 = vpop.f32.mrb[0].mxu0
    %5263 = vmatprep.mubr.f32.mxu0 0.0
    %5264 = vmatmul.mubr.f32.gmra.mrb[0].mxu0 %v5177
    %v5265 = vpop.f32.mrb[0].mxu0
    %v5266 = vadd.f32 0.0, %v5265
    %v5267 = vpop.f32.mrb[0].mxu0
    %5268 = vmatprep.mubr.f32.mxu0 0.0
    %5269 = vmatmul.mubr.f32.gmra.mrb[0].mxu0 %v5180
    %v5270 = vpop.f32.mrb[0].mxu0
    %v5271 = vadd.f32 0.0, %v5270
    %v5272 = vpop.f32.mrb[0].mxu0
    %5273 = vmatprep.mubr.f32.mxu0 0.0
    %5274 = vmatmul.mubr.f32.gmra.mrb[0].mxu0 %v5183
    %v5275 = vpop.f32.mrb[0].mxu0
    %v5276 = vadd.f32 0.0, %v5275
    %v5277 = vpop.f32.mrb[0].mxu0
    %5278 = vmatprep.mubr.f32.mxu0 0.0
    %5279 = vmatmul.mubr.f32.gmra.mrb[0].mxu0 %v5186
    %v5280 = vpop.f32.mrb[0].mxu0
    %v5281 = vadd.f32 0.0, %v5280
    %v5282 = vpop.f32.mrb[0].mxu0
    %5283 = vmatprep.mubr.f32.mxu0 0.0
    %5284 = vmatmul.mubr.f32.gmra.mrb[0].mxu0 %v5189
    %v5285 = vpop.f32.mrb[0].mxu0
    %v5286 = vadd.f32 0.0, %v5285
    %v5287 = vpop.f32.mrb[0].mxu0
    %5288 = vmatprep.mubr.f32.mxu0 0.0
    %5289 = vmatmul.mubr.f32.gmra.mrb[0].mxu0 %v5192
    %v5290 = vpop.f32.mrb[0].mxu0
    %v5291 = vadd.f32 0.0, %v5290
    %v5292 = vpop.f32.mrb[0].mxu0
    %5293 = vdwg.mxu0
    %v5294 = vadd.f32 %v4907, %v5261
    %v5295 = vadd.f32 %v4908, %v5266
    %v5296 = vadd.f32 %v4909, %v5271
    %v5297 = vadd.f32 %v4910, %v5276
    %v5298 = vadd.f32 %v4911, %v5281
    %v5299 = vadd.f32 %v4912, %v5286
    %v5300 = vadd.f32 %v4913, %v5291
    %v5301 = vlaneseq
    %v5302 = vshrl.u32 %v5301, 7
    %v5303 = vsub.s32 7, %v5302
    %v5304 = vrot.slane %v2945, %v5303
    %v5305 = vadd.f32 %v5294, %v5304
    %v5306 = vadd.f32 %v5295, %v5304
    %v5307 = vadd.f32 %v5296, %v5304
    %v5308 = vadd.f32 %v5297, %v5304
    %v5309 = vadd.f32 %v5298, %v5304
    %v5310 = vadd.f32 %v5299, %v5304
    %v5311 = vadd.f32 %v5300, %v5304
    %v5312 = vld [vmem:[#allocation6 + $0x24] sm:$0x3]
    %v5314 = vsel %vm975, %v5312, 0
    %v5317 = vsel %vm1353, %v5311, 0
    %5319 = vmatprep.subr.mxu0 0.0
    %5320 = vmatpush1.msra.mxu0 %v5305
    %5321 = vmatprep.subr.mxu0 0.0
    %5322 = vmatpush1.msra.mxu0 %v5306
    %5323 = vmatprep.subr.mxu0 0.0
    %5324 = vmatpush1.msra.mxu0 %v5307
    %5325 = vmatprep.subr.mxu0 0.0
    %5326 = vmatpush1.msra.mxu0 %v5308
    %5327 = vmatprep.subr.mxu0 0.0
    %5328 = vmatpush1.msra.mxu0 %v5309
    %5329 = vmatprep.subr.mxu0 0.0
    %5330 = vmatpush1.msra.mxu0 %v5310
    %5331 = vmatprep.subr.mxu0 0.0
    %5332 = vmatpush1.msra.mxu0 %v5317
    %5333 = vmatprep.subr.mxu0 0.0
    %5334 = vmatpush1.msra.mxu0 0.0
    %5335 = vmatprep.subr.mxu0 0.0
    %5336 = vmatpush1.msra.mxu0 0.0
    %5337 = vmatprep.subr.mxu0 0.0
    %5338 = vmatpush1.msra.mxu0 0.0
    %5339 = vmatprep.subr.mxu0 0.0
    %5340 = vmatpush1.msra.mxu0 0.0
    %5341 = vmatprep.subr.mxu0 0.0
    %5342 = vmatpush1.msra.mxu0 0.0
    %5343 = vmatprep.subr.mxu0 0.0
    %5344 = vmatpush1.msra.mxu0 0.0
    %5345 = vmatprep.subr.mxu0 0.0
    %5346 = vmatpush1.msra.mxu0 0.0
    %5347 = vmatprep.subr.mxu0 0.0
    %5348 = vmatpush1.msra.mxu0 0.0
    %5349 = vmatprep.subr.mxu0 0.0
    %5350 = vmatpush1.msra.mxu0 0.0
    %5351 = vmatprep.subr.mxu0 0.0
    %5352 = vmatpush1.msra.mxu0 0.0
    %5353 = vmatprep.subr.mxu0 0.0
    %5354 = vmatpush1.msra.mxu0 0.0
    %5355 = vmatprep.subr.mxu0 0.0
    %5356 = vmatpush1.msra.mxu0 0.0
    %5357 = vmatprep.subr.mxu0 0.0
    %5358 = vmatpush1.msra.mxu0 0.0
    %5359 = vmatprep.subr.mxu0 0.0
    %5360 = vmatpush1.msra.mxu0 0.0
    %5361 = vmatprep.subr.mxu0 0.0
    %5362 = vmatpush1.msra.mxu0 0.0
    %5363 = vmatprep.subr.mxu0 0.0
    %5364 = vmatpush1.msra.mxu0 0.0
    %5365 = vmatprep.subr.mxu0 0.0
    %5366 = vmatpush1.msra.mxu0 0.0
    %5367 = vmatprep.subr.mxu0 0.0
    %5368 = vmatpush1.msra.mxu0 0.0
    %5369 = vmatprep.subr.mxu0 0.0
    %5370 = vmatpush1.msra.mxu0 0.0
    %5371 = vmatprep.subr.mxu0 0.0
    %5372 = vmatpush1.msra.mxu0 0.0
    %5373 = vmatprep.subr.mxu0 0.0
    %5374 = vmatpush1.msra.mxu0 0.0
    %5375 = vmatprep.subr.mxu0 0.0
    %5376 = vmatpush1.msra.mxu0 0.0
    %5377 = vmatprep.subr.mxu0 0.0
    %5378 = vmatpush1.msra.mxu0 0.0
    %5379 = vmatprep.subr.mxu0 0.0
    %5380 = vmatpush1.msra.mxu0 0.0
    %5381 = vmatprep.subr.mxu0 0.0
    %5382 = vmatpush1.msra.mxu0 0.0
    %5383 = vmatprep.mubr.f32.mxu0 0.0
    %5384 = vmatmul.mubr.f32.gmra.mrb[0].mxu0 %v5314
    %v5385 = vpop.f32.mrb[0].mxu0
    %v5386 = vadd.f32 0.0, %v5385
    %v5387 = vpop.f32.mrb[0].mxu0
    %5388 = vdwg.mxu0
    %v5389 = vld [vmem:[#allocation6 + $0x70] sm:$0xff]
    %v5390 = vld [vmem:[#allocation6 + $0x78] sm:$0xff]
    %v5391 = vld [vmem:[#allocation6 + $0x26] sm:$0x1]
    %v5392 = vld [vmem:[#allocation6 + $0x80] sm:$0xff]
    %v5393 = vld [vmem:[#allocation6 + $0x88] sm:$0xff]
    %v5394 = vld [vmem:[#allocation6 + $0x90] sm:$0xff]
    %v5395 = vld [vmem:[#allocation6 + $0x98] sm:$0xff]
    %v5396 = vld [vmem:[#allocation6 + $0x27] sm:$0x1]
    %v5397 = vlaneseq
    %v5398 = vshrl.u32 %v5397, 7
    %v5399 = vsub.s32 0, %v5398
    %v5400 = vrot.slane %v5391, %v5399
    %v5402 = vsel %vm539, %v5386, 0
    %5404 = vmatprep.subr.mxu0 0.0
    %5405 = vmatpush1.msra.mxu0 %v5389
    %5406 = vmatprep.subr.mxu0 0.0
    %5407 = vmatpush1.msra.mxu0 %v5390
    %5408 = vmatprep.subr.mxu0 0.0
    %5409 = vmatpush1.msra.mxu0 0.0
    %5410 = vmatprep.subr.mxu0 0.0
    %5411 = vmatpush1.msra.mxu0 0.0
    %5412 = vmatprep.subr.mxu0 0.0
    %5413 = vmatpush1.msra.mxu0 0.0
    %5414 = vmatprep.subr.mxu0 0.0
    %5415 = vmatpush1.msra.mxu0 0.0
    %5416 = vmatprep.subr.mxu0 0.0
    %5417 = vmatpush1.msra.mxu0 0.0
    %5418 = vmatprep.subr.mxu0 0.0
    %5419 = vmatpush1.msra.mxu0 0.0
    %5420 = vmatprep.subr.mxu0 0.0
    %5421 = vmatpush1.msra.mxu0 0.0
    %5422 = vmatprep.subr.mxu0 0.0
    %5423 = vmatpush1.msra.mxu0 0.0
    %5424 = vmatprep.subr.mxu0 0.0
    %5425 = vmatpush1.msra.mxu0 0.0
    %5426 = vmatprep.subr.mxu0 0.0
    %5427 = vmatpush1.msra.mxu0 0.0
    %5428 = vmatprep.subr.mxu0 0.0
    %5429 = vmatpush1.msra.mxu0 0.0
    %5430 = vmatprep.subr.mxu0 0.0
    %5431 = vmatpush1.msra.mxu0 0.0
    %5432 = vmatprep.subr.mxu0 0.0
    %5433 = vmatpush1.msra.mxu0 0.0
    %5434 = vmatprep.subr.mxu0 0.0
    %5435 = vmatpush1.msra.mxu0 0.0
    %5436 = vmatprep.subr.mxu0 0.0
    %5437 = vmatpush1.msra.mxu0 0.0
    %5438 = vmatprep.subr.mxu0 0.0
    %5439 = vmatpush1.msra.mxu0 0.0
    %5440 = vmatprep.subr.mxu0 0.0
    %5441 = vmatpush1.msra.mxu0 0.0
    %5442 = vmatprep.subr.mxu0 0.0
    %5443 = vmatpush1.msra.mxu0 0.0
    %5444 = vmatprep.subr.mxu0 0.0
    %5445 = vmatpush1.msra.mxu0 0.0
    %5446 = vmatprep.subr.mxu0 0.0
    %5447 = vmatpush1.msra.mxu0 0.0
    %5448 = vmatprep.subr.mxu0 0.0
    %5449 = vmatpush1.msra.mxu0 0.0
    %5450 = vmatprep.subr.mxu0 0.0
    %5451 = vmatpush1.msra.mxu0 0.0
    %5452 = vmatprep.subr.mxu0 0.0
    %5453 = vmatpush1.msra.mxu0 0.0
    %5454 = vmatprep.subr.mxu0 0.0
    %5455 = vmatpush1.msra.mxu0 0.0
    %5456 = vmatprep.subr.mxu0 0.0
    %5457 = vmatpush1.msra.mxu0 0.0
    %5458 = vmatprep.subr.mxu0 0.0
    %5459 = vmatpush1.msra.mxu0 0.0
    %5460 = vmatprep.subr.mxu0 0.0
    %5461 = vmatpush1.msra.mxu0 0.0
    %5462 = vmatprep.subr.mxu0 0.0
    %5463 = vmatpush1.msra.mxu0 0.0
    %5464 = vmatprep.subr.mxu0 0.0
    %5465 = vmatpush1.msra.mxu0 0.0
    %5466 = vmatprep.subr.mxu0 0.0
    %5467 = vmatpush1.msra.mxu0 0.0
    %5468 = vmatprep.mubr.f32.mxu0 0.0
    %5469 = vmatmul.mubr.f32.gmra.mrb[0].mxu0 %v5402
    %v5470 = vpop.f32.mrb[0].mxu0
    %v5471 = vadd.f32 %v5400, %v5470
    %v5472 = vpop.f32.mrb[0].mxu0
    %5473 = vdwg.mxu0
    %v5474 = vmax.f32 %v5471, 0.0
    %v5475 = vlaneseq
    %v5476 = vshrl.u32 %v5475, 7
    %v5477 = vsub.s32 0, %v5476
    %v5478 = vrot.slane %v5396, %v5477
    %v5480 = vsel %vm100, %v5474, 0
    %5482 = vmatprep.subr.mxu0 0.0
    %5483 = vmatpush1.msra.mxu0 %v5392
    %5484 = vmatprep.subr.mxu0 0.0
    %5485 = vmatpush1.msra.mxu0 %v5393
    %5486 = vmatprep.subr.mxu0 0.0
    %5487 = vmatpush1.msra.mxu0 %v5394
    %5488 = vmatprep.subr.mxu0 0.0
    %5489 = vmatpush1.msra.mxu0 %v5395
    %5490 = vmatprep.subr.mxu0 0.0
    %5491 = vmatpush1.msra.mxu0 0.0
    %5492 = vmatprep.subr.mxu0 0.0
    %5493 = vmatpush1.msra.mxu0 0.0
    %5494 = vmatprep.subr.mxu0 0.0
    %5495 = vmatpush1.msra.mxu0 0.0
    %5496 = vmatprep.subr.mxu0 0.0
    %5497 = vmatpush1.msra.mxu0 0.0
    %5498 = vmatprep.subr.mxu0 0.0
    %5499 = vmatpush1.msra.mxu0 0.0
    %5500 = vmatprep.subr.mxu0 0.0
    %5501 = vmatpush1.msra.mxu0 0.0
    %5502 = vmatprep.subr.mxu0 0.0
    %5503 = vmatpush1.msra.mxu0 0.0
    %5504 = vmatprep.subr.mxu0 0.0
    %5505 = vmatpush1.msra.mxu0 0.0
    %5506 = vmatprep.subr.mxu0 0.0
    %5507 = vmatpush1.msra.mxu0 0.0
    %5508 = vmatprep.subr.mxu0 0.0
    %5509 = vmatpush1.msra.mxu0 0.0
    %5510 = vmatprep.subr.mxu0 0.0
    %5511 = vmatpush1.msra.mxu0 0.0
    %5512 = vmatprep.subr.mxu0 0.0
    %5513 = vmatpush1.msra.mxu0 0.0
    %5514 = vmatprep.subr.mxu0 0.0
    %5515 = vmatpush1.msra.mxu0 0.0
    %5516 = vmatprep.subr.mxu0 0.0
    %5517 = vmatpush1.msra.mxu0 0.0
    %5518 = vmatprep.subr.mxu0 0.0
    %5519 = vmatpush1.msra.mxu0 0.0
    %5520 = vmatprep.subr.mxu0 0.0
    %5521 = vmatpush1.msra.mxu0 0.0
    %5522 = vmatprep.subr.mxu0 0.0
    %5523 = vmatpush1.msra.mxu0 0.0
    %5524 = vmatprep.subr.mxu0 0.0
    %5525 = vmatpush1.msra.mxu0 0.0
    %5526 = vmatprep.subr.mxu0 0.0
    %5527 = vmatpush1.msra.mxu0 0.0
    %5528 = vmatprep.subr.mxu0 0.0
    %5529 = vmatpush1.msra.mxu0 0.0
    %5530 = vmatprep.subr.mxu0 0.0
    %5531 = vmatpush1.msra.mxu0 0.0
    %5532 = vmatprep.subr.mxu0 0.0
    %5533 = vmatpush1.msra.mxu0 0.0
    %5534 = vmatprep.subr.mxu0 0.0
    %5535 = vmatpush1.msra.mxu0 0.0
    %5536 = vmatprep.subr.mxu0 0.0
    %5537 = vmatpush1.msra.mxu0 0.0
    %5538 = vmatprep.subr.mxu0 0.0
    %5539 = vmatpush1.msra.mxu0 0.0
    %5540 = vmatprep.subr.mxu0 0.0
    %5541 = vmatpush1.msra.mxu0 0.0
    %5542 = vmatprep.subr.mxu0 0.0
    %5543 = vmatpush1.msra.mxu0 0.0
    %5544 = vmatprep.subr.mxu0 0.0
    %5545 = vmatpush1.msra.mxu0 0.0
    %5546 = vmatprep.mubr.f32.mxu0 0.0
    %5547 = vmatmul.mubr.f32.gmra.mrb[0].mxu0 %v5480
    %v5548 = vpop.f32.mrb[0].mxu0
    %v5549 = vadd.f32 %v5478, %v5548
    %v5550 = vpop.f32.mrb[0].mxu0
    %5551 = vdwg.mxu0
    %vm5552 = vcmask 17408
    %5553 = vst.msk [vmem:[#allocation8] sm:$0x3] %vm5552, %v5549
    // Predicated region
    $region18: #{eeg_conformer_forward.1} parent=1 // pred_check
      _
    $region19: #{eeg_conformer_forward.1} parent=1 // pred_check_branch
      %5555 = sbr.rel (0) target = $region21
    $region20: #{eeg_conformer_forward.1} parent=1 // pred_region
      %s5557 = ssub.s32 32, 32
      %5558 = vsyncadd [#allocation5], %s5557
      %s5560 = sshll.u32 [#allocation8], 4
      %s5561 = int_to_ptr.vmem [resolvable:$true] %s5560
      %5563 = dma.vmem_to_hbm [thread:$0]  %s5561, 32, %s2, [#allocation5]
    $region21: #{eeg_conformer_forward.1} parent=1 // pred_fallthru
      _
    // Predicated region
    $region22: #{eeg_conformer_forward.1} parent=1 // pred_check
      _
    $region23: #{eeg_conformer_forward.1} parent=1 // pred_check_branch
      %5565 = sbr.rel (0) target = $region25
    $region24: #{eeg_conformer_forward.1} parent=1 // pred_region
      %5566 = dma.done [#allocation5], 32
    $region25: #{eeg_conformer_forward.1} parent=1 // pred_fallthru
      _
    %5567 = vsyncpa [#allocation4], 1
    %5568 = vsyncpa [#allocation7], 1
    %5569 = vsyncpa [#allocation5], 1

</llo_original>
